<compile_context>
chip_gen: v6e
topology: v6e:2x2x1
jax: 0.10.0
libtpu: 0.0.40
codegen_flags: <defaults>
</compile_context>

<pallas_src>
import functools

import jax
import jax.numpy as jnp
from jax import lax
from jax.experimental import pallas as pl
from jax.experimental.pallas import tpu as pltpu


def _round_up(x, m):
    return (x + m - 1) // m * m


def _mish(x):
    # Mish(x) = x * tanh(softplus(x)) = x * n / (n + 2),  n = e^x (e^x + 2)
    # One exp + one approx reciprocal (both EUP) instead of exp+log1p+tanh.
    e = jnp.exp(jnp.minimum(x, 20.0))
    n = e * (e + 2.0)
    y = x * n * pl.reciprocal(n + 2.0, approx=True)
    return jnp.where(x > 20.0, x, y)   # for large x, tanh(softplus(x)) == 1


# ---------------------------------------------------------------------------
# Fused QuartzBlock kernel
# ---------------------------------------------------------------------------
def _quartz_block_kernel(x_hbm, dw_ref, pw_ref, bias_ref, w2_ref, bias2_ref,
                         o_ref, hbuf, dma_sem, *,
                         n_layers, k, pad, tl, halo, seq_len, cp, cop):
    b = pl.program_id(0)
    j = pl.program_id(1)
    nlt = pl.num_programs(1)
    win = tl + 2 * halo            # rows computed per grid step (center + halo)
    slot = j % 2

    def window_copy(jj, s):
        src = pl.multiple_of(jj * tl, 8)
        return pltpu.make_async_copy(
            x_hbm.at[pl.ds(b, 1), pl.ds(src, win), :],
            hbuf.at[pl.ds(s, 1)],
            dma_sem.at[s],
        )

    # First L-tile for this batch row on this core: nothing prefetched yet.
    @pl.when(j == 0)
    def _():
        window_copy(j, slot).start()

    # Sequence-validity mask: positions outside [0, seq_len) must act as zero
    # padding between layers (matches PyTorch per-layer 'same' zero padding).
    row = lax.broadcasted_iota(jnp.int32, (win, 1), 0) + (j * tl - halo)
    valid = jnp.logical_and(row >= 0, row < seq_len)          # (win, 1)

    # Wait for this tile's window, then immediately start the next tile's DMA
    # into the other buffer so the HBM fetch of step j+1 overlaps this compute.
    window_copy(j, slot).wait()

    @pl.when(j + 1 < nlt)
    def _():
        window_copy(j + 1, 1 - slot).start()

    x_in = hbuf[slot]                                          # (win, cp) bf16

    # ---- residual arm2 = Conv1x1(x) + BN bias (BN scale folded into w2) -----
    arm2 = jnp.dot(x_in[halo:halo + tl, :], w2_ref[...],
                   preferred_element_type=jnp.float32) + bias2_ref[...]

    # ---- fused arm1 chain: depthwise -> pointwise (MXU) -> BN [-> Mish] -----
    # Depthwise taps via pltpu.roll (XLU) on the center-anchored window: each
    # rolled copy is corrupt only in its <= pad wrapped rows, which lie inside
    # the per-layer halo slack (halo >= n_layers * pad) and never feed rows
    # that are kept.  No misaligned loads, no activation write-back to VMEM.
    z = x_in.astype(jnp.float32)
    for layer in range(n_layers):
        dw_l = dw_ref[layer]                                   # (k, cp) f32 taps
        acc = z * dw_l[pad:pad + 1, :]                         # center tap first
        for t in range(k):
            if t == pad:
                continue
            shift = (pad - t) % win
            acc = acc + pltpu.roll(z, shift, 0) * dw_l[t:t + 1, :]
        # TODO(synk): for very large kernel sizes (k=33..87) switch this
        # unrolled tap loop to lax.fori_loop(..., unroll=8) over dynamic
        # window slices to bound live ranges and compile time.
        z = jnp.dot(acc.astype(jnp.bfloat16), pw_ref[layer],
                    preferred_element_type=jnp.float32) + bias_ref[layer]
        if layer < n_layers - 1:                               # last TCS+BN: no Mish
            z = jnp.where(valid, _mish(z), 0.0)

    # ---- join: Mish(arm1 + arm2) on the output-aligned center ---------------
    out = _mish(z[halo:halo + tl, :] + arm2)
    o_ref[0] = out[:, :cop].astype(o_ref.dtype)


# ---------------------------------------------------------------------------
# Parameter packing (channel padding, BN-scale folding, per-layer stacking)
# ---------------------------------------------------------------------------
def _pack_params(params, cin, cout, cp):
    arms = params["arms"]
    nl = len(arms)
    k = arms[0]["dw"].shape[0]
    dw_all = jnp.zeros((nl, k, cp), jnp.float32)
    pw_all = jnp.zeros((nl, cp, cp), jnp.float32)
    bias_all = jnp.zeros((nl, 1, cp), jnp.float32)
    for i, p in enumerate(arms):
        ci = p["dw"].shape[1]
        co = p["pw"].shape[1]
        dw_all = dw_all.at[i, :, :ci].set(p["dw"])
        pw_all = pw_all.at[i, :ci, :co].set(p["pw"] * p["scale"].reshape(1, -1))
        bias_all = bias_all.at[i, 0, :co].set(p["bias"].reshape(-1))
    w2 = jnp.zeros((cp, cp), jnp.float32)
    w2 = w2.at[:cin, :cout].set(params["w2"] * params["scale2"].reshape(1, -1))
    bias2 = jnp.zeros((1, cp), jnp.float32)
    bias2 = bias2.at[0, :cout].set(params["bias2"].reshape(-1))
    return (dw_all, pw_all.astype(jnp.bfloat16), bias_all,
            w2.astype(jnp.bfloat16), bias2)


# ---------------------------------------------------------------------------
# VMEM budgeting / tile selection (generation aware)
# ---------------------------------------------------------------------------
def _vmem_limit_bytes():
    cap = 128 * 1024 * 1024
    try:
        cap = int(getattr(pltpu.get_tpu_info(), "vmem_capacity_bytes", cap))
    except Exception:
        pass
    # ~20% headroom for Mosaic-internal scratch; matters most on v7x (64 MiB).
    return max(32 * 1024 * 1024, int(cap * 0.8))


def _pick_tile_l(L, tile_l, halo, cp, cop, nl, k, budget_bytes):
    """Largest multiple-of-8 L-tile (<= tile_l) whose working set fits VMEM."""
    tl = max(8, min(_round_up(L, 8), _round_up(tile_l, 8)))

    def footprint(t):
        win = t + 2 * halo
        hbuf = 2 * win * cp * 2                       # bf16 window, manual x2 buffer
        wts = (nl * k * cp * 4 + nl * cp * cp * 2 + nl * cp * 4
               + cp * cp * 2 + cp * 4)                # single-buffered weights/biases
        outb = 2 * t * cop * 2                        # bf16 output block (Pallas x2)
        temps = 4 * win * cp * 4                      # f32 z/acc/rolled temporaries
        return hbuf + wts + outb + temps

    while tl > 8 and footprint(tl) > budget_bytes:
        tl = max(8, _round_up(tl // 2, 8))
    return tl


def _zero_index_map(ndim):
    if ndim == 2:
        return lambda b, j: (0, 0)
    return lambda b, j: (0, 0, 0)


def _run_pallas(kernel, args, *, B, nlt, tl, win, cp, cop, l_r, nl, k,
                vmem_limit, single_buffer_weights):
    def const_spec(shape):
        idx = _zero_index_map(len(shape))
        if single_buffer_weights:
            # Constant index map -> no need to double-buffer the (potentially
            # multi-MiB) weight blocks; saves VMEM, especially on v7x (64 MiB).
            return pl.BlockSpec(shape, idx, pipeline_mode=pl.Buffered(1))
        return pl.BlockSpec(shape, idx)

    return pl.pallas_call(
        kernel,
        out_shape=jax.ShapeDtypeStruct((B, l_r, cop), jnp.bfloat16),
        grid=(B, nlt),
        in_specs=[
            pl.BlockSpec(memory_space=pl.ANY),        # padded input, raw HBM ref
            const_spec((nl, k, cp)),                  # depthwise taps (f32)
            const_spec((nl, cp, cp)),                 # pointwise weights (bf16)
            const_spec((nl, 1, cp)),                  # folded BN biases (f32)
            const_spec((cp, cp)),                     # residual 1x1 (bf16)
            const_spec((1, cp)),                      # residual BN bias (f32)
        ],
        out_specs=pl.BlockSpec((1, tl, cop), lambda b, j: (b, j, 0)),
        scratch_shapes=[
            pltpu.VMEM((2, win, cp), jnp.bfloat16),   # double-buffered input window
            pltpu.SemaphoreType.DMA((2,)),
        ],
        compiler_params=pltpu.CompilerParams(
            # Batch rows are independent -> shard across v7x's two TensorCores.
            # The L-tile axis carries the double-buffer prefetch chain, so it
            # must be iterated sequentially ("arbitrary").
            dimension_semantics=("parallel", "arbitrary"),
            vmem_limit_bytes=vmem_limit,
        ),
    )(*args)


# ---------------------------------------------------------------------------
# Wrapper
# ---------------------------------------------------------------------------
def quartz_block_forward(params, x_ncl, *, tile_l=512):
    """x_ncl: (N, C_in, L) like PyTorch.  Returns (N, C_out, L) float32."""
    x = jnp.transpose(x_ncl, (0, 2, 1))                        # (B, L, Cin)
    B, L, cin = x.shape
    arms = params["arms"]
    nl = len(arms)
    k = arms[0]["dw"].shape[0]
    assert k % 2 == 1, "matches PyTorch 'same' padding for odd kernel sizes only"
    cout = arms[-1]["pw"].shape[1]

    cp = _round_up(max(cin, cout), 128)     # lane-dense internal channel count
    cop = _round_up(cout, 128)              # lane-dense output channel count
    pad = (k - 1) // 2
    halo = _round_up(nl * pad, 8)           # per-side halo for the fused chain

    vmem_limit = _vmem_limit_bytes()
    tl = _pick_tile_l(L, tile_l, halo, cp, cop, nl, k, int(vmem_limit * 0.7))
    nlt = pl.cdiv(L, tl)
    l_r = nlt * tl
    lp = l_r + 2 * halo
    win = tl + 2 * halo

    dw_all, pw_all, bias_all, w2, bias2 = _pack_params(params, cin, cout, cp)

    # Zero-padded (halo rows per side), channel-padded, bf16 staging array.
    # TODO(synk): feed the raw (B, L, cin) array and clamp the DMA row range at
    # edge tiles to avoid this extra HBM write+read of the input.
    x_pad = jnp.zeros((B, lp, cp), jnp.bfloat16)
    x_pad = x_pad.at[:, halo:halo + L, :cin].set(x.astype(jnp.bfloat16))

    kernel = functools.partial(
        _quartz_block_kernel, n_layers=nl, k=k, pad=pad, tl=tl,
        halo=halo, seq_len=L, cp=cp, cop=cop)

    args = (x_pad, dw_all, pw_all, bias_all, w2, bias2)
    common = dict(B=B, nlt=nlt, tl=tl, win=win, cp=cp, cop=cop, l_r=l_r,
                  nl=nl, k=k, vmem_limit=vmem_limit)
    try:
        out = _run_pallas(kernel, args, single_buffer_weights=True, **common)
    except Exception:
        # Fallback for jax versions without BlockSpec(pipeline_mode=...).
        out = _run_pallas(kernel, args, single_buffer_weights=False, **common)

    out = out[:, :L, :cout].astype(jnp.float32)
    return jnp.transpose(out, (0, 2, 1))                       # (B, Cout, L)


# ---------------------------------------------------------------------------
# Deterministic synthetic parameters (BatchNorm folded to inference mode)
# ---------------------------------------------------------------------------
def _fold_bn(gamma, beta, mean, var, eps=1e-5):
    scale = gamma / jnp.sqrt(var + eps)
    bias = beta - mean * scale
    return scale.reshape(1, -1), bias.reshape(1, -1)


def _make_bn(key, c):
    k1, k2, k3, k4 = jax.random.split(key, 4)
    gamma = 1.0 + 0.1 * jax.random.normal(k1, (c,), jnp.float32)
    beta = 0.1 * jax.random.normal(k2, (c,), jnp.float32)
    mean = 0.1 * jax.random.normal(k3, (c,), jnp.float32)
    var = jnp.abs(jax.random.normal(k4, (c,), jnp.float32)) + 0.5
    return _fold_bn(gamma, beta, mean, var)


def init_quartz_block_params(key, in_ch, out_ch, k, n_repeats=5):
    # arm1 chain: (n_repeats-1) x TCS(in,in)+BN+Mish, TCS(in,out)+BN+Mish,
    #             TCS(out,out)+BN (no activation).  arm2: Conv1x1(in,out)+BN.
    chans = [(in_ch, in_ch)] * (n_repeats - 1) + [(in_ch, out_ch), (out_ch, out_ch)]
    arms = []
    for ci, co in chans:
        key, k1, k2, k3 = jax.random.split(key, 4)
        dw = jax.random.normal(k1, (k, ci), jnp.float32) * 0.3
        pw = jax.random.normal(k2, (ci, co), jnp.float32) / jnp.sqrt(ci)
        scale, bias = _make_bn(k3, co)
        arms.append(dict(dw=dw, pw=pw, scale=scale, bias=bias))
    key, k1, k2 = jax.random.split(key, 3)
    w2 = jax.random.normal(k1, (in_ch, out_ch), jnp.float32) / jnp.sqrt(in_ch)
    scale2, bias2 = _make_bn(k2, out_ch)
    return dict(arms=arms, w2=w2, scale2=scale2, bias2=bias2)


# ---------------------------------------------------------------------------
# Pure-JAX f32 reference (mirrors the PyTorch forward) for a sanity check
# ---------------------------------------------------------------------------
def _reference_forward(params, x_ncl):
    def mish(v):
        return v * jnp.tanh(jax.nn.softplus(v))

    x = jnp.transpose(x_ncl, (0, 2, 1)).astype(jnp.float32)    # (B, L, C)
    L = x.shape[1]

    def tcs_bn(h, p, act):
        k = p["dw"].shape[0]
        pad = (k - 1) // 2
        hp = jnp.pad(h, ((0, 0), (pad, pad), (0, 0)))
        acc = sum(hp[:, t:t + L, :] * p["dw"][t] for t in range(k))
        z = jnp.einsum("blc,cd->bld", acc, p["pw"])
        z = z * p["scale"].reshape(1, 1, -1) + p["bias"].reshape(1, 1, -1)
        return mish(z) if act else z

    h = x
    n = len(params["arms"])
    for i, p in enumerate(params["arms"]):
        h = tcs_bn(h, p, i < n - 1)
    z2 = jnp.einsum("blc,cd->bld", x, params["w2"])
    z2 = z2 * params["scale2"].reshape(1, 1, -1) + params["bias2"].reshape(1, 1, -1)
    return jnp.transpose(mish(h + z2), (0, 2, 1))


if __name__ == "__main__":
    B, Cin, Cout, L, K, R = 2, 8, 16, 32, 3, 5
    key = jax.random.PRNGKey(0)
    kx, kp = jax.random.split(key)
    x = jax.random.normal(kx, (B, Cin, L), jnp.float32)        # PyTorch NCL layout
    params = init_quartz_block_params(kp, Cin, Cout, K, n_repeats=R)

    y = quartz_block_forward(params, x, tile_l=16)             # 2 L-tiles -> real
    jax.block_until_ready(y)                                   # prefetch chain used
    assert y.shape == (B, Cout, L), y.shape
    assert bool(jnp.all(jnp.isfinite(y)))

    y_ref = _reference_forward(params, x)
    rel = float(jnp.max(jnp.abs(y - y_ref) / (1.0 + jnp.abs(y_ref))))
    assert rel < 5e-2, f"mismatch vs f32 reference: {rel}"
    print("KERNEL_OK")
</pallas_src>

<mosaic_0001>
module attributes {stable_mosaic.version = 11 : i64} {
  func.func @_quartz_block_kernel(%arg0: i32, %arg1: i32, %arg2: memref<2x48x128xbf16, #tpu.memory_space<any>>, %arg3: memref<6x3x128xf32, #tpu.memory_space<vmem>>, %arg4: memref<6x128x128xbf16, #tpu.memory_space<vmem>>, %arg5: memref<6x1x128xf32, #tpu.memory_space<vmem>>, %arg6: memref<128x128xbf16, #tpu.memory_space<vmem>>, %arg7: memref<1x128xf32, #tpu.memory_space<vmem>>, %arg8: memref<1x16x128xbf16, #tpu.memory_space<vmem>>, %arg9: memref<2x32x128xbf16, #tpu.memory_space<vmem>>, %arg10: memref<2x!tpu.dma_semaphore, #tpu.memory_space<semaphore_mem>>) attributes {dimension_semantics = [#tpu.dimension_semantics<parallel>, #tpu.dimension_semantics<arbitrary>], iteration_bounds = array<i64: 2, 2>, scalar_prefetch = 0 : i64, scratch_operands = 2 : i64, tpu.core_type = #tpu.core_type<tc>, window_params = [{}, {pipeline_mode = #tpu.pipeline_mode<synchronous>, transform_indices = @transform_1, window_bounds = array<i64: 6, 3, 128>}, {pipeline_mode = #tpu.pipeline_mode<synchronous>, transform_indices = @transform_2, window_bounds = array<i64: 6, 128, 128>}, {pipeline_mode = #tpu.pipeline_mode<synchronous>, transform_indices = @transform_3, window_bounds = array<i64: 6, 1, 128>}, {pipeline_mode = #tpu.pipeline_mode<synchronous>, transform_indices = @transform_4, window_bounds = array<i64: 128, 128>}, {pipeline_mode = #tpu.pipeline_mode<synchronous>, transform_indices = @transform_5, window_bounds = array<i64: 1, 128>}, {transform_indices = @transform_6, window_bounds = array<i64: 1, 16, 128>}]} {
    %c2_i32 = arith.constant 2 : i32
    %c0_i32 = arith.constant 0 : i32
    %0 = arith.cmpi eq, %c2_i32, %c0_i32 : i32
    %c1_i32 = arith.constant 1 : i32
    %1 = arith.select %0, %c1_i32, %c2_i32 : i32
    %2 = arith.remsi %arg1, %1 : i32
    %c0_i32_0 = arith.constant 0 : i32
    %3 = arith.cmpi ne, %2, %c0_i32_0 : i32
    %c0_i32_1 = arith.constant 0 : i32
    %4 = arith.cmpi slt, %2, %c0_i32_1 : i32
    %c0_i32_2 = arith.constant 0 : i32
    %5 = arith.cmpi slt, %1, %c0_i32_2 : i32
    %6 = arith.xori %4, %5 : i1
    %7 = arith.andi %6, %3 : i1
    %8 = arith.addi %2, %1 : i32
    %9 = arith.select %7, %8, %2 : i32
    %c0_i32_3 = arith.constant 0 : i32
    %10 = arith.cmpi eq, %arg1, %c0_i32_3 : i32
    %11 = arith.extui %10 : i1 to i32
    %c0_i32_4 = arith.constant 0 : i32
    %12 = arith.cmpi ne, %11, %c0_i32_4 : i32
    scf.if %12 {
      %c16_i32_116 = arith.constant 16 : i32
      %291 = arith.muli %arg1, %c16_i32_116 : i32
      %292 = tpu.assume_multiple %291, 8 : i32
      %c0_i32_117 = arith.constant 0 : i32
      %293 = tpu.memref_slice %arg2[%arg0, %292, %c0_i32_117] : memref<2x48x128xbf16, #tpu.memory_space<any>> -> memref<1x32x128xbf16, #tpu.memory_space<any>>
      %c0_i32_118 = arith.constant 0 : i32
      %c0_i32_119 = arith.constant 0 : i32
      %294 = tpu.memref_slice %arg9[%9, %c0_i32_118, %c0_i32_119] : memref<2x32x128xbf16, #tpu.memory_space<vmem>> -> memref<1x32x128xbf16, #tpu.memory_space<vmem>>
      %295 = tpu.memref_slice %arg10[%9] : memref<2x!tpu.dma_semaphore, #tpu.memory_space<semaphore_mem>> -> memref<1x!tpu.dma_semaphore, #tpu.memory_space<semaphore_mem>>
      %296 = tpu.memref_squeeze %295 : memref<1x!tpu.dma_semaphore, #tpu.memory_space<semaphore_mem>> -> memref<!tpu.dma_semaphore, #tpu.memory_space<semaphore_mem>>
      tpu.enqueue_dma source(%293 : memref<1x32x128xbf16, #tpu.memory_space<any>>) target(%294 : memref<1x32x128xbf16, #tpu.memory_space<vmem>>) target_semaphore(%296 : memref<!tpu.dma_semaphore, #tpu.memory_space<semaphore_mem>>)
    } else {
    }
    %13 = tpu.iota {dimensions = array<i32: 0>} : vector<32x1xi32>
    %c16_i32 = arith.constant 16 : i32
    %14 = arith.muli %arg1, %c16_i32 : i32
    %c8_i32 = arith.constant 8 : i32
    %15 = arith.subi %14, %c8_i32 : i32
    %16 = vector.broadcast %15 : i32 to vector<32x1xi32>
    %17 = arith.addi %13, %16 : vector<32x1xi32>
    %c0_i32_5 = arith.constant 0 : i32
    %18 = vector.broadcast %c0_i32_5 : i32 to vector<32x1xi32>
    %19 = arith.cmpi sge, %17, %18 : vector<32x1xi32>
    %c32_i32 = arith.constant 32 : i32
    %20 = vector.broadcast %c32_i32 : i32 to vector<32x1xi32>
    %21 = arith.cmpi slt, %17, %20 : vector<32x1xi32>
    %22 = arith.andi %19, %21 : vector<32x1xi1>
    %c16_i32_6 = arith.constant 16 : i32
    %23 = arith.muli %arg1, %c16_i32_6 : i32
    %24 = tpu.assume_multiple %23, 8 : i32
    %c0_i32_7 = arith.constant 0 : i32
    %25 = tpu.memref_slice %arg2[%arg0, %24, %c0_i32_7] : memref<2x48x128xbf16, #tpu.memory_space<any>> -> memref<1x32x128xbf16, #tpu.memory_space<any>>
    %c0_i32_8 = arith.constant 0 : i32
    %c0_i32_9 = arith.constant 0 : i32
    %26 = tpu.memref_slice %arg9[%9, %c0_i32_8, %c0_i32_9] : memref<2x32x128xbf16, #tpu.memory_space<vmem>> -> memref<1x32x128xbf16, #tpu.memory_space<vmem>>
    %27 = tpu.memref_slice %arg10[%9] : memref<2x!tpu.dma_semaphore, #tpu.memory_space<semaphore_mem>> -> memref<1x!tpu.dma_semaphore, #tpu.memory_space<semaphore_mem>>
    %28 = tpu.memref_squeeze %27 : memref<1x!tpu.dma_semaphore, #tpu.memory_space<semaphore_mem>> -> memref<!tpu.dma_semaphore, #tpu.memory_space<semaphore_mem>>
    tpu.wait_dma2 semaphore(%28 : memref<!tpu.dma_semaphore, #tpu.memory_space<semaphore_mem>>) src(%25 : memref<1x32x128xbf16, #tpu.memory_space<any>>) dst(%26 : memref<1x32x128xbf16, #tpu.memory_space<vmem>>)
    %c1_i32_10 = arith.constant 1 : i32
    %29 = arith.addi %arg1, %c1_i32_10 : i32
    %c2_i32_11 = arith.constant 2 : i32
    %30 = arith.cmpi slt, %29, %c2_i32_11 : i32
    %31 = arith.extui %30 : i1 to i32
    %c0_i32_12 = arith.constant 0 : i32
    %32 = arith.cmpi ne, %31, %c0_i32_12 : i32
    scf.if %32 {
      %c1_i32_116 = arith.constant 1 : i32
      %291 = arith.addi %arg1, %c1_i32_116 : i32
      %c1_i32_117 = arith.constant 1 : i32
      %292 = arith.subi %c1_i32_117, %9 : i32
      %c16_i32_118 = arith.constant 16 : i32
      %293 = arith.muli %291, %c16_i32_118 : i32
      %294 = tpu.assume_multiple %293, 8 : i32
      %c0_i32_119 = arith.constant 0 : i32
      %295 = tpu.memref_slice %arg2[%arg0, %294, %c0_i32_119] : memref<2x48x128xbf16, #tpu.memory_space<any>> -> memref<1x32x128xbf16, #tpu.memory_space<any>>
      %c0_i32_120 = arith.constant 0 : i32
      %c0_i32_121 = arith.constant 0 : i32
      %296 = tpu.memref_slice %arg9[%292, %c0_i32_120, %c0_i32_121] : memref<2x32x128xbf16, #tpu.memory_space<vmem>> -> memref<1x32x128xbf16, #tpu.memory_space<vmem>>
      %297 = tpu.memref_slice %arg10[%292] : memref<2x!tpu.dma_semaphore, #tpu.memory_space<semaphore_mem>> -> memref<1x!tpu.dma_semaphore, #tpu.memory_space<semaphore_mem>>
      %298 = tpu.memref_squeeze %297 : memref<1x!tpu.dma_semaphore, #tpu.memory_space<semaphore_mem>> -> memref<!tpu.dma_semaphore, #tpu.memory_space<semaphore_mem>>
      tpu.enqueue_dma source(%295 : memref<1x32x128xbf16, #tpu.memory_space<any>>) target(%296 : memref<1x32x128xbf16, #tpu.memory_space<vmem>>) target_semaphore(%298 : memref<!tpu.dma_semaphore, #tpu.memory_space<semaphore_mem>>)
    } else {
    }
    %33 = arith.index_cast %9 : i32 to index
    %c0 = arith.constant 0 : index
    %c0_13 = arith.constant 0 : index
    %34 = vector.load %arg9[%33, %c0, %c0_13] : memref<2x32x128xbf16, #tpu.memory_space<vmem>>, vector<1x32x128xbf16>
    %35 = vector.shape_cast %34 : vector<1x32x128xbf16> to vector<32x128xbf16>
    %36 = vector.extract_strided_slice %35 {offsets = [8, 0], sizes = [16, 128], strides = [1, 1]} : vector<32x128xbf16> to vector<16x128xbf16>
    %c0_14 = arith.constant 0 : index
    %c0_15 = arith.constant 0 : index
    %37 = vector.load %arg6[%c0_14, %c0_15] : memref<128x128xbf16, #tpu.memory_space<vmem>>, vector<128x128xbf16>
    %cst = arith.constant dense<0.000000e+00> : vector<16x128xf32>
    %38 = tpu.matmul %36, %37, %cst {dimension_numbers = #tpu.dot_dimension_numbers<[1], [0], [0], [1], [0, 0, 1, 1], [], []>} : vector<16x128xbf16>, vector<128x128xbf16>, vector<16x128xf32> -> vector<16x128xf32>
    %c0_16 = arith.constant 0 : index
    %c0_17 = arith.constant 0 : index
    %39 = vector.load %arg7[%c0_16, %c0_17] : memref<1x128xf32, #tpu.memory_space<vmem>>, vector<1x128xf32>
    %40 = vector.broadcast %39 : vector<1x128xf32> to vector<16x128xf32>
    %41 = arith.addf %38, %40 : vector<16x128xf32>
    %42 = arith.extf %35 : vector<32x128xbf16> to vector<32x128xf32>
    %c0_18 = arith.constant 0 : index
    %c0_19 = arith.constant 0 : index
    %c0_20 = arith.constant 0 : index
    %43 = vector.load %arg3[%c0_18, %c0_19, %c0_20] : memref<6x3x128xf32, #tpu.memory_space<vmem>>, vector<1x3x128xf32>
    %44 = vector.shape_cast %43 : vector<1x3x128xf32> to vector<3x128xf32>
    %45 = vector.extract_strided_slice %44 {offsets = [1, 0], sizes = [1, 128], strides = [1, 1]} : vector<3x128xf32> to vector<1x128xf32>
    %46 = vector.broadcast %45 : vector<1x128xf32> to vector<32x128xf32>
    %47 = arith.mulf %42, %46 : vector<32x128xf32>
    %c1_i32_21 = arith.constant 1 : i32
    %48 = tpu.dynamic_rotate %42 by %c1_i32_21 dim 0 : vector<32x128xf32>, i32 -> vector<32x128xf32>
    %49 = vector.extract_strided_slice %44 {offsets = [0, 0], sizes = [1, 128], strides = [1, 1]} : vector<3x128xf32> to vector<1x128xf32>
    %50 = vector.broadcast %49 : vector<1x128xf32> to vector<32x128xf32>
    %51 = arith.mulf %48, %50 : vector<32x128xf32>
    %52 = arith.addf %47, %51 : vector<32x128xf32>
    %c31_i32 = arith.constant 31 : i32
    %53 = tpu.dynamic_rotate %42 by %c31_i32 dim 0 : vector<32x128xf32>, i32 -> vector<32x128xf32>
    %54 = vector.extract_strided_slice %44 {offsets = [2, 0], sizes = [1, 128], strides = [1, 1]} : vector<3x128xf32> to vector<1x128xf32>
    %55 = vector.broadcast %54 : vector<1x128xf32> to vector<32x128xf32>
    %56 = arith.mulf %53, %55 : vector<32x128xf32>
    %57 = arith.addf %52, %56 : vector<32x128xf32>
    %58 = arith.truncf %57 : vector<32x128xf32> to vector<32x128xbf16>
    %c0_22 = arith.constant 0 : index
    %c0_23 = arith.constant 0 : index
    %c0_24 = arith.constant 0 : index
    %59 = vector.load %arg4[%c0_22, %c0_23, %c0_24] : memref<6x128x128xbf16, #tpu.memory_space<vmem>>, vector<1x128x128xbf16>
    %60 = vector.shape_cast %59 : vector<1x128x128xbf16> to vector<128x128xbf16>
    %cst_25 = arith.constant dense<0.000000e+00> : vector<32x128xf32>
    %61 = tpu.matmul %58, %60, %cst_25 {dimension_numbers = #tpu.dot_dimension_numbers<[1], [0], [0], [1], [0, 0, 1, 1], [], []>} : vector<32x128xbf16>, vector<128x128xbf16>, vector<32x128xf32> -> vector<32x128xf32>
    %c0_26 = arith.constant 0 : index
    %c0_27 = arith.constant 0 : index
    %c0_28 = arith.constant 0 : index
    %62 = vector.load %arg5[%c0_26, %c0_27, %c0_28] : memref<6x1x128xf32, #tpu.memory_space<vmem>>, vector<1x1x128xf32>
    %63 = vector.shape_cast %62 : vector<1x1x128xf32> to vector<1x128xf32>
    %64 = vector.broadcast %63 : vector<1x128xf32> to vector<32x128xf32>
    %65 = arith.addf %61, %64 : vector<32x128xf32>
    %cst_29 = arith.constant 2.000000e+01 : f32
    %66 = vector.broadcast %cst_29 : f32 to vector<32x128xf32>
    %67 = arith.minimumf %65, %66 : vector<32x128xf32>
    %68 = math.exp %67 : vector<32x128xf32>
    %cst_30 = arith.constant 2.000000e+00 : f32
    %69 = vector.broadcast %cst_30 : f32 to vector<32x128xf32>
    %70 = arith.addf %68, %69 : vector<32x128xf32>
    %71 = arith.mulf %68, %70 : vector<32x128xf32>
    %72 = arith.mulf %65, %71 : vector<32x128xf32>
    %cst_31 = arith.constant 2.000000e+00 : f32
    %73 = vector.broadcast %cst_31 : f32 to vector<32x128xf32>
    %74 = arith.addf %71, %73 : vector<32x128xf32>
    %75 = tpu.reciprocal %74 {approx = true} : vector<32x128xf32> -> vector<32x128xf32>
    %76 = arith.mulf %72, %75 : vector<32x128xf32>
    %cst_32 = arith.constant 2.000000e+01 : f32
    %77 = vector.broadcast %cst_32 : f32 to vector<32x128xf32>
    %78 = arith.cmpf ogt, %65, %77 : vector<32x128xf32>
    %79 = arith.select %78, %65, %76 : vector<32x128xi1>, vector<32x128xf32>
    %cst_33 = arith.constant 0.000000e+00 : f32
    %80 = vector.shape_cast %22 : vector<32x1xi1> to vector<32x1xi1>
    %81 = vector.broadcast %80 : vector<32x1xi1> to vector<32x128xi1>
    %82 = vector.broadcast %cst_33 : f32 to vector<32x128xf32>
    %83 = arith.select %81, %79, %82 : vector<32x128xi1>, vector<32x128xf32>
    %c1 = arith.constant 1 : index
    %c0_34 = arith.constant 0 : index
    %c0_35 = arith.constant 0 : index
    %84 = vector.load %arg3[%c1, %c0_34, %c0_35] : memref<6x3x128xf32, #tpu.memory_space<vmem>>, vector<1x3x128xf32>
    %85 = vector.shape_cast %84 : vector<1x3x128xf32> to vector<3x128xf32>
    %86 = vector.extract_strided_slice %85 {offsets = [1, 0], sizes = [1, 128], strides = [1, 1]} : vector<3x128xf32> to vector<1x128xf32>
    %87 = vector.broadcast %86 : vector<1x128xf32> to vector<32x128xf32>
    %88 = arith.mulf %83, %87 : vector<32x128xf32>
    %c1_i32_36 = arith.constant 1 : i32
    %89 = tpu.dynamic_rotate %83 by %c1_i32_36 dim 0 : vector<32x128xf32>, i32 -> vector<32x128xf32>
    %90 = vector.extract_strided_slice %85 {offsets = [0, 0], sizes = [1, 128], strides = [1, 1]} : vector<3x128xf32> to vector<1x128xf32>
    %91 = vector.broadcast %90 : vector<1x128xf32> to vector<32x128xf32>
    %92 = arith.mulf %89, %91 : vector<32x128xf32>
    %93 = arith.addf %88, %92 : vector<32x128xf32>
    %c31_i32_37 = arith.constant 31 : i32
    %94 = tpu.dynamic_rotate %83 by %c31_i32_37 dim 0 : vector<32x128xf32>, i32 -> vector<32x128xf32>
    %95 = vector.extract_strided_slice %85 {offsets = [2, 0], sizes = [1, 128], strides = [1, 1]} : vector<3x128xf32> to vector<1x128xf32>
    %96 = vector.broadcast %95 : vector<1x128xf32> to vector<32x128xf32>
    %97 = arith.mulf %94, %96 : vector<32x128xf32>
    %98 = arith.addf %93, %97 : vector<32x128xf32>
    %99 = arith.truncf %98 : vector<32x128xf32> to vector<32x128xbf16>
    %c1_38 = arith.constant 1 : index
    %c0_39 = arith.constant 0 : index
    %c0_40 = arith.constant 0 : index
    %100 = vector.load %arg4[%c1_38, %c0_39, %c0_40] : memref<6x128x128xbf16, #tpu.memory_space<vmem>>, vector<1x128x128xbf16>
    %101 = vector.shape_cast %100 : vector<1x128x128xbf16> to vector<128x128xbf16>
    %cst_41 = arith.constant dense<0.000000e+00> : vector<32x128xf32>
    %102 = tpu.matmul %99, %101, %cst_41 {dimension_numbers = #tpu.dot_dimension_numbers<[1], [0], [0], [1], [0, 0, 1, 1], [], []>} : vector<32x128xbf16>, vector<128x128xbf16>, vector<32x128xf32> -> vector<32x128xf32>
    %c1_42 = arith.constant 1 : index
    %c0_43 = arith.constant 0 : index
    %c0_44 = arith.constant 0 : index
    %103 = vector.load %arg5[%c1_42, %c0_43, %c0_44] : memref<6x1x128xf32, #tpu.memory_space<vmem>>, vector<1x1x128xf32>
    %104 = vector.shape_cast %103 : vector<1x1x128xf32> to vector<1x128xf32>
    %105 = vector.broadcast %104 : vector<1x128xf32> to vector<32x128xf32>
    %106 = arith.addf %102, %105 : vector<32x128xf32>
    %cst_45 = arith.constant 2.000000e+01 : f32
    %107 = vector.broadcast %cst_45 : f32 to vector<32x128xf32>
    %108 = arith.minimumf %106, %107 : vector<32x128xf32>
    %109 = math.exp %108 : vector<32x128xf32>
    %cst_46 = arith.constant 2.000000e+00 : f32
    %110 = vector.broadcast %cst_46 : f32 to vector<32x128xf32>
    %111 = arith.addf %109, %110 : vector<32x128xf32>
    %112 = arith.mulf %109, %111 : vector<32x128xf32>
    %113 = arith.mulf %106, %112 : vector<32x128xf32>
    %cst_47 = arith.constant 2.000000e+00 : f32
    %114 = vector.broadcast %cst_47 : f32 to vector<32x128xf32>
    %115 = arith.addf %112, %114 : vector<32x128xf32>
    %116 = tpu.reciprocal %115 {approx = true} : vector<32x128xf32> -> vector<32x128xf32>
    %117 = arith.mulf %113, %116 : vector<32x128xf32>
    %cst_48 = arith.constant 2.000000e+01 : f32
    %118 = vector.broadcast %cst_48 : f32 to vector<32x128xf32>
    %119 = arith.cmpf ogt, %106, %118 : vector<32x128xf32>
    %120 = arith.select %119, %106, %117 : vector<32x128xi1>, vector<32x128xf32>
    %cst_49 = arith.constant 0.000000e+00 : f32
    %121 = vector.shape_cast %22 : vector<32x1xi1> to vector<32x1xi1>
    %122 = vector.broadcast %121 : vector<32x1xi1> to vector<32x128xi1>
    %123 = vector.broadcast %cst_49 : f32 to vector<32x128xf32>
    %124 = arith.select %122, %120, %123 : vector<32x128xi1>, vector<32x128xf32>
    %c2 = arith.constant 2 : index
    %c0_50 = arith.constant 0 : index
    %c0_51 = arith.constant 0 : index
    %125 = vector.load %arg3[%c2, %c0_50, %c0_51] : memref<6x3x128xf32, #tpu.memory_space<vmem>>, vector<1x3x128xf32>
    %126 = vector.shape_cast %125 : vector<1x3x128xf32> to vector<3x128xf32>
    %127 = vector.extract_strided_slice %126 {offsets = [1, 0], sizes = [1, 128], strides = [1, 1]} : vector<3x128xf32> to vector<1x128xf32>
    %128 = vector.broadcast %127 : vector<1x128xf32> to vector<32x128xf32>
    %129 = arith.mulf %124, %128 : vector<32x128xf32>
    %c1_i32_52 = arith.constant 1 : i32
    %130 = tpu.dynamic_rotate %124 by %c1_i32_52 dim 0 : vector<32x128xf32>, i32 -> vector<32x128xf32>
    %131 = vector.extract_strided_slice %126 {offsets = [0, 0], sizes = [1, 128], strides = [1, 1]} : vector<3x128xf32> to vector<1x128xf32>
    %132 = vector.broadcast %131 : vector<1x128xf32> to vector<32x128xf32>
    %133 = arith.mulf %130, %132 : vector<32x128xf32>
    %134 = arith.addf %129, %133 : vector<32x128xf32>
    %c31_i32_53 = arith.constant 31 : i32
    %135 = tpu.dynamic_rotate %124 by %c31_i32_53 dim 0 : vector<32x128xf32>, i32 -> vector<32x128xf32>
    %136 = vector.extract_strided_slice %126 {offsets = [2, 0], sizes = [1, 128], strides = [1, 1]} : vector<3x128xf32> to vector<1x128xf32>
    %137 = vector.broadcast %136 : vector<1x128xf32> to vector<32x128xf32>
    %138 = arith.mulf %135, %137 : vector<32x128xf32>
    %139 = arith.addf %134, %138 : vector<32x128xf32>
    %140 = arith.truncf %139 : vector<32x128xf32> to vector<32x128xbf16>
    %c2_54 = arith.constant 2 : index
    %c0_55 = arith.constant 0 : index
    %c0_56 = arith.constant 0 : index
    %141 = vector.load %arg4[%c2_54, %c0_55, %c0_56] : memref<6x128x128xbf16, #tpu.memory_space<vmem>>, vector<1x128x128xbf16>
    %142 = vector.shape_cast %141 : vector<1x128x128xbf16> to vector<128x128xbf16>
    %cst_57 = arith.constant dense<0.000000e+00> : vector<32x128xf32>
    %143 = tpu.matmul %140, %142, %cst_57 {dimension_numbers = #tpu.dot_dimension_numbers<[1], [0], [0], [1], [0, 0, 1, 1], [], []>} : vector<32x128xbf16>, vector<128x128xbf16>, vector<32x128xf32> -> vector<32x128xf32>
    %c2_58 = arith.constant 2 : index
    %c0_59 = arith.constant 0 : index
    %c0_60 = arith.constant 0 : index
    %144 = vector.load %arg5[%c2_58, %c0_59, %c0_60] : memref<6x1x128xf32, #tpu.memory_space<vmem>>, vector<1x1x128xf32>
    %145 = vector.shape_cast %144 : vector<1x1x128xf32> to vector<1x128xf32>
    %146 = vector.broadcast %145 : vector<1x128xf32> to vector<32x128xf32>
    %147 = arith.addf %143, %146 : vector<32x128xf32>
    %cst_61 = arith.constant 2.000000e+01 : f32
    %148 = vector.broadcast %cst_61 : f32 to vector<32x128xf32>
    %149 = arith.minimumf %147, %148 : vector<32x128xf32>
    %150 = math.exp %149 : vector<32x128xf32>
    %cst_62 = arith.constant 2.000000e+00 : f32
    %151 = vector.broadcast %cst_62 : f32 to vector<32x128xf32>
    %152 = arith.addf %150, %151 : vector<32x128xf32>
    %153 = arith.mulf %150, %152 : vector<32x128xf32>
    %154 = arith.mulf %147, %153 : vector<32x128xf32>
    %cst_63 = arith.constant 2.000000e+00 : f32
    %155 = vector.broadcast %cst_63 : f32 to vector<32x128xf32>
    %156 = arith.addf %153, %155 : vector<32x128xf32>
    %157 = tpu.reciprocal %156 {approx = true} : vector<32x128xf32> -> vector<32x128xf32>
    %158 = arith.mulf %154, %157 : vector<32x128xf32>
    %cst_64 = arith.constant 2.000000e+01 : f32
    %159 = vector.broadcast %cst_64 : f32 to vector<32x128xf32>
    %160 = arith.cmpf ogt, %147, %159 : vector<32x128xf32>
    %161 = arith.select %160, %147, %158 : vector<32x128xi1>, vector<32x128xf32>
    %cst_65 = arith.constant 0.000000e+00 : f32
    %162 = vector.shape_cast %22 : vector<32x1xi1> to vector<32x1xi1>
    %163 = vector.broadcast %162 : vector<32x1xi1> to vector<32x128xi1>
    %164 = vector.broadcast %cst_65 : f32 to vector<32x128xf32>
    %165 = arith.select %163, %161, %164 : vector<32x128xi1>, vector<32x128xf32>
    %c3 = arith.constant 3 : index
    %c0_66 = arith.constant 0 : index
    %c0_67 = arith.constant 0 : index
    %166 = vector.load %arg3[%c3, %c0_66, %c0_67] : memref<6x3x128xf32, #tpu.memory_space<vmem>>, vector<1x3x128xf32>
    %167 = vector.shape_cast %166 : vector<1x3x128xf32> to vector<3x128xf32>
    %168 = vector.extract_strided_slice %167 {offsets = [1, 0], sizes = [1, 128], strides = [1, 1]} : vector<3x128xf32> to vector<1x128xf32>
    %169 = vector.broadcast %168 : vector<1x128xf32> to vector<32x128xf32>
    %170 = arith.mulf %165, %169 : vector<32x128xf32>
    %c1_i32_68 = arith.constant 1 : i32
    %171 = tpu.dynamic_rotate %165 by %c1_i32_68 dim 0 : vector<32x128xf32>, i32 -> vector<32x128xf32>
    %172 = vector.extract_strided_slice %167 {offsets = [0, 0], sizes = [1, 128], strides = [1, 1]} : vector<3x128xf32> to vector<1x128xf32>
    %173 = vector.broadcast %172 : vector<1x128xf32> to vector<32x128xf32>
    %174 = arith.mulf %171, %173 : vector<32x128xf32>
    %175 = arith.addf %170, %174 : vector<32x128xf32>
    %c31_i32_69 = arith.constant 31 : i32
    %176 = tpu.dynamic_rotate %165 by %c31_i32_69 dim 0 : vector<32x128xf32>, i32 -> vector<32x128xf32>
    %177 = vector.extract_strided_slice %167 {offsets = [2, 0], sizes = [1, 128], strides = [1, 1]} : vector<3x128xf32> to vector<1x128xf32>
    %178 = vector.broadcast %177 : vector<1x128xf32> to vector<32x128xf32>
    %179 = arith.mulf %176, %178 : vector<32x128xf32>
    %180 = arith.addf %175, %179 : vector<32x128xf32>
    %181 = arith.truncf %180 : vector<32x128xf32> to vector<32x128xbf16>
    %c3_70 = arith.constant 3 : index
    %c0_71 = arith.constant 0 : index
    %c0_72 = arith.constant 0 : index
    %182 = vector.load %arg4[%c3_70, %c0_71, %c0_72] : memref<6x128x128xbf16, #tpu.memory_space<vmem>>, vector<1x128x128xbf16>
    %183 = vector.shape_cast %182 : vector<1x128x128xbf16> to vector<128x128xbf16>
    %cst_73 = arith.constant dense<0.000000e+00> : vector<32x128xf32>
    %184 = tpu.matmul %181, %183, %cst_73 {dimension_numbers = #tpu.dot_dimension_numbers<[1], [0], [0], [1], [0, 0, 1, 1], [], []>} : vector<32x128xbf16>, vector<128x128xbf16>, vector<32x128xf32> -> vector<32x128xf32>
    %c3_74 = arith.constant 3 : index
    %c0_75 = arith.constant 0 : index
    %c0_76 = arith.constant 0 : index
    %185 = vector.load %arg5[%c3_74, %c0_75, %c0_76] : memref<6x1x128xf32, #tpu.memory_space<vmem>>, vector<1x1x128xf32>
    %186 = vector.shape_cast %185 : vector<1x1x128xf32> to vector<1x128xf32>
    %187 = vector.broadcast %186 : vector<1x128xf32> to vector<32x128xf32>
    %188 = arith.addf %184, %187 : vector<32x128xf32>
    %cst_77 = arith.constant 2.000000e+01 : f32
    %189 = vector.broadcast %cst_77 : f32 to vector<32x128xf32>
    %190 = arith.minimumf %188, %189 : vector<32x128xf32>
    %191 = math.exp %190 : vector<32x128xf32>
    %cst_78 = arith.constant 2.000000e+00 : f32
    %192 = vector.broadcast %cst_78 : f32 to vector<32x128xf32>
    %193 = arith.addf %191, %192 : vector<32x128xf32>
    %194 = arith.mulf %191, %193 : vector<32x128xf32>
    %195 = arith.mulf %188, %194 : vector<32x128xf32>
    %cst_79 = arith.constant 2.000000e+00 : f32
    %196 = vector.broadcast %cst_79 : f32 to vector<32x128xf32>
    %197 = arith.addf %194, %196 : vector<32x128xf32>
    %198 = tpu.reciprocal %197 {approx = true} : vector<32x128xf32> -> vector<32x128xf32>
    %199 = arith.mulf %195, %198 : vector<32x128xf32>
    %cst_80 = arith.constant 2.000000e+01 : f32
    %200 = vector.broadcast %cst_80 : f32 to vector<32x128xf32>
    %201 = arith.cmpf ogt, %188, %200 : vector<32x128xf32>
    %202 = arith.select %201, %188, %199 : vector<32x128xi1>, vector<32x128xf32>
    %cst_81 = arith.constant 0.000000e+00 : f32
    %203 = vector.shape_cast %22 : vector<32x1xi1> to vector<32x1xi1>
    %204 = vector.broadcast %203 : vector<32x1xi1> to vector<32x128xi1>
    %205 = vector.broadcast %cst_81 : f32 to vector<32x128xf32>
    %206 = arith.select %204, %202, %205 : vector<32x128xi1>, vector<32x128xf32>
    %c4 = arith.constant 4 : index
    %c0_82 = arith.constant 0 : index
    %c0_83 = arith.constant 0 : index
    %207 = vector.load %arg3[%c4, %c0_82, %c0_83] : memref<6x3x128xf32, #tpu.memory_space<vmem>>, vector<1x3x128xf32>
    %208 = vector.shape_cast %207 : vector<1x3x128xf32> to vector<3x128xf32>
    %209 = vector.extract_strided_slice %208 {offsets = [1, 0], sizes = [1, 128], strides = [1, 1]} : vector<3x128xf32> to vector<1x128xf32>
    %210 = vector.broadcast %209 : vector<1x128xf32> to vector<32x128xf32>
    %211 = arith.mulf %206, %210 : vector<32x128xf32>
    %c1_i32_84 = arith.constant 1 : i32
    %212 = tpu.dynamic_rotate %206 by %c1_i32_84 dim 0 : vector<32x128xf32>, i32 -> vector<32x128xf32>
    %213 = vector.extract_strided_slice %208 {offsets = [0, 0], sizes = [1, 128], strides = [1, 1]} : vector<3x128xf32> to vector<1x128xf32>
    %214 = vector.broadcast %213 : vector<1x128xf32> to vector<32x128xf32>
    %215 = arith.mulf %212, %214 : vector<32x128xf32>
    %216 = arith.addf %211, %215 : vector<32x128xf32>
    %c31_i32_85 = arith.constant 31 : i32
    %217 = tpu.dynamic_rotate %206 by %c31_i32_85 dim 0 : vector<32x128xf32>, i32 -> vector<32x128xf32>
    %218 = vector.extract_strided_slice %208 {offsets = [2, 0], sizes = [1, 128], strides = [1, 1]} : vector<3x128xf32> to vector<1x128xf32>
    %219 = vector.broadcast %218 : vector<1x128xf32> to vector<32x128xf32>
    %220 = arith.mulf %217, %219 : vector<32x128xf32>
    %221 = arith.addf %216, %220 : vector<32x128xf32>
    %222 = arith.truncf %221 : vector<32x128xf32> to vector<32x128xbf16>
    %c4_86 = arith.constant 4 : index
    %c0_87 = arith.constant 0 : index
    %c0_88 = arith.constant 0 : index
    %223 = vector.load %arg4[%c4_86, %c0_87, %c0_88] : memref<6x128x128xbf16, #tpu.memory_space<vmem>>, vector<1x128x128xbf16>
    %224 = vector.shape_cast %223 : vector<1x128x128xbf16> to vector<128x128xbf16>
    %cst_89 = arith.constant dense<0.000000e+00> : vector<32x128xf32>
    %225 = tpu.matmul %222, %224, %cst_89 {dimension_numbers = #tpu.dot_dimension_numbers<[1], [0], [0], [1], [0, 0, 1, 1], [], []>} : vector<32x128xbf16>, vector<128x128xbf16>, vector<32x128xf32> -> vector<32x128xf32>
    %c4_90 = arith.constant 4 : index
    %c0_91 = arith.constant 0 : index
    %c0_92 = arith.constant 0 : index
    %226 = vector.load %arg5[%c4_90, %c0_91, %c0_92] : memref<6x1x128xf32, #tpu.memory_space<vmem>>, vector<1x1x128xf32>
    %227 = vector.shape_cast %226 : vector<1x1x128xf32> to vector<1x128xf32>
    %228 = vector.broadcast %227 : vector<1x128xf32> to vector<32x128xf32>
    %229 = arith.addf %225, %228 : vector<32x128xf32>
    %cst_93 = arith.constant 2.000000e+01 : f32
    %230 = vector.broadcast %cst_93 : f32 to vector<32x128xf32>
    %231 = arith.minimumf %229, %230 : vector<32x128xf32>
    %232 = math.exp %231 : vector<32x128xf32>
    %cst_94 = arith.constant 2.000000e+00 : f32
    %233 = vector.broadcast %cst_94 : f32 to vector<32x128xf32>
    %234 = arith.addf %232, %233 : vector<32x128xf32>
    %235 = arith.mulf %232, %234 : vector<32x128xf32>
    %236 = arith.mulf %229, %235 : vector<32x128xf32>
    %cst_95 = arith.constant 2.000000e+00 : f32
    %237 = vector.broadcast %cst_95 : f32 to vector<32x128xf32>
    %238 = arith.addf %235, %237 : vector<32x128xf32>
    %239 = tpu.reciprocal %238 {approx = true} : vector<32x128xf32> -> vector<32x128xf32>
    %240 = arith.mulf %236, %239 : vector<32x128xf32>
    %cst_96 = arith.constant 2.000000e+01 : f32
    %241 = vector.broadcast %cst_96 : f32 to vector<32x128xf32>
    %242 = arith.cmpf ogt, %229, %241 : vector<32x128xf32>
    %243 = arith.select %242, %229, %240 : vector<32x128xi1>, vector<32x128xf32>
    %cst_97 = arith.constant 0.000000e+00 : f32
    %244 = vector.shape_cast %22 : vector<32x1xi1> to vector<32x1xi1>
    %245 = vector.broadcast %244 : vector<32x1xi1> to vector<32x128xi1>
    %246 = vector.broadcast %cst_97 : f32 to vector<32x128xf32>
    %247 = arith.select %245, %243, %246 : vector<32x128xi1>, vector<32x128xf32>
    %c5 = arith.constant 5 : index
    %c0_98 = arith.constant 0 : index
    %c0_99 = arith.constant 0 : index
    %248 = vector.load %arg3[%c5, %c0_98, %c0_99] : memref<6x3x128xf32, #tpu.memory_space<vmem>>, vector<1x3x128xf32>
    %249 = vector.shape_cast %248 : vector<1x3x128xf32> to vector<3x128xf32>
    %250 = vector.extract_strided_slice %249 {offsets = [1, 0], sizes = [1, 128], strides = [1, 1]} : vector<3x128xf32> to vector<1x128xf32>
    %251 = vector.broadcast %250 : vector<1x128xf32> to vector<32x128xf32>
    %252 = arith.mulf %247, %251 : vector<32x128xf32>
    %c1_i32_100 = arith.constant 1 : i32
    %253 = tpu.dynamic_rotate %247 by %c1_i32_100 dim 0 : vector<32x128xf32>, i32 -> vector<32x128xf32>
    %254 = vector.extract_strided_slice %249 {offsets = [0, 0], sizes = [1, 128], strides = [1, 1]} : vector<3x128xf32> to vector<1x128xf32>
    %255 = vector.broadcast %254 : vector<1x128xf32> to vector<32x128xf32>
    %256 = arith.mulf %253, %255 : vector<32x128xf32>
    %257 = arith.addf %252, %256 : vector<32x128xf32>
    %c31_i32_101 = arith.constant 31 : i32
    %258 = tpu.dynamic_rotate %247 by %c31_i32_101 dim 0 : vector<32x128xf32>, i32 -> vector<32x128xf32>
    %259 = vector.extract_strided_slice %249 {offsets = [2, 0], sizes = [1, 128], strides = [1, 1]} : vector<3x128xf32> to vector<1x128xf32>
    %260 = vector.broadcast %259 : vector<1x128xf32> to vector<32x128xf32>
    %261 = arith.mulf %258, %260 : vector<32x128xf32>
    %262 = arith.addf %257, %261 : vector<32x128xf32>
    %263 = arith.truncf %262 : vector<32x128xf32> to vector<32x128xbf16>
    %c5_102 = arith.constant 5 : index
    %c0_103 = arith.constant 0 : index
    %c0_104 = arith.constant 0 : index
    %264 = vector.load %arg4[%c5_102, %c0_103, %c0_104] : memref<6x128x128xbf16, #tpu.memory_space<vmem>>, vector<1x128x128xbf16>
    %265 = vector.shape_cast %264 : vector<1x128x128xbf16> to vector<128x128xbf16>
    %cst_105 = arith.constant dense<0.000000e+00> : vector<32x128xf32>
    %266 = tpu.matmul %263, %265, %cst_105 {dimension_numbers = #tpu.dot_dimension_numbers<[1], [0], [0], [1], [0, 0, 1, 1], [], []>} : vector<32x128xbf16>, vector<128x128xbf16>, vector<32x128xf32> -> vector<32x128xf32>
    %c5_106 = arith.constant 5 : index
    %c0_107 = arith.constant 0 : index
    %c0_108 = arith.constant 0 : index
    %267 = vector.load %arg5[%c5_106, %c0_107, %c0_108] : memref<6x1x128xf32, #tpu.memory_space<vmem>>, vector<1x1x128xf32>
    %268 = vector.shape_cast %267 : vector<1x1x128xf32> to vector<1x128xf32>
    %269 = vector.broadcast %268 : vector<1x128xf32> to vector<32x128xf32>
    %270 = arith.addf %266, %269 : vector<32x128xf32>
    %271 = vector.extract_strided_slice %270 {offsets = [8, 0], sizes = [16, 128], strides = [1, 1]} : vector<32x128xf32> to vector<16x128xf32>
    %272 = arith.addf %271, %41 : vector<16x128xf32>
    %cst_109 = arith.constant 2.000000e+01 : f32
    %273 = vector.broadcast %cst_109 : f32 to vector<16x128xf32>
    %274 = arith.minimumf %272, %273 : vector<16x128xf32>
    %275 = math.exp %274 : vector<16x128xf32>
    %cst_110 = arith.constant 2.000000e+00 : f32
    %276 = vector.broadcast %cst_110 : f32 to vector<16x128xf32>
    %277 = arith.addf %275, %276 : vector<16x128xf32>
    %278 = arith.mulf %275, %277 : vector<16x128xf32>
    %279 = arith.mulf %272, %278 : vector<16x128xf32>
    %cst_111 = arith.constant 2.000000e+00 : f32
    %280 = vector.broadcast %cst_111 : f32 to vector<16x128xf32>
    %281 = arith.addf %278, %280 : vector<16x128xf32>
    %282 = tpu.reciprocal %281 {approx = true} : vector<16x128xf32> -> vector<16x128xf32>
    %283 = arith.mulf %279, %282 : vector<16x128xf32>
    %cst_112 = arith.constant 2.000000e+01 : f32
    %284 = vector.broadcast %cst_112 : f32 to vector<16x128xf32>
    %285 = arith.cmpf ogt, %272, %284 : vector<16x128xf32>
    %286 = arith.select %285, %272, %283 : vector<16x128xi1>, vector<16x128xf32>
    %287 = arith.truncf %286 : vector<16x128xf32> to vector<16x128xbf16>
    %c0_113 = arith.constant 0 : index
    %c0_114 = arith.constant 0 : index
    %c0_115 = arith.constant 0 : index
    %288 = vector.load %arg8[%c0_113, %c0_114, %c0_115] : memref<1x16x128xbf16, #tpu.memory_space<vmem>>, vector<1x16x128xbf16>
    %289 = vector.shape_cast %288 : vector<1x16x128xbf16> to vector<16x128xbf16>
    %290 = vector.shape_cast %287 : vector<16x128xbf16> to vector<1x16x128xbf16>
    tpu.vector_store %arg8[%c0_113, %c0_114, %c0_115], %290 {strides = array<i32>} : memref<1x16x128xbf16, #tpu.memory_space<vmem>>, vector<1x16x128xbf16>,
    return
  }
  func.func @transform_1(%arg0: i32, %arg1: i32) -> (i32, i32, i32) {
    %c0_i32 = arith.constant 0 : i32
    %c0_i32_0 = arith.constant 0 : i32
    %c0_i32_1 = arith.constant 0 : i32
    %c0_i32_2 = arith.constant 0 : i32
    return %c0_i32, %c0_i32_0, %c0_i32_1 : i32, i32, i32
  }
  func.func @transform_2(%arg0: i32, %arg1: i32) -> (i32, i32, i32) {
    %c0_i32 = arith.constant 0 : i32
    %c0_i32_0 = arith.constant 0 : i32
    %c0_i32_1 = arith.constant 0 : i32
    %c0_i32_2 = arith.constant 0 : i32
    return %c0_i32, %c0_i32_0, %c0_i32_1 : i32, i32, i32
  }
  func.func @transform_3(%arg0: i32, %arg1: i32) -> (i32, i32, i32) {
    %c0_i32 = arith.constant 0 : i32
    %c0_i32_0 = arith.constant 0 : i32
    %c0_i32_1 = arith.constant 0 : i32
    %c0_i32_2 = arith.constant 0 : i32
    return %c0_i32, %c0_i32_0, %c0_i32_1 : i32, i32, i32
  }
  func.func @transform_4(%arg0: i32, %arg1: i32) -> (i32, i32) {
    %c0_i32 = arith.constant 0 : i32
    %c0_i32_0 = arith.constant 0 : i32
    %c0_i32_1 = arith.constant 0 : i32
    return %c0_i32, %c0_i32_0 : i32, i32
  }
  func.func @transform_5(%arg0: i32, %arg1: i32) -> (i32, i32) {
    %c0_i32 = arith.constant 0 : i32
    %c0_i32_0 = arith.constant 0 : i32
    %c0_i32_1 = arith.constant 0 : i32
    return %c0_i32, %c0_i32_0 : i32, i32
  }
  func.func @transform_6(%arg0: i32, %arg1: i32) -> (i32, i32, i32) {
    %c0_i32 = arith.constant 0 : i32
    %c0_i32_0 = arith.constant 0 : i32
    return %arg0, %arg1, %c0_i32 : i32, i32, i32
  }
}

module attributes {stable_mosaic.version = 11 : i64} {
  func.func @_quartz_block_kernel(%arg0: i32, %arg1: i32, %arg2: memref<2x48x128xbf16, #tpu.memory_space<any>>, %arg3: memref<6x3x128xf32, #tpu.memory_space<vmem>>, %arg4: memref<6x128x128xbf16, #tpu.memory_space<vmem>>, %arg5: memref<6x1x128xf32, #tpu.memory_space<vmem>>, %arg6: memref<128x128xbf16, #tpu.memory_space<vmem>>, %arg7: memref<1x128xf32, #tpu.memory_space<vmem>>, %arg8: memref<1x16x128xbf16, #tpu.memory_space<vmem>>, %arg9: memref<2x32x128xbf16, #tpu.memory_space<vmem>>, %arg10: memref<2x!tpu.dma_semaphore, #tpu.memory_space<semaphore_mem>>) attributes {dimension_semantics = [#tpu.dimension_semantics<parallel>, #tpu.dimension_semantics<arbitrary>], iteration_bounds = array<i64: 2, 2>, scalar_prefetch = 0 : i64, scratch_operands = 2 : i64, tpu.core_type = #tpu.core_type<tc>, window_params = [{}, {pipeline_mode = #tpu.pipeline_mode<synchronous>, transform_indices = @transform_1, window_bounds = array<i64: 6, 3, 128>}, {pipeline_mode = #tpu.pipeline_mode<synchronous>, transform_indices = @transform_2, window_bounds = array<i64: 6, 128, 128>}, {pipeline_mode = #tpu.pipeline_mode<synchronous>, transform_indices = @transform_3, window_bounds = array<i64: 6, 1, 128>}, {pipeline_mode = #tpu.pipeline_mode<synchronous>, transform_indices = @transform_4, window_bounds = array<i64: 128, 128>}, {pipeline_mode = #tpu.pipeline_mode<synchronous>, transform_indices = @transform_5, window_bounds = array<i64: 1, 128>}, {transform_indices = @transform_6, window_bounds = array<i64: 1, 16, 128>}]} {
    %c2_i32 = arith.constant 2 : i32
    %c0_i32 = arith.constant 0 : i32
    %0 = arith.cmpi eq, %c2_i32, %c0_i32 : i32
    %c1_i32 = arith.constant 1 : i32
    %1 = arith.select %0, %c1_i32, %c2_i32 : i32
    %2 = arith.remsi %arg1, %1 : i32
    %c0_i32_0 = arith.constant 0 : i32
    %3 = arith.cmpi ne, %2, %c0_i32_0 : i32
    %c0_i32_1 = arith.constant 0 : i32
    %4 = arith.cmpi slt, %2, %c0_i32_1 : i32
    %c0_i32_2 = arith.constant 0 : i32
    %5 = arith.cmpi slt, %1, %c0_i32_2 : i32
    %6 = arith.xori %4, %5 : i1
    %7 = arith.andi %6, %3 : i1
    %8 = arith.addi %2, %1 : i32
    %9 = arith.select %7, %8, %2 : i32
    %c0_i32_3 = arith.constant 0 : i32
    %10 = arith.cmpi eq, %arg1, %c0_i32_3 : i32
    %11 = arith.extui %10 : i1 to i32
    %c0_i32_4 = arith.constant 0 : i32
    %12 = arith.cmpi ne, %11, %c0_i32_4 : i32
    scf.if %12 {
      %c16_i32_116 = arith.constant 16 : i32
      %291 = arith.muli %arg1, %c16_i32_116 : i32
      %292 = tpu.assume_multiple %291, 8 : i32
      %c0_i32_117 = arith.constant 0 : i32
      %293 = tpu.memref_slice %arg2[%arg0, %292, %c0_i32_117] : memref<2x48x128xbf16, #tpu.memory_space<any>> -> memref<1x32x128xbf16, #tpu.memory_space<any>>
      %c0_i32_118 = arith.constant 0 : i32
      %c0_i32_119 = arith.constant 0 : i32
      %294 = tpu.memref_slice %arg9[%9, %c0_i32_118, %c0_i32_119] : memref<2x32x128xbf16, #tpu.memory_space<vmem>> -> memref<1x32x128xbf16, #tpu.memory_space<vmem>>
      %295 = tpu.memref_slice %arg10[%9] : memref<2x!tpu.dma_semaphore, #tpu.memory_space<semaphore_mem>> -> memref<1x!tpu.dma_semaphore, #tpu.memory_space<semaphore_mem>>
      %296 = tpu.memref_squeeze %295 : memref<1x!tpu.dma_semaphore, #tpu.memory_space<semaphore_mem>> -> memref<!tpu.dma_semaphore, #tpu.memory_space<semaphore_mem>>
      tpu.enqueue_dma source(%293 : memref<1x32x128xbf16, #tpu.memory_space<any>>) target(%294 : memref<1x32x128xbf16, #tpu.memory_space<vmem>>) target_semaphore(%296 : memref<!tpu.dma_semaphore, #tpu.memory_space<semaphore_mem>>)
    } else {
    }
    %13 = tpu.iota {dimensions = array<i32: 0>} : vector<32x1xi32>
    %c16_i32 = arith.constant 16 : i32
    %14 = arith.muli %arg1, %c16_i32 : i32
    %c8_i32 = arith.constant 8 : i32
    %15 = arith.subi %14, %c8_i32 : i32
    %16 = vector.broadcast %15 : i32 to vector<32x1xi32>
    %17 = arith.addi %13, %16 : vector<32x1xi32>
    %c0_i32_5 = arith.constant 0 : i32
    %18 = vector.broadcast %c0_i32_5 : i32 to vector<32x1xi32>
    %19 = arith.cmpi sge, %17, %18 : vector<32x1xi32>
    %c32_i32 = arith.constant 32 : i32
    %20 = vector.broadcast %c32_i32 : i32 to vector<32x1xi32>
    %21 = arith.cmpi slt, %17, %20 : vector<32x1xi32>
    %22 = arith.andi %19, %21 : vector<32x1xi1>
    %c16_i32_6 = arith.constant 16 : i32
    %23 = arith.muli %arg1, %c16_i32_6 : i32
    %24 = tpu.assume_multiple %23, 8 : i32
    %c0_i32_7 = arith.constant 0 : i32
    %25 = tpu.memref_slice %arg2[%arg0, %24, %c0_i32_7] : memref<2x48x128xbf16, #tpu.memory_space<any>> -> memref<1x32x128xbf16, #tpu.memory_space<any>>
    %c0_i32_8 = arith.constant 0 : i32
    %c0_i32_9 = arith.constant 0 : i32
    %26 = tpu.memref_slice %arg9[%9, %c0_i32_8, %c0_i32_9] : memref<2x32x128xbf16, #tpu.memory_space<vmem>> -> memref<1x32x128xbf16, #tpu.memory_space<vmem>>
    %27 = tpu.memref_slice %arg10[%9] : memref<2x!tpu.dma_semaphore, #tpu.memory_space<semaphore_mem>> -> memref<1x!tpu.dma_semaphore, #tpu.memory_space<semaphore_mem>>
    %28 = tpu.memref_squeeze %27 : memref<1x!tpu.dma_semaphore, #tpu.memory_space<semaphore_mem>> -> memref<!tpu.dma_semaphore, #tpu.memory_space<semaphore_mem>>
    tpu.wait_dma2 semaphore(%28 : memref<!tpu.dma_semaphore, #tpu.memory_space<semaphore_mem>>) src(%25 : memref<1x32x128xbf16, #tpu.memory_space<any>>) dst(%26 : memref<1x32x128xbf16, #tpu.memory_space<vmem>>)
    %c1_i32_10 = arith.constant 1 : i32
    %29 = arith.addi %arg1, %c1_i32_10 : i32
    %c2_i32_11 = arith.constant 2 : i32
    %30 = arith.cmpi slt, %29, %c2_i32_11 : i32
    %31 = arith.extui %30 : i1 to i32
    %c0_i32_12 = arith.constant 0 : i32
    %32 = arith.cmpi ne, %31, %c0_i32_12 : i32
    scf.if %32 {
      %c1_i32_116 = arith.constant 1 : i32
      %291 = arith.addi %arg1, %c1_i32_116 : i32
      %c1_i32_117 = arith.constant 1 : i32
      %292 = arith.subi %c1_i32_117, %9 : i32
      %c16_i32_118 = arith.constant 16 : i32
      %293 = arith.muli %291, %c16_i32_118 : i32
      %294 = tpu.assume_multiple %293, 8 : i32
      %c0_i32_119 = arith.constant 0 : i32
      %295 = tpu.memref_slice %arg2[%arg0, %294, %c0_i32_119] : memref<2x48x128xbf16, #tpu.memory_space<any>> -> memref<1x32x128xbf16, #tpu.memory_space<any>>
      %c0_i32_120 = arith.constant 0 : i32
      %c0_i32_121 = arith.constant 0 : i32
      %296 = tpu.memref_slice %arg9[%292, %c0_i32_120, %c0_i32_121] : memref<2x32x128xbf16, #tpu.memory_space<vmem>> -> memref<1x32x128xbf16, #tpu.memory_space<vmem>>
      %297 = tpu.memref_slice %arg10[%292] : memref<2x!tpu.dma_semaphore, #tpu.memory_space<semaphore_mem>> -> memref<1x!tpu.dma_semaphore, #tpu.memory_space<semaphore_mem>>
      %298 = tpu.memref_squeeze %297 : memref<1x!tpu.dma_semaphore, #tpu.memory_space<semaphore_mem>> -> memref<!tpu.dma_semaphore, #tpu.memory_space<semaphore_mem>>
      tpu.enqueue_dma source(%295 : memref<1x32x128xbf16, #tpu.memory_space<any>>) target(%296 : memref<1x32x128xbf16, #tpu.memory_space<vmem>>) target_semaphore(%298 : memref<!tpu.dma_semaphore, #tpu.memory_space<semaphore_mem>>)
    } else {
    }
    %33 = arith.index_cast %9 : i32 to index
    %c0 = arith.constant 0 : index
    %c0_13 = arith.constant 0 : index
    %34 = vector.load %arg9[%33, %c0, %c0_13] : memref<2x32x128xbf16, #tpu.memory_space<vmem>>, vector<1x32x128xbf16>
    %35 = vector.shape_cast %34 : vector<1x32x128xbf16> to vector<32x128xbf16>
    %36 = vector.extract_strided_slice %35 {offsets = [8, 0], sizes = [16, 128], strides = [1, 1]} : vector<32x128xbf16> to vector<16x128xbf16>
    %c0_14 = arith.constant 0 : index
    %c0_15 = arith.constant 0 : index
    %37 = vector.load %arg6[%c0_14, %c0_15] : memref<128x128xbf16, #tpu.memory_space<vmem>>, vector<128x128xbf16>
    %cst = arith.constant dense<0.000000e+00> : vector<16x128xf32>
    %38 = tpu.matmul %36, %37, %cst {dimension_numbers = #tpu.dot_dimension_numbers<[1], [0], [0], [1], [0, 0, 1, 1], [], []>} : vector<16x128xbf16>, vector<128x128xbf16>, vector<16x128xf32> -> vector<16x128xf32>
    %c0_16 = arith.constant 0 : index
    %c0_17 = arith.constant 0 : index
    %39 = vector.load %arg7[%c0_16, %c0_17] : memref<1x128xf32, #tpu.memory_space<vmem>>, vector<1x128xf32>
    %40 = vector.broadcast %39 : vector<1x128xf32> to vector<16x128xf32>
    %41 = arith.addf %38, %40 : vector<16x128xf32>
    %42 = arith.extf %35 : vector<32x128xbf16> to vector<32x128xf32>
    %c0_18 = arith.constant 0 : index
    %c0_19 = arith.constant 0 : index
    %c0_20 = arith.constant 0 : index
    %43 = vector.load %arg3[%c0_18, %c0_19, %c0_20] : memref<6x3x128xf32, #tpu.memory_space<vmem>>, vector<1x3x128xf32>
    %44 = vector.shape_cast %43 : vector<1x3x128xf32> to vector<3x128xf32>
    %45 = vector.extract_strided_slice %44 {offsets = [1, 0], sizes = [1, 128], strides = [1, 1]} : vector<3x128xf32> to vector<1x128xf32>
    %46 = vector.broadcast %45 : vector<1x128xf32> to vector<32x128xf32>
    %47 = arith.mulf %42, %46 : vector<32x128xf32>
    %c1_i32_21 = arith.constant 1 : i32
    %48 = tpu.dynamic_rotate %42 by %c1_i32_21 dim 0 : vector<32x128xf32>, i32 -> vector<32x128xf32>
    %49 = vector.extract_strided_slice %44 {offsets = [0, 0], sizes = [1, 128], strides = [1, 1]} : vector<3x128xf32> to vector<1x128xf32>
    %50 = vector.broadcast %49 : vector<1x128xf32> to vector<32x128xf32>
    %51 = arith.mulf %48, %50 : vector<32x128xf32>
    %52 = arith.addf %47, %51 : vector<32x128xf32>
    %c31_i32 = arith.constant 31 : i32
    %53 = tpu.dynamic_rotate %42 by %c31_i32 dim 0 : vector<32x128xf32>, i32 -> vector<32x128xf32>
    %54 = vector.extract_strided_slice %44 {offsets = [2, 0], sizes = [1, 128], strides = [1, 1]} : vector<3x128xf32> to vector<1x128xf32>
    %55 = vector.broadcast %54 : vector<1x128xf32> to vector<32x128xf32>
    %56 = arith.mulf %53, %55 : vector<32x128xf32>
    %57 = arith.addf %52, %56 : vector<32x128xf32>
    %58 = arith.truncf %57 : vector<32x128xf32> to vector<32x128xbf16>
    %c0_22 = arith.constant 0 : index
    %c0_23 = arith.constant 0 : index
    %c0_24 = arith.constant 0 : index
    %59 = vector.load %arg4[%c0_22, %c0_23, %c0_24] : memref<6x128x128xbf16, #tpu.memory_space<vmem>>, vector<1x128x128xbf16>
    %60 = vector.shape_cast %59 : vector<1x128x128xbf16> to vector<128x128xbf16>
    %cst_25 = arith.constant dense<0.000000e+00> : vector<32x128xf32>
    %61 = tpu.matmul %58, %60, %cst_25 {dimension_numbers = #tpu.dot_dimension_numbers<[1], [0], [0], [1], [0, 0, 1, 1], [], []>} : vector<32x128xbf16>, vector<128x128xbf16>, vector<32x128xf32> -> vector<32x128xf32>
    %c0_26 = arith.constant 0 : index
    %c0_27 = arith.constant 0 : index
    %c0_28 = arith.constant 0 : index
    %62 = vector.load %arg5[%c0_26, %c0_27, %c0_28] : memref<6x1x128xf32, #tpu.memory_space<vmem>>, vector<1x1x128xf32>
    %63 = vector.shape_cast %62 : vector<1x1x128xf32> to vector<1x128xf32>
    %64 = vector.broadcast %63 : vector<1x128xf32> to vector<32x128xf32>
    %65 = arith.addf %61, %64 : vector<32x128xf32>
    %cst_29 = arith.constant 2.000000e+01 : f32
    %66 = vector.broadcast %cst_29 : f32 to vector<32x128xf32>
    %67 = arith.minimumf %65, %66 : vector<32x128xf32>
    %68 = math.exp %67 : vector<32x128xf32>
    %cst_30 = arith.constant 2.000000e+00 : f32
    %69 = vector.broadcast %cst_30 : f32 to vector<32x128xf32>
    %70 = arith.addf %68, %69 : vector<32x128xf32>
    %71 = arith.mulf %68, %70 : vector<32x128xf32>
    %72 = arith.mulf %65, %71 : vector<32x128xf32>
    %cst_31 = arith.constant 2.000000e+00 : f32
    %73 = vector.broadcast %cst_31 : f32 to vector<32x128xf32>
    %74 = arith.addf %71, %73 : vector<32x128xf32>
    %75 = tpu.reciprocal %74 {approx = true} : vector<32x128xf32> -> vector<32x128xf32>
    %76 = arith.mulf %72, %75 : vector<32x128xf32>
    %cst_32 = arith.constant 2.000000e+01 : f32
    %77 = vector.broadcast %cst_32 : f32 to vector<32x128xf32>
    %78 = arith.cmpf ogt, %65, %77 : vector<32x128xf32>
    %79 = arith.select %78, %65, %76 : vector<32x128xi1>, vector<32x128xf32>
    %cst_33 = arith.constant 0.000000e+00 : f32
    %80 = vector.shape_cast %22 : vector<32x1xi1> to vector<32x1xi1>
    %81 = vector.broadcast %80 : vector<32x1xi1> to vector<32x128xi1>
    %82 = vector.broadcast %cst_33 : f32 to vector<32x128xf32>
    %83 = arith.select %81, %79, %82 : vector<32x128xi1>, vector<32x128xf32>
    %c1 = arith.constant 1 : index
    %c0_34 = arith.constant 0 : index
    %c0_35 = arith.constant 0 : index
    %84 = vector.load %arg3[%c1, %c0_34, %c0_35] : memref<6x3x128xf32, #tpu.memory_space<vmem>>, vector<1x3x128xf32>
    %85 = vector.shape_cast %84 : vector<1x3x128xf32> to vector<3x128xf32>
    %86 = vector.extract_strided_slice %85 {offsets = [1, 0], sizes = [1, 128], strides = [1, 1]} : vector<3x128xf32> to vector<1x128xf32>
    %87 = vector.broadcast %86 : vector<1x128xf32> to vector<32x128xf32>
    %88 = arith.mulf %83, %87 : vector<32x128xf32>
    %c1_i32_36 = arith.constant 1 : i32
    %89 = tpu.dynamic_rotate %83 by %c1_i32_36 dim 0 : vector<32x128xf32>, i32 -> vector<32x128xf32>
    %90 = vector.extract_strided_slice %85 {offsets = [0, 0], sizes = [1, 128], strides = [1, 1]} : vector<3x128xf32> to vector<1x128xf32>
    %91 = vector.broadcast %90 : vector<1x128xf32> to vector<32x128xf32>
    %92 = arith.mulf %89, %91 : vector<32x128xf32>
    %93 = arith.addf %88, %92 : vector<32x128xf32>
    %c31_i32_37 = arith.constant 31 : i32
    %94 = tpu.dynamic_rotate %83 by %c31_i32_37 dim 0 : vector<32x128xf32>, i32 -> vector<32x128xf32>
    %95 = vector.extract_strided_slice %85 {offsets = [2, 0], sizes = [1, 128], strides = [1, 1]} : vector<3x128xf32> to vector<1x128xf32>
    %96 = vector.broadcast %95 : vector<1x128xf32> to vector<32x128xf32>
    %97 = arith.mulf %94, %96 : vector<32x128xf32>
    %98 = arith.addf %93, %97 : vector<32x128xf32>
    %99 = arith.truncf %98 : vector<32x128xf32> to vector<32x128xbf16>
    %c1_38 = arith.constant 1 : index
    %c0_39 = arith.constant 0 : index
    %c0_40 = arith.constant 0 : index
    %100 = vector.load %arg4[%c1_38, %c0_39, %c0_40] : memref<6x128x128xbf16, #tpu.memory_space<vmem>>, vector<1x128x128xbf16>
    %101 = vector.shape_cast %100 : vector<1x128x128xbf16> to vector<128x128xbf16>
    %cst_41 = arith.constant dense<0.000000e+00> : vector<32x128xf32>
    %102 = tpu.matmul %99, %101, %cst_41 {dimension_numbers = #tpu.dot_dimension_numbers<[1], [0], [0], [1], [0, 0, 1, 1], [], []>} : vector<32x128xbf16>, vector<128x128xbf16>, vector<32x128xf32> -> vector<32x128xf32>
    %c1_42 = arith.constant 1 : index
    %c0_43 = arith.constant 0 : index
    %c0_44 = arith.constant 0 : index
    %103 = vector.load %arg5[%c1_42, %c0_43, %c0_44] : memref<6x1x128xf32, #tpu.memory_space<vmem>>, vector<1x1x128xf32>
    %104 = vector.shape_cast %103 : vector<1x1x128xf32> to vector<1x128xf32>
    %105 = vector.broadcast %104 : vector<1x128xf32> to vector<32x128xf32>
    %106 = arith.addf %102, %105 : vector<32x128xf32>
    %cst_45 = arith.constant 2.000000e+01 : f32
    %107 = vector.broadcast %cst_45 : f32 to vector<32x128xf32>
    %108 = arith.minimumf %106, %107 : vector<32x128xf32>
    %109 = math.exp %108 : vector<32x128xf32>
    %cst_46 = arith.constant 2.000000e+00 : f32
    %110 = vector.broadcast %cst_46 : f32 to vector<32x128xf32>
    %111 = arith.addf %109, %110 : vector<32x128xf32>
    %112 = arith.mulf %109, %111 : vector<32x128xf32>
    %113 = arith.mulf %106, %112 : vector<32x128xf32>
    %cst_47 = arith.constant 2.000000e+00 : f32
    %114 = vector.broadcast %cst_47 : f32 to vector<32x128xf32>
    %115 = arith.addf %112, %114 : vector<32x128xf32>
    %116 = tpu.reciprocal %115 {approx = true} : vector<32x128xf32> -> vector<32x128xf32>
    %117 = arith.mulf %113, %116 : vector<32x128xf32>
    %cst_48 = arith.constant 2.000000e+01 : f32
    %118 = vector.broadcast %cst_48 : f32 to vector<32x128xf32>
    %119 = arith.cmpf ogt, %106, %118 : vector<32x128xf32>
    %120 = arith.select %119, %106, %117 : vector<32x128xi1>, vector<32x128xf32>
    %cst_49 = arith.constant 0.000000e+00 : f32
    %121 = vector.shape_cast %22 : vector<32x1xi1> to vector<32x1xi1>
    %122 = vector.broadcast %121 : vector<32x1xi1> to vector<32x128xi1>
    %123 = vector.broadcast %cst_49 : f32 to vector<32x128xf32>
    %124 = arith.select %122, %120, %123 : vector<32x128xi1>, vector<32x128xf32>
    %c2 = arith.constant 2 : index
    %c0_50 = arith.constant 0 : index
    %c0_51 = arith.constant 0 : index
    %125 = vector.load %arg3[%c2, %c0_50, %c0_51] : memref<6x3x128xf32, #tpu.memory_space<vmem>>, vector<1x3x128xf32>
    %126 = vector.shape_cast %125 : vector<1x3x128xf32> to vector<3x128xf32>
    %127 = vector.extract_strided_slice %126 {offsets = [1, 0], sizes = [1, 128], strides = [1, 1]} : vector<3x128xf32> to vector<1x128xf32>
    %128 = vector.broadcast %127 : vector<1x128xf32> to vector<32x128xf32>
    %129 = arith.mulf %124, %128 : vector<32x128xf32>
    %c1_i32_52 = arith.constant 1 : i32
    %130 = tpu.dynamic_rotate %124 by %c1_i32_52 dim 0 : vector<32x128xf32>, i32 -> vector<32x128xf32>
    %131 = vector.extract_strided_slice %126 {offsets = [0, 0], sizes = [1, 128], strides = [1, 1]} : vector<3x128xf32> to vector<1x128xf32>
    %132 = vector.broadcast %131 : vector<1x128xf32> to vector<32x128xf32>
    %133 = arith.mulf %130, %132 : vector<32x128xf32>
    %134 = arith.addf %129, %133 : vector<32x128xf32>
    %c31_i32_53 = arith.constant 31 : i32
    %135 = tpu.dynamic_rotate %124 by %c31_i32_53 dim 0 : vector<32x128xf32>, i32 -> vector<32x128xf32>
    %136 = vector.extract_strided_slice %126 {offsets = [2, 0], sizes = [1, 128], strides = [1, 1]} : vector<3x128xf32> to vector<1x128xf32>
    %137 = vector.broadcast %136 : vector<1x128xf32> to vector<32x128xf32>
    %138 = arith.mulf %135, %137 : vector<32x128xf32>
    %139 = arith.addf %134, %138 : vector<32x128xf32>
    %140 = arith.truncf %139 : vector<32x128xf32> to vector<32x128xbf16>
    %c2_54 = arith.constant 2 : index
    %c0_55 = arith.constant 0 : index
    %c0_56 = arith.constant 0 : index
    %141 = vector.load %arg4[%c2_54, %c0_55, %c0_56] : memref<6x128x128xbf16, #tpu.memory_space<vmem>>, vector<1x128x128xbf16>
    %142 = vector.shape_cast %141 : vector<1x128x128xbf16> to vector<128x128xbf16>
    %cst_57 = arith.constant dense<0.000000e+00> : vector<32x128xf32>
    %143 = tpu.matmul %140, %142, %cst_57 {dimension_numbers = #tpu.dot_dimension_numbers<[1], [0], [0], [1], [0, 0, 1, 1], [], []>} : vector<32x128xbf16>, vector<128x128xbf16>, vector<32x128xf32> -> vector<32x128xf32>
    %c2_58 = arith.constant 2 : index
    %c0_59 = arith.constant 0 : index
    %c0_60 = arith.constant 0 : index
    %144 = vector.load %arg5[%c2_58, %c0_59, %c0_60] : memref<6x1x128xf32, #tpu.memory_space<vmem>>, vector<1x1x128xf32>
    %145 = vector.shape_cast %144 : vector<1x1x128xf32> to vector<1x128xf32>
    %146 = vector.broadcast %145 : vector<1x128xf32> to vector<32x128xf32>
    %147 = arith.addf %143, %146 : vector<32x128xf32>
    %cst_61 = arith.constant 2.000000e+01 : f32
    %148 = vector.broadcast %cst_61 : f32 to vector<32x128xf32>
    %149 = arith.minimumf %147, %148 : vector<32x128xf32>
    %150 = math.exp %149 : vector<32x128xf32>
    %cst_62 = arith.constant 2.000000e+00 : f32
    %151 = vector.broadcast %cst_62 : f32 to vector<32x128xf32>
    %152 = arith.addf %150, %151 : vector<32x128xf32>
    %153 = arith.mulf %150, %152 : vector<32x128xf32>
    %154 = arith.mulf %147, %153 : vector<32x128xf32>
    %cst_63 = arith.constant 2.000000e+00 : f32
    %155 = vector.broadcast %cst_63 : f32 to vector<32x128xf32>
    %156 = arith.addf %153, %155 : vector<32x128xf32>
    %157 = tpu.reciprocal %156 {approx = true} : vector<32x128xf32> -> vector<32x128xf32>
    %158 = arith.mulf %154, %157 : vector<32x128xf32>
    %cst_64 = arith.constant 2.000000e+01 : f32
    %159 = vector.broadcast %cst_64 : f32 to vector<32x128xf32>
    %160 = arith.cmpf ogt, %147, %159 : vector<32x128xf32>
    %161 = arith.select %160, %147, %158 : vector<32x128xi1>, vector<32x128xf32>
    %cst_65 = arith.constant 0.000000e+00 : f32
    %162 = vector.shape_cast %22 : vector<32x1xi1> to vector<32x1xi1>
    %163 = vector.broadcast %162 : vector<32x1xi1> to vector<32x128xi1>
    %164 = vector.broadcast %cst_65 : f32 to vector<32x128xf32>
    %165 = arith.select %163, %161, %164 : vector<32x128xi1>, vector<32x128xf32>
    %c3 = arith.constant 3 : index
    %c0_66 = arith.constant 0 : index
    %c0_67 = arith.constant 0 : index
    %166 = vector.load %arg3[%c3, %c0_66, %c0_67] : memref<6x3x128xf32, #tpu.memory_space<vmem>>, vector<1x3x128xf32>
    %167 = vector.shape_cast %166 : vector<1x3x128xf32> to vector<3x128xf32>
    %168 = vector.extract_strided_slice %167 {offsets = [1, 0], sizes = [1, 128], strides = [1, 1]} : vector<3x128xf32> to vector<1x128xf32>
    %169 = vector.broadcast %168 : vector<1x128xf32> to vector<32x128xf32>
    %170 = arith.mulf %165, %169 : vector<32x128xf32>
    %c1_i32_68 = arith.constant 1 : i32
    %171 = tpu.dynamic_rotate %165 by %c1_i32_68 dim 0 : vector<32x128xf32>, i32 -> vector<32x128xf32>
    %172 = vector.extract_strided_slice %167 {offsets = [0, 0], sizes = [1, 128], strides = [1, 1]} : vector<3x128xf32> to vector<1x128xf32>
    %173 = vector.broadcast %172 : vector<1x128xf32> to vector<32x128xf32>
    %174 = arith.mulf %171, %173 : vector<32x128xf32>
    %175 = arith.addf %170, %174 : vector<32x128xf32>
    %c31_i32_69 = arith.constant 31 : i32
    %176 = tpu.dynamic_rotate %165 by %c31_i32_69 dim 0 : vector<32x128xf32>, i32 -> vector<32x128xf32>
    %177 = vector.extract_strided_slice %167 {offsets = [2, 0], sizes = [1, 128], strides = [1, 1]} : vector<3x128xf32> to vector<1x128xf32>
    %178 = vector.broadcast %177 : vector<1x128xf32> to vector<32x128xf32>
    %179 = arith.mulf %176, %178 : vector<32x128xf32>
    %180 = arith.addf %175, %179 : vector<32x128xf32>
    %181 = arith.truncf %180 : vector<32x128xf32> to vector<32x128xbf16>
    %c3_70 = arith.constant 3 : index
    %c0_71 = arith.constant 0 : index
    %c0_72 = arith.constant 0 : index
    %182 = vector.load %arg4[%c3_70, %c0_71, %c0_72] : memref<6x128x128xbf16, #tpu.memory_space<vmem>>, vector<1x128x128xbf16>
    %183 = vector.shape_cast %182 : vector<1x128x128xbf16> to vector<128x128xbf16>
    %cst_73 = arith.constant dense<0.000000e+00> : vector<32x128xf32>
    %184 = tpu.matmul %181, %183, %cst_73 {dimension_numbers = #tpu.dot_dimension_numbers<[1], [0], [0], [1], [0, 0, 1, 1], [], []>} : vector<32x128xbf16>, vector<128x128xbf16>, vector<32x128xf32> -> vector<32x128xf32>
    %c3_74 = arith.constant 3 : index
    %c0_75 = arith.constant 0 : index
    %c0_76 = arith.constant 0 : index
    %185 = vector.load %arg5[%c3_74, %c0_75, %c0_76] : memref<6x1x128xf32, #tpu.memory_space<vmem>>, vector<1x1x128xf32>
    %186 = vector.shape_cast %185 : vector<1x1x128xf32> to vector<1x128xf32>
    %187 = vector.broadcast %186 : vector<1x128xf32> to vector<32x128xf32>
    %188 = arith.addf %184, %187 : vector<32x128xf32>
    %cst_77 = arith.constant 2.000000e+01 : f32
    %189 = vector.broadcast %cst_77 : f32 to vector<32x128xf32>
    %190 = arith.minimumf %188, %189 : vector<32x128xf32>
    %191 = math.exp %190 : vector<32x128xf32>
    %cst_78 = arith.constant 2.000000e+00 : f32
    %192 = vector.broadcast %cst_78 : f32 to vector<32x128xf32>
    %193 = arith.addf %191, %192 : vector<32x128xf32>
    %194 = arith.mulf %191, %193 : vector<32x128xf32>
    %195 = arith.mulf %188, %194 : vector<32x128xf32>
    %cst_79 = arith.constant 2.000000e+00 : f32
    %196 = vector.broadcast %cst_79 : f32 to vector<32x128xf32>
    %197 = arith.addf %194, %196 : vector<32x128xf32>
    %198 = tpu.reciprocal %197 {approx = true} : vector<32x128xf32> -> vector<32x128xf32>
    %199 = arith.mulf %195, %198 : vector<32x128xf32>
    %cst_80 = arith.constant 2.000000e+01 : f32
    %200 = vector.broadcast %cst_80 : f32 to vector<32x128xf32>
    %201 = arith.cmpf ogt, %188, %200 : vector<32x128xf32>
    %202 = arith.select %201, %188, %199 : vector<32x128xi1>, vector<32x128xf32>
    %cst_81 = arith.constant 0.000000e+00 : f32
    %203 = vector.shape_cast %22 : vector<32x1xi1> to vector<32x1xi1>
    %204 = vector.broadcast %203 : vector<32x1xi1> to vector<32x128xi1>
    %205 = vector.broadcast %cst_81 : f32 to vector<32x128xf32>
    %206 = arith.select %204, %202, %205 : vector<32x128xi1>, vector<32x128xf32>
    %c4 = arith.constant 4 : index
    %c0_82 = arith.constant 0 : index
    %c0_83 = arith.constant 0 : index
    %207 = vector.load %arg3[%c4, %c0_82, %c0_83] : memref<6x3x128xf32, #tpu.memory_space<vmem>>, vector<1x3x128xf32>
    %208 = vector.shape_cast %207 : vector<1x3x128xf32> to vector<3x128xf32>
    %209 = vector.extract_strided_slice %208 {offsets = [1, 0], sizes = [1, 128], strides = [1, 1]} : vector<3x128xf32> to vector<1x128xf32>
    %210 = vector.broadcast %209 : vector<1x128xf32> to vector<32x128xf32>
    %211 = arith.mulf %206, %210 : vector<32x128xf32>
    %c1_i32_84 = arith.constant 1 : i32
    %212 = tpu.dynamic_rotate %206 by %c1_i32_84 dim 0 : vector<32x128xf32>, i32 -> vector<32x128xf32>
    %213 = vector.extract_strided_slice %208 {offsets = [0, 0], sizes = [1, 128], strides = [1, 1]} : vector<3x128xf32> to vector<1x128xf32>
    %214 = vector.broadcast %213 : vector<1x128xf32> to vector<32x128xf32>
    %215 = arith.mulf %212, %214 : vector<32x128xf32>
    %216 = arith.addf %211, %215 : vector<32x128xf32>
    %c31_i32_85 = arith.constant 31 : i32
    %217 = tpu.dynamic_rotate %206 by %c31_i32_85 dim 0 : vector<32x128xf32>, i32 -> vector<32x128xf32>
    %218 = vector.extract_strided_slice %208 {offsets = [2, 0], sizes = [1, 128], strides = [1, 1]} : vector<3x128xf32> to vector<1x128xf32>
    %219 = vector.broadcast %218 : vector<1x128xf32> to vector<32x128xf32>
    %220 = arith.mulf %217, %219 : vector<32x128xf32>
    %221 = arith.addf %216, %220 : vector<32x128xf32>
    %222 = arith.truncf %221 : vector<32x128xf32> to vector<32x128xbf16>
    %c4_86 = arith.constant 4 : index
    %c0_87 = arith.constant 0 : index
    %c0_88 = arith.constant 0 : index
    %223 = vector.load %arg4[%c4_86, %c0_87, %c0_88] : memref<6x128x128xbf16, #tpu.memory_space<vmem>>, vector<1x128x128xbf16>
    %224 = vector.shape_cast %223 : vector<1x128x128xbf16> to vector<128x128xbf16>
    %cst_89 = arith.constant dense<0.000000e+00> : vector<32x128xf32>
    %225 = tpu.matmul %222, %224, %cst_89 {dimension_numbers = #tpu.dot_dimension_numbers<[1], [0], [0], [1], [0, 0, 1, 1], [], []>} : vector<32x128xbf16>, vector<128x128xbf16>, vector<32x128xf32> -> vector<32x128xf32>
    %c4_90 = arith.constant 4 : index
    %c0_91 = arith.constant 0 : index
    %c0_92 = arith.constant 0 : index
    %226 = vector.load %arg5[%c4_90, %c0_91, %c0_92] : memref<6x1x128xf32, #tpu.memory_space<vmem>>, vector<1x1x128xf32>
    %227 = vector.shape_cast %226 : vector<1x1x128xf32> to vector<1x128xf32>
    %228 = vector.broadcast %227 : vector<1x128xf32> to vector<32x128xf32>
    %229 = arith.addf %225, %228 : vector<32x128xf32>
    %cst_93 = arith.constant 2.000000e+01 : f32
    %230 = vector.broadcast %cst_93 : f32 to vector<32x128xf32>
    %231 = arith.minimumf %229, %230 : vector<32x128xf32>
    %232 = math.exp %231 : vector<32x128xf32>
    %cst_94 = arith.constant 2.000000e+00 : f32
    %233 = vector.broadcast %cst_94 : f32 to vector<32x128xf32>
    %234 = arith.addf %232, %233 : vector<32x128xf32>
    %235 = arith.mulf %232, %234 : vector<32x128xf32>
    %236 = arith.mulf %229, %235 : vector<32x128xf32>
    %cst_95 = arith.constant 2.000000e+00 : f32
    %237 = vector.broadcast %cst_95 : f32 to vector<32x128xf32>
    %238 = arith.addf %235, %237 : vector<32x128xf32>
    %239 = tpu.reciprocal %238 {approx = true} : vector<32x128xf32> -> vector<32x128xf32>
    %240 = arith.mulf %236, %239 : vector<32x128xf32>
    %cst_96 = arith.constant 2.000000e+01 : f32
    %241 = vector.broadcast %cst_96 : f32 to vector<32x128xf32>
    %242 = arith.cmpf ogt, %229, %241 : vector<32x128xf32>
    %243 = arith.select %242, %229, %240 : vector<32x128xi1>, vector<32x128xf32>
    %cst_97 = arith.constant 0.000000e+00 : f32
    %244 = vector.shape_cast %22 : vector<32x1xi1> to vector<32x1xi1>
    %245 = vector.broadcast %244 : vector<32x1xi1> to vector<32x128xi1>
    %246 = vector.broadcast %cst_97 : f32 to vector<32x128xf32>
    %247 = arith.select %245, %243, %246 : vector<32x128xi1>, vector<32x128xf32>
    %c5 = arith.constant 5 : index
    %c0_98 = arith.constant 0 : index
    %c0_99 = arith.constant 0 : index
    %248 = vector.load %arg3[%c5, %c0_98, %c0_99] : memref<6x3x128xf32, #tpu.memory_space<vmem>>, vector<1x3x128xf32>
    %249 = vector.shape_cast %248 : vector<1x3x128xf32> to vector<3x128xf32>
    %250 = vector.extract_strided_slice %249 {offsets = [1, 0], sizes = [1, 128], strides = [1, 1]} : vector<3x128xf32> to vector<1x128xf32>
    %251 = vector.broadcast %250 : vector<1x128xf32> to vector<32x128xf32>
    %252 = arith.mulf %247, %251 : vector<32x128xf32>
    %c1_i32_100 = arith.constant 1 : i32
    %253 = tpu.dynamic_rotate %247 by %c1_i32_100 dim 0 : vector<32x128xf32>, i32 -> vector<32x128xf32>
    %254 = vector.extract_strided_slice %249 {offsets = [0, 0], sizes = [1, 128], strides = [1, 1]} : vector<3x128xf32> to vector<1x128xf32>
    %255 = vector.broadcast %254 : vector<1x128xf32> to vector<32x128xf32>
    %256 = arith.mulf %253, %255 : vector<32x128xf32>
    %257 = arith.addf %252, %256 : vector<32x128xf32>
    %c31_i32_101 = arith.constant 31 : i32
    %258 = tpu.dynamic_rotate %247 by %c31_i32_101 dim 0 : vector<32x128xf32>, i32 -> vector<32x128xf32>
    %259 = vector.extract_strided_slice %249 {offsets = [2, 0], sizes = [1, 128], strides = [1, 1]} : vector<3x128xf32> to vector<1x128xf32>
    %260 = vector.broadcast %259 : vector<1x128xf32> to vector<32x128xf32>
    %261 = arith.mulf %258, %260 : vector<32x128xf32>
    %262 = arith.addf %257, %261 : vector<32x128xf32>
    %263 = arith.truncf %262 : vector<32x128xf32> to vector<32x128xbf16>
    %c5_102 = arith.constant 5 : index
    %c0_103 = arith.constant 0 : index
    %c0_104 = arith.constant 0 : index
    %264 = vector.load %arg4[%c5_102, %c0_103, %c0_104] : memref<6x128x128xbf16, #tpu.memory_space<vmem>>, vector<1x128x128xbf16>
    %265 = vector.shape_cast %264 : vector<1x128x128xbf16> to vector<128x128xbf16>
    %cst_105 = arith.constant dense<0.000000e+00> : vector<32x128xf32>
    %266 = tpu.matmul %263, %265, %cst_105 {dimension_numbers = #tpu.dot_dimension_numbers<[1], [0], [0], [1], [0, 0, 1, 1], [], []>} : vector<32x128xbf16>, vector<128x128xbf16>, vector<32x128xf32> -> vector<32x128xf32>
    %c5_106 = arith.constant 5 : index
    %c0_107 = arith.constant 0 : index
    %c0_108 = arith.constant 0 : index
    %267 = vector.load %arg5[%c5_106, %c0_107, %c0_108] : memref<6x1x128xf32, #tpu.memory_space<vmem>>, vector<1x1x128xf32>
    %268 = vector.shape_cast %267 : vector<1x1x128xf32> to vector<1x128xf32>
    %269 = vector.broadcast %268 : vector<1x128xf32> to vector<32x128xf32>
    %270 = arith.addf %266, %269 : vector<32x128xf32>
    %271 = vector.extract_strided_slice %270 {offsets = [8, 0], sizes = [16, 128], strides = [1, 1]} : vector<32x128xf32> to vector<16x128xf32>
    %272 = arith.addf %271, %41 : vector<16x128xf32>
    %cst_109 = arith.constant 2.000000e+01 : f32
    %273 = vector.broadcast %cst_109 : f32 to vector<16x128xf32>
    %274 = arith.minimumf %272, %273 : vector<16x128xf32>
    %275 = math.exp %274 : vector<16x128xf32>
    %cst_110 = arith.constant 2.000000e+00 : f32
    %276 = vector.broadcast %cst_110 : f32 to vector<16x128xf32>
    %277 = arith.addf %275, %276 : vector<16x128xf32>
    %278 = arith.mulf %275, %277 : vector<16x128xf32>
    %279 = arith.mulf %272, %278 : vector<16x128xf32>
    %cst_111 = arith.constant 2.000000e+00 : f32
    %280 = vector.broadcast %cst_111 : f32 to vector<16x128xf32>
    %281 = arith.addf %278, %280 : vector<16x128xf32>
    %282 = tpu.reciprocal %281 {approx = true} : vector<16x128xf32> -> vector<16x128xf32>
    %283 = arith.mulf %279, %282 : vector<16x128xf32>
    %cst_112 = arith.constant 2.000000e+01 : f32
    %284 = vector.broadcast %cst_112 : f32 to vector<16x128xf32>
    %285 = arith.cmpf ogt, %272, %284 : vector<16x128xf32>
    %286 = arith.select %285, %272, %283 : vector<16x128xi1>, vector<16x128xf32>
    %287 = arith.truncf %286 : vector<16x128xf32> to vector<16x128xbf16>
    %c0_113 = arith.constant 0 : index
    %c0_114 = arith.constant 0 : index
    %c0_115 = arith.constant 0 : index
    %288 = vector.load %arg8[%c0_113, %c0_114, %c0_115] : memref<1x16x128xbf16, #tpu.memory_space<vmem>>, vector<1x16x128xbf16>
    %289 = vector.shape_cast %288 : vector<1x16x128xbf16> to vector<16x128xbf16>
    %290 = vector.shape_cast %287 : vector<16x128xbf16> to vector<1x16x128xbf16>
    tpu.vector_store %arg8[%c0_113, %c0_114, %c0_115], %290 {strides = array<i32>} : memref<1x16x128xbf16, #tpu.memory_space<vmem>>, vector<1x16x128xbf16>,
    return
  }
  func.func @transform_1(%arg0: i32, %arg1: i32) -> (i32, i32, i32) {
    %c0_i32 = arith.constant 0 : i32
    %c0_i32_0 = arith.constant 0 : i32
    %c0_i32_1 = arith.constant 0 : i32
    %c0_i32_2 = arith.constant 0 : i32
    return %c0_i32, %c0_i32_0, %c0_i32_1 : i32, i32, i32
  }
  func.func @transform_2(%arg0: i32, %arg1: i32) -> (i32, i32, i32) {
    %c0_i32 = arith.constant 0 : i32
    %c0_i32_0 = arith.constant 0 : i32
    %c0_i32_1 = arith.constant 0 : i32
    %c0_i32_2 = arith.constant 0 : i32
    return %c0_i32, %c0_i32_0, %c0_i32_1 : i32, i32, i32
  }
  func.func @transform_3(%arg0: i32, %arg1: i32) -> (i32, i32, i32) {
    %c0_i32 = arith.constant 0 : i32
    %c0_i32_0 = arith.constant 0 : i32
    %c0_i32_1 = arith.constant 0 : i32
    %c0_i32_2 = arith.constant 0 : i32
    return %c0_i32, %c0_i32_0, %c0_i32_1 : i32, i32, i32
  }
  func.func @transform_4(%arg0: i32, %arg1: i32) -> (i32, i32) {
    %c0_i32 = arith.constant 0 : i32
    %c0_i32_0 = arith.constant 0 : i32
    %c0_i32_1 = arith.constant 0 : i32
    return %c0_i32, %c0_i32_0 : i32, i32
  }
  func.func @transform_5(%arg0: i32, %arg1: i32) -> (i32, i32) {
    %c0_i32 = arith.constant 0 : i32
    %c0_i32_0 = arith.constant 0 : i32
    %c0_i32_1 = arith.constant 0 : i32
    return %c0_i32, %c0_i32_0 : i32, i32
  }
  func.func @transform_6(%arg0: i32, %arg1: i32) -> (i32, i32, i32) {
    %c0_i32 = arith.constant 0 : i32
    %c0_i32_0 = arith.constant 0 : i32
    return %arg0, %arg1, %c0_i32 : i32, i32, i32
  }
}

</mosaic_0001>

<llo_original>
// kernel: tpu_custom_call.1
$region0: #{tpu_custom_call.1}
  #allocation0 [shape = 'u32[]', space=smem, size = 0x4, offset = 0x4, fixed_abs, tag = 'smem constant byte address 0x4 - core index']
  #allocation1 [shape = 'u32[144,128]{1,0:T(1,128)}', space=vmem, size = 0x12000, scoped, tag = 'internal scratch']
  #allocation2 [shape = 'bf16[2,32,128]{2,1,0:T(8,128)(2,1)}', space=vmem, size = 0x4000, scoped, tag = 'scratch operand']
  #allocation3 [shape = 's32[2]{0}', space=sflag, size = 0x8, scoped, tag = 'scratch operand']
  #allocation13 [shape = 's32[]', space=sflag, size = 0x4, offset = 0, fixed_abs, tag = 'sflag constant byte address 0x0 - dummy sync flag']
  #allocation14 [shape = 's32[]', space=sflag, size = 0x4, offset = 0, fixed_abs, tag = 'sflag constant byte address 0x0 - dummy sync flag']
  #allocation15 [shape = 'u32[]', space=smem, size = 0x4, offset = 0x44, fixed_abs, tag = 'smem constant byte address 0x44 - assertion arg 0']
  #allocation16 [shape = 'u32[]', space=smem, size = 0x4, offset = 0x48, fixed_abs, tag = 'smem constant byte address 0x48 - assertion arg 1']
  #allocation17 [shape = 's32[]', space=sflag, size = 0x4, offset = 0, fixed_abs, tag = 'sflag constant byte address 0x0 - dummy sync flag']
  #allocation18 [shape = 's32[]', space=sflag, size = 0x4, offset = 0, fixed_abs, tag = 'sflag constant byte address 0x0 - dummy sync flag']
  %s0 = inlined_call_operand.hbm [shape: bf16[2,48,128], index: 0, kind: input, shape index: {}]
  %s1 = inlined_call_operand.hbm [shape: f32[6,3,128], index: 1, kind: input, shape index: {}]
  %s2 = inlined_call_operand.hbm [shape: bf16[6,128,128], index: 2, kind: input, shape index: {}]
  %s3 = inlined_call_operand.hbm [shape: f32[6,1,128], index: 3, kind: input, shape index: {}]
  %s4 = inlined_call_operand.hbm [shape: bf16[128,128], index: 4, kind: input, shape index: {}]
  %s5 = inlined_call_operand.vmem [shape: f32[1,128], index: 5, kind: input, shape index: {}]
  %s6 = inlined_call_operand.hbm [shape: bf16[2,32,128], index: 6, kind: output, shape index: {}]
  %s7 = sld [smem:[#allocation0]]
  $region85: #{tpu_custom_call.1} parent=0
    _
  %s9 = ssub.s32 1, %s7
  %s10 = scalar_select 0, %s9, %s7
  $region1: #{tpu_custom_call.1} parent=0
    #allocation4 [shape = 'u8[12288]{0}', space=vmem, size = 0x3000, scoped, tag = 'input window, operand 1, single buffered']
    #allocation5 [shape = 's32[2]{0}', space=sflag, size = 0x8, scoped, tag = 'scoped memory for tpu_custom_call.1']
    #allocation6 [shape = 's32[2]{0}', space=sflag, size = 0x8, scoped, tag = 'scoped memory for tpu_custom_call.1']
    #allocation7 [shape = 'u8[196608]{0}', space=vmem, size = 0x30000, scoped, tag = 'input window, operand 2, single buffered']
    #allocation8 [shape = 's32[1]{0}', space=sflag, size = 0x4, scoped, tag = 'scoped memory for tpu_custom_call.1']
    #allocation9 [shape = 'u8[3072]{0}', space=vmem, size = 0xc00, scoped, tag = 'input window, operand 3, single buffered']
    #allocation10 [shape = 'u8[32768]{0}', space=vmem, size = 0x8000, scoped, tag = 'input window, operand 4, single buffered']
    #allocation11 [shape = 's32[1]{0}', space=sflag, size = 0x4, scoped, tag = 'scoped memory for tpu_custom_call.1']
    #allocation12 [shape = 'u8[8192]{0}', space=vmem, size = 0x2000, scoped, tag = 'output window, operand 0']
    %11 = vsyncpa [#allocation5], 0
    %12 = vsyncpa [#allocation8], 0
    %13 = vsyncpa [#allocation11], 0
    %14 = vsyncpa [#allocation6], 0
    %s15 = scalar_lea.sflag [#allocation6], 1
    %16 = vsyncpa %s15, 0
    loop: start=0, step=1, limit=6
    $region2: #{tpu_custom_call.1} parent=1 // loop_pre_header
      _
    $region3: #{tpu_custom_call.1} parent=1 // loop_header
      %s18 = sphi 0, %s22
      %p19 = scmp.ge.s32.totalorder %s18, 6
      %s25 = sphi 0, %s37
      %s26 = sphi 0, %s33
      %s27 = sphi 0, %s25
      %s28 = sphi 0, %s26
      %s29 = sphi 0, %s27
      %s30 = sphi 0, %s28
      %s38 = sphi 0, %s38
      %s40 = sphi 0, %s38
      %s41 = sphi 0, %s40
      %s55 = sphi 0, %s41
      %s59 = sphi 0, %s59
      %s61 = sphi 0, %s59
      %s62 = sphi 0, %s61
      %s76 = sphi 0, %s62
      %s80 = sphi 0, %s80
      %s82 = sphi 0, %s80
      %s83 = sphi 0, %s82
      %s97 = sphi 0, %s83
      %s101 = sphi 0, %s101
      %s103 = sphi 0, %s101
      %s104 = sphi 0, %s103
      %s118 = sphi 0, %s104
      %s122 = sphi 0, %s122
      %s124 = sphi 0, %s122
      %s125 = sphi 0, %s124
      %s139 = sphi 0, %s125
      %s147 = sphi 0, %s149
      %s150 = sphi 0, %s147
      %s151 = sphi 0, %s150
      %s167 = sphi 0, %s151
    $region4: #{tpu_custom_call.1} parent=1 // loop_header_branch
      %21 = sbr.rel (%p19) target = $region8
    $region5: #{tpu_custom_call.1} parent=1 // loop_body
      %s23 = ssub.s32 %s18, 1
      %s24 = ssub.s32 %s18, 2
      %s31 = sadd.s32 1, %s26
      %p32 = scmp.ge.s32.totalorder %s31, 2
      %s33 = scalar_select %p32, 0, %s31
      %s34 = sadd.s32 1, %s25
      %s35 = scalar_select %p32, %s34, %s25
      %p36 = scmp.ge.s32.totalorder %s35, 2
      %s37 = scalar_select %p36, 0, %s35
      %s39 = sadd.s32 %s38, 1
      %p42 = scmp.eq.s32.totalorder %s18, 3
      %p43 = scmp.ne.s32.totalorder %s38, %s40
      %p44 = scmp.eq.s32.totalorder %s18, 0
      %p45 = por %p43, %p44
      %p46 = scmp.ne.s32.totalorder %s38, %s40
      %p47 = scmp.eq.s32.totalorder %s23, 3
      %p48 = por %p46, %p47
      %p49 = scmp.ne.s32.totalorder %s40, %s41
      %p50 = scmp.eq.s32.totalorder %s23, 0
      %p51 = por %p49, %p50
      %p52 = scmp.ne.s32.totalorder %s40, %s41
      %p53 = scmp.eq.s32.totalorder %s24, 3
      %p54 = por %p52, %p53
      %p56 = scmp.ne.s32.totalorder %s41, %s55
      %p57 = scmp.eq.s32.totalorder %s24, 0
      %p58 = por %p56, %p57
      %s60 = sadd.s32 %s59, 1
      %p63 = scmp.eq.s32.totalorder %s18, 3
      %p64 = scmp.ne.s32.totalorder %s59, %s61
      %p65 = scmp.eq.s32.totalorder %s18, 0
      %p66 = por %p64, %p65
      %p67 = scmp.ne.s32.totalorder %s59, %s61
      %p68 = scmp.eq.s32.totalorder %s23, 3
      %p69 = por %p67, %p68
      %p70 = scmp.ne.s32.totalorder %s61, %s62
      %p71 = scmp.eq.s32.totalorder %s23, 0
      %p72 = por %p70, %p71
      %p73 = scmp.ne.s32.totalorder %s61, %s62
      %p74 = scmp.eq.s32.totalorder %s24, 3
      %p75 = por %p73, %p74
      %p77 = scmp.ne.s32.totalorder %s62, %s76
      %p78 = scmp.eq.s32.totalorder %s24, 0
      %p79 = por %p77, %p78
      %s81 = sadd.s32 %s80, 1
      %p84 = scmp.eq.s32.totalorder %s18, 3
      %p85 = scmp.ne.s32.totalorder %s80, %s82
      %p86 = scmp.eq.s32.totalorder %s18, 0
      %p87 = por %p85, %p86
      %p88 = scmp.ne.s32.totalorder %s80, %s82
      %p89 = scmp.eq.s32.totalorder %s23, 3
      %p90 = por %p88, %p89
      %p91 = scmp.ne.s32.totalorder %s82, %s83
      %p92 = scmp.eq.s32.totalorder %s23, 0
      %p93 = por %p91, %p92
      %p94 = scmp.ne.s32.totalorder %s82, %s83
      %p95 = scmp.eq.s32.totalorder %s24, 3
      %p96 = por %p94, %p95
      %p98 = scmp.ne.s32.totalorder %s83, %s97
      %p99 = scmp.eq.s32.totalorder %s24, 0
      %p100 = por %p98, %p99
      %s102 = sadd.s32 %s101, 1
      %p105 = scmp.eq.s32.totalorder %s18, 3
      %p106 = scmp.ne.s32.totalorder %s101, %s103
      %p107 = scmp.eq.s32.totalorder %s18, 0
      %p108 = por %p106, %p107
      %p109 = scmp.ne.s32.totalorder %s101, %s103
      %p110 = scmp.eq.s32.totalorder %s23, 3
      %p111 = por %p109, %p110
      %p112 = scmp.ne.s32.totalorder %s103, %s104
      %p113 = scmp.eq.s32.totalorder %s23, 0
      %p114 = por %p112, %p113
      %p115 = scmp.ne.s32.totalorder %s103, %s104
      %p116 = scmp.eq.s32.totalorder %s24, 3
      %p117 = por %p115, %p116
      %p119 = scmp.ne.s32.totalorder %s104, %s118
      %p120 = scmp.eq.s32.totalorder %s24, 0
      %p121 = por %p119, %p120
      %s123 = sadd.s32 %s122, 1
      %p126 = scmp.eq.s32.totalorder %s18, 3
      %p127 = scmp.ne.s32.totalorder %s122, %s124
      %p128 = scmp.eq.s32.totalorder %s18, 0
      %p129 = por %p127, %p128
      %p130 = scmp.ne.s32.totalorder %s122, %s124
      %p131 = scmp.eq.s32.totalorder %s23, 3
      %p132 = por %p130, %p131
      %p133 = scmp.ne.s32.totalorder %s124, %s125
      %p134 = scmp.eq.s32.totalorder %s23, 0
      %p135 = por %p133, %p134
      %p136 = scmp.ne.s32.totalorder %s124, %s125
      %p137 = scmp.eq.s32.totalorder %s24, 3
      %p138 = por %p136, %p137
      %p140 = scmp.ne.s32.totalorder %s125, %s139
      %p141 = scmp.eq.s32.totalorder %s24, 0
      %p142 = por %p140, %p141
      %s143 = ssub.s32 %s25, %s37
      %s144 = ssub.s32 %s26, %s33
      %s145 = sor.u32 %s143, %s144
      %p146 = scmp.eq.s32.totalorder %s145, 0
      %s148 = sadd.s32 %s147, 1
      %s149 = scalar_select %p146, %s147, %s148
      %p152 = pneg %p146
      %p153 = scmp.eq.s32.totalorder %s18, 3
      %p154 = por %p152, %p153
      %p155 = scmp.ne.s32.totalorder %s147, %s150
      %p156 = scmp.eq.s32.totalorder %s18, 0
      %p157 = por %p155, %p156
      %p158 = scmp.ne.s32.totalorder %s147, %s150
      %p159 = scmp.eq.s32.totalorder %s23, 3
      %p160 = por %p158, %p159
      %p161 = scmp.ne.s32.totalorder %s150, %s151
      %p162 = scmp.eq.s32.totalorder %s23, 0
      %p163 = por %p161, %p162
      %p164 = scmp.ne.s32.totalorder %s150, %s151
      %p165 = scmp.eq.s32.totalorder %s24, 3
      %p166 = por %p164, %p165
      %p168 = scmp.ne.s32.totalorder %s151, %s167
      %p169 = scmp.eq.s32.totalorder %s24, 0
      %p170 = por %p168, %p169
      %p171 = scmp.le.s32.totalorder 1, %s18
      %p172 = scmp.lt.s32.totalorder %s18, 5
      %p173 = pnand %p171, %p172
      %p174 = pneg %p173
      // Predicated region
      $region9: #{tpu_custom_call.1} parent=5 // pred_check
        _
      $region10: #{tpu_custom_call.1} parent=5 // pred_check_branch
        %176 = sbr.rel (%p173) target = $region12
      $region11: #{tpu_custom_call.1} parent=5 // pred_region
        %s177 = ssub.s32 %s18, 1
        // Predicated region
        $region13: #{tpu_custom_call.1} parent=11 // pred_check
          %p178 = pneg %p51
        $region14: #{tpu_custom_call.1} parent=11 // pred_check_branch
          %180 = sbr.rel (%p178) target = $region16
        $region15: #{tpu_custom_call.1} parent=11 // pred_region
          %s182 = ssub.s32 384, 384
          %183 = vsyncadd [#allocation5], %s182
          %s184 = sshll.u32 [#allocation4], 4
          %s185 = int_to_ptr.vmem [resolvable:$true] %s184
          %190 = dma.hbm_to_vmem [thread:$0]  %s1, 384, %s185, [#allocation5], 64, 64, 4
        $region16: #{tpu_custom_call.1} parent=11 // pred_fallthru
          _
        // Predicated region
        $region17: #{tpu_custom_call.1} parent=11 // pred_check
          %p191 = pneg %p72
        $region18: #{tpu_custom_call.1} parent=11 // pred_check_branch
          %193 = sbr.rel (%p191) target = $region20
        $region19: #{tpu_custom_call.1} parent=11 // pred_region
          %s195 = ssub.s32 6144, 6144
          %196 = vsyncadd [#allocation8], %s195
          %s197 = sshll.u32 [#allocation7], 4
          %s198 = int_to_ptr.vmem [resolvable:$true] %s197
          %203 = dma.hbm_to_vmem [thread:$0]  %s2, 6144, %s198, [#allocation8], 64, 64, 4
        $region20: #{tpu_custom_call.1} parent=11 // pred_fallthru
          _
        // Predicated region
        $region21: #{tpu_custom_call.1} parent=11 // pred_check
          %p204 = pneg %p93
        $region22: #{tpu_custom_call.1} parent=11 // pred_check_branch
          %206 = sbr.rel (%p204) target = $region24
        $region23: #{tpu_custom_call.1} parent=11 // pred_region
          %s208 = ssub.s32 96, 96
          %209 = vsyncadd [#allocation8], %s208
          %s210 = sshll.u32 [#allocation9], 4
          %s211 = int_to_ptr.vmem [resolvable:$true] %s210
          %216 = dma.hbm_to_vmem [thread:$0]  %s3, 96, %s211, [#allocation8], 16, 16, 1
        $region24: #{tpu_custom_call.1} parent=11 // pred_fallthru
          _
        // Predicated region
        $region25: #{tpu_custom_call.1} parent=11 // pred_check
          %p217 = pneg %p114
        $region26: #{tpu_custom_call.1} parent=11 // pred_check_branch
          %219 = sbr.rel (%p217) target = $region28
        $region27: #{tpu_custom_call.1} parent=11 // pred_region
          %s221 = ssub.s32 1024, 1024
          %222 = vsyncadd [#allocation11], %s221
          %s223 = sshll.u32 [#allocation10], 4
          %s224 = int_to_ptr.vmem [resolvable:$true] %s223
          %229 = dma.hbm_to_vmem [thread:$0]  %s4, 1024, %s224, [#allocation11], 64, 64, 4
        $region28: #{tpu_custom_call.1} parent=11 // pred_fallthru
          _
        // Predicated region
        $region29: #{tpu_custom_call.1} parent=11 // pred_check
          %p230 = pneg %p135
        $region30: #{tpu_custom_call.1} parent=11 // pred_check_branch
          %232 = sbr.rel (%p230) target = $region32
        $region31: #{tpu_custom_call.1} parent=11 // pred_region
          _
        $region32: #{tpu_custom_call.1} parent=11 // pred_fallthru
          _
      $region12: #{tpu_custom_call.1} parent=5 // pred_fallthru
        _
      %p233 = scmp.lt.s32.totalorder %s18, 4
      // Predicated region
      $region33: #{tpu_custom_call.1} parent=5 // pred_check
        %p234 = pneg %p233
      $region34: #{tpu_custom_call.1} parent=5 // pred_check_branch
        %236 = sbr.rel (%p234) target = $region36
      $region35: #{tpu_custom_call.1} parent=5 // pred_region
        _
      $region36: #{tpu_custom_call.1} parent=5 // pred_fallthru
        _
      %p237 = scmp.le.s32.totalorder 1, %s18
      %p238 = scmp.lt.s32.totalorder %s18, 5
      %p239 = pnand %p237, %p238
      %p240 = pneg %p239
      // Predicated region
      $region37: #{tpu_custom_call.1} parent=5 // pred_check
        _
      $region38: #{tpu_custom_call.1} parent=5 // pred_check_branch
        %242 = sbr.rel (%p239) target = $region40
      $region39: #{tpu_custom_call.1} parent=5 // pred_region
        %s243 = ssub.s32 %s18, 1
        // Predicated region
        $region41: #{tpu_custom_call.1} parent=39 // pred_check
          %p244 = pneg %p51
        $region42: #{tpu_custom_call.1} parent=39 // pred_check_branch
          %246 = sbr.rel (%p244) target = $region44
        $region43: #{tpu_custom_call.1} parent=39 // pred_region
          %247 = dma.done [#allocation5], 384
        $region44: #{tpu_custom_call.1} parent=39 // pred_fallthru
          _
        // Predicated region
        $region45: #{tpu_custom_call.1} parent=39 // pred_check
          %p248 = pneg %p72
        $region46: #{tpu_custom_call.1} parent=39 // pred_check_branch
          %250 = sbr.rel (%p248) target = $region48
        $region47: #{tpu_custom_call.1} parent=39 // pred_region
          %251 = dma.done [#allocation8], 6144
        $region48: #{tpu_custom_call.1} parent=39 // pred_fallthru
          _
        // Predicated region
        $region49: #{tpu_custom_call.1} parent=39 // pred_check
          %p252 = pneg %p93
        $region50: #{tpu_custom_call.1} parent=39 // pred_check_branch
          %254 = sbr.rel (%p252) target = $region52
        $region51: #{tpu_custom_call.1} parent=39 // pred_region
          %255 = dma.done [#allocation8], 96
        $region52: #{tpu_custom_call.1} parent=39 // pred_fallthru
          _
        // Predicated region
        $region53: #{tpu_custom_call.1} parent=39 // pred_check
          %p256 = pneg %p114
        $region54: #{tpu_custom_call.1} parent=39 // pred_check_branch
          %258 = sbr.rel (%p256) target = $region56
        $region55: #{tpu_custom_call.1} parent=39 // pred_region
          %259 = dma.done [#allocation11], 1024
        $region56: #{tpu_custom_call.1} parent=39 // pred_fallthru
          _
        %p260 = pneg %p51
        %p261 = pneg %p48
        %p262 = pneg %p72
        %p263 = pneg %p69
        %p264 = pneg %p93
        %p265 = pneg %p90
        %p266 = pneg %p114
        %p267 = pneg %p111
        %p268 = pneg %p135
        %p269 = pneg %p132
        %p270 = pneg %p163
        %p271 = pneg %p160
        %s272 = sand.u32 %s150, 1
        %s273 = scalar_lea.sflag [#allocation6], %s272
        %s274 = sand.u32 %s150, 1
        %s275 = smul.addr %s274, 8
        %s276 = scalar_lea.vmem [#allocation12], %s275
        %s277 = smul.u32 2, %s28
        %p279 = scmp.lt.s32.totalorder %s28, 0
        %s280 = ssub.s32 0, %s28
        %s281 = scalar_select %p279, %s280, %s28
        %s282 = sand.u32 %s281, 1
        %s283 = ssub.s32 0, %s282
        %s284 = scalar_select %p279, %s283, %s282
        %p285 = scmp.ne.s32.totalorder %s284, 0
        %p286 = scmp.lt.s32.totalorder %s284, 0
        %p287 = pnand %p286, %p285
        %p288 = pneg %p287
        %s289 = sadd.s32 %s284, 2
        %s290 = scalar_select %p288, %s289, %s284
        %p291 = scmp.eq.s32.totalorder %s28, 0
        // Predicated region
        $region57: #{tpu_custom_call.1} parent=39 // pred_check
          %p292 = pneg %p291
        $region58: #{tpu_custom_call.1} parent=39 // pred_check_branch
          %294 = sbr.rel (%p292) target = $region60
        $region59: #{tpu_custom_call.1} parent=39 // pred_region
          %s295 = smul.u32 %s28, 16
          %s296 = sshra.s32 %s295, 3
          %s297 = sand.u32 %s295, 7
          %s298 = smul.u32 %s27, 6
          %s299 = sadd.s32 %s296, %s298
          %s300 = smul.addr %s299, 64
          %s301 = scalar_lea.hbm %s0, %s300
          %s302 = smul.u32 %s290, 4
          %s303 = smul.addr %s302, 4
          %s304 = scalar_lea.vmem [#allocation2], %s303
          %s305 = scalar_lea.sflag [#allocation3], %s290
          // Predicated region
          $region61: #{tpu_custom_call.1} parent=59 // pred_check
            _
          $region62: #{tpu_custom_call.1} parent=59 // pred_check_branch
            %307 = sbr.rel target = $region64
          $region63: #{tpu_custom_call.1} parent=59 // pred_region
            %308 = sst [smem:[#allocation15]] [#allocation14]
            %309 = sst [smem:[#allocation16]] [#allocation13]
          $region64: #{tpu_custom_call.1} parent=59 // pred_fallthru
            _
          %311 = shalt.err (0)
          %s313 = sshll.u32 %s304, 4
          %s314 = int_to_ptr.vmem [resolvable:$true] %s313
          %316 = dma.hbm_to_vmem [thread:$0]  %s301, 256, %s314, %s305
        $region60: #{tpu_custom_call.1} parent=39 // pred_fallthru
          _
        %v317 = vlaneseq
        %v318 = vshrl.u32 %v317, 7
        %v319 = vadd.s32 %v318, 8
        %v320 = vadd.s32 %v318, 16
        %v321 = vadd.s32 %v318, 24
        %s322 = smul.u32 %s28, 16
        %s323 = ssub.s32 %s322, 8
        %v324 = vstv %s323
        %v325 = vadd.s32 %v318, %v324
        %v326 = vadd.s32 %v319, %v324
        %v327 = vadd.s32 %v320, %v324
        %v328 = vadd.s32 %v321, %v324
        %vm329 = vcmp.ge.s32.totalorder %v325, 0
        %vm330 = vcmp.ge.s32.totalorder %v326, 0
        %vm331 = vcmp.ge.s32.totalorder %v327, 0
        %vm332 = vcmp.ge.s32.totalorder %v328, 0
        %vm333 = vcmp.lt.s32.totalorder %v325, 32
        %vm334 = vcmp.lt.s32.totalorder %v326, 32
        %vm335 = vcmp.lt.s32.totalorder %v327, 32
        %vm336 = vcmp.lt.s32.totalorder %v328, 32
        %vm337 = vmand %vm329, %vm333
        %vm338 = vmand %vm330, %vm334
        %vm339 = vmand %vm331, %vm335
        %vm340 = vmand %vm332, %vm336
        %s341 = smul.u32 %s290, 4
        %s342 = smul.addr %s341, 4
        %s343 = scalar_lea.vmem [#allocation2], %s342
        %s344 = scalar_lea.sflag [#allocation3], %s290
        %s345 = smul.u32 4, 1
        %s346 = smul.u32 %s345, 4
        %s347 = smul.u32 %s346, 1
        %s348 = sshll.u32 %s347, 4
        %349 = dma.done %s344, %s348
        %s350 = sadd.s32 %s28, 1
        %p351 = scmp.lt.s32.totalorder %s350, 2
        // Predicated region
        $region65: #{tpu_custom_call.1} parent=39 // pred_check
          %p352 = pneg %p351
        $region66: #{tpu_custom_call.1} parent=39 // pred_check_branch
          %354 = sbr.rel (%p352) target = $region68
        $region67: #{tpu_custom_call.1} parent=39 // pred_region
          %s355 = ssub.s32 1, %s290
          %s356 = smul.u32 %s350, 16
          %s357 = sshra.s32 %s356, 3
          %s358 = sand.u32 %s356, 7
          %s359 = smul.u32 %s27, 6
          %s360 = sadd.s32 %s357, %s359
          %s361 = smul.addr %s360, 64
          %s362 = scalar_lea.hbm %s0, %s361
          %s363 = smul.u32 %s355, 4
          %s364 = smul.addr %s363, 4
          %s365 = scalar_lea.vmem [#allocation2], %s364
          %s366 = scalar_lea.sflag [#allocation3], %s355
          // Predicated region
          $region69: #{tpu_custom_call.1} parent=67 // pred_check
            _
          $region70: #{tpu_custom_call.1} parent=67 // pred_check_branch
            %368 = sbr.rel target = $region72
          $region71: #{tpu_custom_call.1} parent=67 // pred_region
            %369 = sst [smem:[#allocation15]] [#allocation18]
            %370 = sst [smem:[#allocation16]] [#allocation17]
          $region72: #{tpu_custom_call.1} parent=67 // pred_fallthru
            _
          %372 = shalt.err (0)
          %s374 = sshll.u32 %s365, 4
          %s375 = int_to_ptr.vmem [resolvable:$true] %s374
          %377 = dma.hbm_to_vmem [thread:$0]  %s362, 256, %s375, %s366
        $region68: #{tpu_custom_call.1} parent=39 // pred_fallthru
          _
        %v378 = vld [vmem:[%s343] sm:$0xf]
        %v379 = vld [vmem:[%s343 + $0x4] sm:$0xf]
        %v380 = vld [vmem:[%s343 + $0x8] sm:$0xf]
        %v381 = vld [vmem:[%s343 + $0xc] sm:$0xf]
        %v382 = vld [vmem:[#allocation10] sm:$0xf]
        %v383 = vld [vmem:[#allocation10 + $0x4] sm:$0xf]
        %v384 = vld [vmem:[#allocation10 + $0x8] sm:$0xf]
        %v385 = vld [vmem:[#allocation10 + $0xc] sm:$0xf]
        %v386 = vld [vmem:[#allocation10 + $0x10] sm:$0xf]
        %v387 = vld [vmem:[#allocation10 + $0x14] sm:$0xf]
        %v388 = vld [vmem:[#allocation10 + $0x18] sm:$0xf]
        %v389 = vld [vmem:[#allocation10 + $0x1c] sm:$0xf]
        %v390 = vld [vmem:[#allocation10 + $0x20] sm:$0xf]
        %v391 = vld [vmem:[#allocation10 + $0x24] sm:$0xf]
        %v392 = vld [vmem:[#allocation10 + $0x28] sm:$0xf]
        %v393 = vld [vmem:[#allocation10 + $0x2c] sm:$0xf]
        %v394 = vld [vmem:[#allocation10 + $0x30] sm:$0xf]
        %v395 = vld [vmem:[#allocation10 + $0x34] sm:$0xf]
        %v396 = vld [vmem:[#allocation10 + $0x38] sm:$0xf]
        %v397 = vld [vmem:[#allocation10 + $0x3c] sm:$0xf]
        %v398 = vld [vmem:[%s5] sm:$0x1]
        %v400 = vlaneseq
        %v401 = vshrl.u32 %v400, 7
        %v402 = vsub.s32 0, %v401
        %v403 = vrot.slane %v398, %v402
        %v407 = vunpack.c.l.b16 %v379
        %v408 = vunpack.c.l.b16 %v380
        %v409 = vpack.c.b16 %v408, %v407
        %v427 = vunpack.c.l.b16 %v382
        %v428 = vunpack.c.l.b16 %v383
        %v429 = vunpack.c.l.b16 %v384
        %v430 = vunpack.c.l.b16 %v385
        %v431 = vunpack.c.l.b16 %v386
        %v432 = vunpack.c.l.b16 %v387
        %v433 = vunpack.c.l.b16 %v388
        %v434 = vunpack.c.l.b16 %v389
        %v435 = vunpack.c.l.b16 %v390
        %v436 = vunpack.c.l.b16 %v391
        %v437 = vunpack.c.l.b16 %v392
        %v438 = vunpack.c.l.b16 %v393
        %v439 = vunpack.c.l.b16 %v394
        %v440 = vunpack.c.l.b16 %v395
        %v441 = vunpack.c.l.b16 %v396
        %v442 = vunpack.c.l.b16 %v397
        %v443 = vpack.c.b16 %v428, %v427
        %v444 = vpack.c.b16 %v430, %v429
        %v445 = vpack.c.b16 %v432, %v431
        %v446 = vpack.c.b16 %v434, %v433
        %v447 = vpack.c.b16 %v436, %v435
        %v448 = vpack.c.b16 %v438, %v437
        %v449 = vpack.c.b16 %v440, %v439
        %v450 = vpack.c.b16 %v442, %v441
        %459 = vmatprep.subr.bf16.mxu0 0
        %460 = vmatpush1.bf16.msra.mxu0 %v450
        %461 = vmatprep.subr.bf16.mxu0 0
        %462 = vmatpush1.bf16.msra.mxu0 %v449
        %463 = vmatprep.subr.bf16.mxu0 0
        %464 = vmatpush1.bf16.msra.mxu0 %v448
        %465 = vmatprep.subr.bf16.mxu0 0
        %466 = vmatpush1.bf16.msra.mxu0 %v447
        %467 = vmatprep.subr.bf16.mxu0 0
        %468 = vmatpush1.bf16.msra.mxu0 %v446
        %469 = vmatprep.subr.bf16.mxu0 0
        %470 = vmatpush1.bf16.msra.mxu0 %v445
        %471 = vmatprep.subr.bf16.mxu0 0
        %472 = vmatpush1.bf16.msra.mxu0 %v444
        %473 = vmatprep.subr.bf16.mxu0 0
        %474 = vmatpush1.bf16.msra.mxu0 %v443
        %475 = vmatprep.subr.bf16.mxu0 0
        %476 = vmatpush2.bf16.msra.mxu0 0
        %477 = vmatprep.subr.bf16.mxu0 0
        %478 = vmatpush2.bf16.msra.mxu0 0
        %479 = vmatprep.subr.bf16.mxu0 0
        %480 = vmatpush2.bf16.msra.mxu0 0
        %481 = vmatprep.subr.bf16.mxu0 0
        %482 = vmatpush2.bf16.msra.mxu0 0
        %483 = vmatprep.subr.bf16.mxu0 0
        %484 = vmatpush2.bf16.msra.mxu0 0
        %485 = vmatprep.subr.bf16.mxu0 0
        %486 = vmatpush2.bf16.msra.mxu0 0
        %487 = vmatprep.subr.bf16.mxu0 0
        %488 = vmatpush2.bf16.msra.mxu0 0
        %489 = vmatprep.subr.bf16.mxu0 0
        %490 = vmatpush2.bf16.msra.mxu0 0
        %491 = vmatprep.mubr.bf16.mxu0 0
        %492 = vmatmul.mubr.bf16.gmra.mxu0 %v409
        %v493 = vpop.f32.mrf.mxu0
        %v494 = vadd.f32 %v403, %v493
        %v495 = vpop.f32.mrf.mxu0
        %v496 = vpop.f32.mrf.mxu0
        %v497 = vadd.f32 %v403, %v496
        %v498 = vpop.f32.mrf.mxu0
        %499 = vdwg.mxu0
        %v500 = vunpack.c.l.bf16 %v378
        %v501 = vunpack.c.l.bf16 %v379
        %v502 = vunpack.c.l.bf16 %v380
        %v503 = vunpack.c.l.bf16 %v381
        %v504 = vld [vmem:[#allocation4] sm:$0x7]
        %v505 = vlaneseq
        %v506 = vshrl.u32 %v505, 7
        %v507 = vsub.s32 1, %v506
        %v508 = vrot.slane %v504, %v507
        %v509 = vmul.f32 %v500, %v508
        %v510 = vmul.f32 %v501, %v508
        %v511 = vmul.f32 %v502, %v508
        %v512 = vmul.f32 %v503, %v508
        %v513 = vrot.slane %v500, 7
        %v514 = vrot.slane %v501, 7
        %v515 = vrot.slane %v502, 7
        %v516 = vrot.slane %v503, 7
        %vm517 = vcmp.lt.s32.totalorder %v318, 1
        %v518 = vsel %vm517, %v515, %v516
        %v519 = vsel %vm517, %v514, %v515
        %v520 = vsel %vm517, %v513, %v514
        %v521 = vsel %vm517, %v516, %v513
        %v522 = vlaneseq
        %v523 = vshrl.u32 %v522, 7
        %v524 = vsub.s32 0, %v523
        %v525 = vrot.slane %v504, %v524
        %v526 = vmul.f32 %v521, %v525
        %v527 = vmul.f32 %v520, %v525
        %v528 = vmul.f32 %v519, %v525
        %v529 = vmul.f32 %v518, %v525
        %v530 = vadd.f32 %v509, %v526
        %v531 = vadd.f32 %v510, %v527
        %v532 = vadd.f32 %v511, %v528
        %v533 = vadd.f32 %v512, %v529
        %v534 = vrot.slane %v500, 1
        %v535 = vrot.slane %v501, 1
        %v536 = vrot.slane %v502, 1
        %v537 = vrot.slane %v503, 1
        %vm538 = vcmp.lt.s32.totalorder %v318, 7
        %v539 = vsel %vm538, %v536, %v537
        %v540 = vsel %vm538, %v535, %v536
        %v541 = vsel %vm538, %v534, %v535
        %v542 = vsel %vm538, %v537, %v534
        %v543 = vlaneseq
        %v544 = vshrl.u32 %v543, 7
        %v545 = vsub.s32 2, %v544
        %v546 = vrot.slane %v504, %v545
        %v547 = vmul.f32 %v541, %v546
        %v548 = vmul.f32 %v540, %v546
        %v549 = vmul.f32 %v539, %v546
        %v550 = vmul.f32 %v542, %v546
        %v551 = vadd.f32 %v530, %v547
        %v552 = vadd.f32 %v531, %v548
        %v553 = vadd.f32 %v532, %v549
        %v554 = vadd.f32 %v533, %v550
        %v555 = vpack.c.bf16 %v552, %v551
        %v556 = vpack.c.bf16 %v554, %v553
        %v557 = vld [vmem:[#allocation7] sm:$0xf]
        %v558 = vld [vmem:[#allocation7 + $0x4] sm:$0xf]
        %v559 = vld [vmem:[#allocation7 + $0x8] sm:$0xf]
        %v560 = vld [vmem:[#allocation7 + $0xc] sm:$0xf]
        %v561 = vld [vmem:[#allocation7 + $0x10] sm:$0xf]
        %v562 = vld [vmem:[#allocation7 + $0x14] sm:$0xf]
        %v563 = vld [vmem:[#allocation7 + $0x18] sm:$0xf]
        %v564 = vld [vmem:[#allocation7 + $0x1c] sm:$0xf]
        %v565 = vld [vmem:[#allocation7 + $0x20] sm:$0xf]
        %v566 = vld [vmem:[#allocation7 + $0x24] sm:$0xf]
        %v567 = vld [vmem:[#allocation7 + $0x28] sm:$0xf]
        %v568 = vld [vmem:[#allocation7 + $0x2c] sm:$0xf]
        %v569 = vld [vmem:[#allocation7 + $0x30] sm:$0xf]
        %v570 = vld [vmem:[#allocation7 + $0x34] sm:$0xf]
        %v571 = vld [vmem:[#allocation7 + $0x38] sm:$0xf]
        %v572 = vld [vmem:[#allocation7 + $0x3c] sm:$0xf]
        %v573 = vld [vmem:[#allocation9] sm:$0x1]
        %v575 = vlaneseq
        %v576 = vshrl.u32 %v575, 7
        %v577 = vsub.s32 0, %v576
        %v578 = vrot.slane %v573, %v577
        %v596 = vunpack.c.l.b16 %v557
        %v597 = vunpack.c.l.b16 %v558
        %v598 = vunpack.c.l.b16 %v559
        %v599 = vunpack.c.l.b16 %v560
        %v600 = vunpack.c.l.b16 %v561
        %v601 = vunpack.c.l.b16 %v562
        %v602 = vunpack.c.l.b16 %v563
        %v603 = vunpack.c.l.b16 %v564
        %v604 = vunpack.c.l.b16 %v565
        %v605 = vunpack.c.l.b16 %v566
        %v606 = vunpack.c.l.b16 %v567
        %v607 = vunpack.c.l.b16 %v568
        %v608 = vunpack.c.l.b16 %v569
        %v609 = vunpack.c.l.b16 %v570
        %v610 = vunpack.c.l.b16 %v571
        %v611 = vunpack.c.l.b16 %v572
        %v612 = vpack.c.b16 %v597, %v596
        %v613 = vpack.c.b16 %v599, %v598
        %v614 = vpack.c.b16 %v601, %v600
        %v615 = vpack.c.b16 %v603, %v602
        %v616 = vpack.c.b16 %v605, %v604
        %v617 = vpack.c.b16 %v607, %v606
        %v618 = vpack.c.b16 %v609, %v608
        %v619 = vpack.c.b16 %v611, %v610
        %628 = vmatprep.subr.bf16.mxu0 0
        %629 = vmatpush1.bf16.msra.mxu0 %v619
        %630 = vmatprep.subr.bf16.mxu0 0
        %631 = vmatpush1.bf16.msra.mxu0 %v618
        %632 = vmatprep.subr.bf16.mxu0 0
        %633 = vmatpush1.bf16.msra.mxu0 %v617
        %634 = vmatprep.subr.bf16.mxu0 0
        %635 = vmatpush1.bf16.msra.mxu0 %v616
        %636 = vmatprep.subr.bf16.mxu0 0
        %637 = vmatpush1.bf16.msra.mxu0 %v615
        %638 = vmatprep.subr.bf16.mxu0 0
        %639 = vmatpush1.bf16.msra.mxu0 %v614
        %640 = vmatprep.subr.bf16.mxu0 0
        %641 = vmatpush1.bf16.msra.mxu0 %v613
        %642 = vmatprep.subr.bf16.mxu0 0
        %643 = vmatpush1.bf16.msra.mxu0 %v612
        %644 = vmatprep.subr.bf16.mxu0 0
        %645 = vmatpush2.bf16.msra.mxu0 0
        %646 = vmatprep.subr.bf16.mxu0 0
        %647 = vmatpush2.bf16.msra.mxu0 0
        %648 = vmatprep.subr.bf16.mxu0 0
        %649 = vmatpush2.bf16.msra.mxu0 0
        %650 = vmatprep.subr.bf16.mxu0 0
        %651 = vmatpush2.bf16.msra.mxu0 0
        %652 = vmatprep.subr.bf16.mxu0 0
        %653 = vmatpush2.bf16.msra.mxu0 0
        %654 = vmatprep.subr.bf16.mxu0 0
        %655 = vmatpush2.bf16.msra.mxu0 0
        %656 = vmatprep.subr.bf16.mxu0 0
        %657 = vmatpush2.bf16.msra.mxu0 0
        %658 = vmatprep.subr.bf16.mxu0 0
        %659 = vmatpush2.bf16.msra.mxu0 0
        %660 = vmatprep.mubr.bf16.mxu0 0
        %661 = vmatmul.mubr.bf16.gmra.mxu0 %v555
        %v662 = vpop.f32.mrf.mxu0
        %v663 = vadd.f32 %v578, %v662
        %v664 = vpop.f32.mrf.mxu0
        %v665 = vpop.f32.mrf.mxu0
        %v666 = vadd.f32 %v578, %v665
        %v667 = vpop.f32.mrf.mxu0
        %668 = vmatprep.mubr.bf16.mxu0 0
        %669 = vmatmul.mubr.bf16.gmra.mxu0 %v556
        %v670 = vpop.f32.mrf.mxu0
        %v671 = vadd.f32 %v578, %v670
        %v672 = vpop.f32.mrf.mxu0
        %v673 = vpop.f32.mrf.mxu0
        %v674 = vadd.f32 %v578, %v673
        %v675 = vpop.f32.mrf.mxu0
        %676 = vdwg.mxu0
        %v677 = vmin.f32 %v663, 20.0
        %v678 = vmin.f32 %v666, 20.0
        %v679 = vmin.f32 %v671, 20.0
        %v680 = vmin.f32 %v674, 20.0
        %v681 = vmul.f32 %v677, 1.442695
        %v682 = vpow.pop %v681
        %v683 = vmul.f32 %v678, 1.442695
        %v684 = vpow.pop %v683
        %v685 = vmul.f32 %v679, 1.442695
        %v686 = vpow.pop %v685
        %v687 = vmul.f32 %v680, 1.442695
        %v688 = vpow.pop %v687
        %v689 = vadd.f32 %v682, 2.0
        %v690 = vadd.f32 %v684, 2.0
        %v691 = vadd.f32 %v686, 2.0
        %v692 = vadd.f32 %v688, 2.0
        %v693 = vmul.f32 %v682, %v689
        %v694 = vmul.f32 %v684, %v690
        %v695 = vmul.f32 %v686, %v691
        %v696 = vmul.f32 %v688, %v692
        %v697 = vmul.f32 %v663, %v693
        %v698 = vmul.f32 %v666, %v694
        %v699 = vmul.f32 %v671, %v695
        %v700 = vmul.f32 %v674, %v696
        %v701 = vadd.f32 %v693, 2.0
        %v702 = vadd.f32 %v694, 2.0
        %v703 = vadd.f32 %v695, 2.0
        %v704 = vadd.f32 %v696, 2.0
        %v705 = vrcp.pop %v701
        %v706 = vrcp.pop %v702
        %v707 = vrcp.pop %v703
        %v708 = vrcp.pop %v704
        %v709 = vmul.f32 %v697, %v705
        %v710 = vmul.f32 %v698, %v706
        %v711 = vmul.f32 %v699, %v707
        %v712 = vmul.f32 %v700, %v708
        %vm713 = vcmp.gt.f32.partialorder %v663, 20.0
        %vm714 = vcmp.gt.f32.partialorder %v666, 20.0
        %vm715 = vcmp.gt.f32.partialorder %v671, 20.0
        %vm716 = vcmp.gt.f32.partialorder %v674, 20.0
        %v717 = vsel %vm713, %v663, %v709
        %v718 = vsel %vm714, %v666, %v710
        %v719 = vsel %vm715, %v671, %v711
        %v720 = vsel %vm716, %v674, %v712
        %v721 = vsel %vm337, 1, 0
        %v722 = vsel %vm338, 1, 0
        %v723 = vsel %vm339, 1, 0
        %v724 = vsel %vm340, 1, 0
        %vm725 = vcmp.eq.s32.totalorder %v721, 1
        %vm726 = vcmp.eq.s32.totalorder %v722, 1
        %vm727 = vcmp.eq.s32.totalorder %v723, 1
        %vm728 = vcmp.eq.s32.totalorder %v724, 1
        %v729 = vsel %vm725, %v717, 0.0
        %v730 = vsel %vm726, %v718, 0.0
        %v731 = vsel %vm727, %v719, 0.0
        %v732 = vsel %vm728, %v720, 0.0
        %s733 = scalar_lea.vmem [#allocation4], 4
        %v734 = vld [vmem:[%s733] sm:$0x7]
        %v735 = vlaneseq
        %v736 = vshrl.u32 %v735, 7
        %v737 = vsub.s32 1, %v736
        %v738 = vrot.slane %v734, %v737
        %v739 = vmul.f32 %v729, %v738
        %v740 = vmul.f32 %v730, %v738
        %v741 = vmul.f32 %v731, %v738
        %v742 = vmul.f32 %v732, %v738
        %v743 = vrot.slane %v729, 7
        %v744 = vrot.slane %v730, 7
        %v745 = vrot.slane %v731, 7
        %v746 = vrot.slane %v732, 7
        %v747 = vsel %vm517, %v745, %v746
        %v748 = vsel %vm517, %v744, %v745
        %v749 = vsel %vm517, %v743, %v744
        %v750 = vsel %vm517, %v746, %v743
        %v751 = vlaneseq
        %v752 = vshrl.u32 %v751, 7
        %v753 = vsub.s32 0, %v752
        %v754 = vrot.slane %v734, %v753
        %v755 = vmul.f32 %v750, %v754
        %v756 = vmul.f32 %v749, %v754
        %v757 = vmul.f32 %v748, %v754
        %v758 = vmul.f32 %v747, %v754
        %v759 = vadd.f32 %v739, %v755
        %v760 = vadd.f32 %v740, %v756
        %v761 = vadd.f32 %v741, %v757
        %v762 = vadd.f32 %v742, %v758
        %v763 = vrot.slane %v729, 1
        %v764 = vrot.slane %v730, 1
        %v765 = vrot.slane %v731, 1
        %v766 = vrot.slane %v732, 1
        %v767 = vsel %vm538, %v765, %v766
        %v768 = vsel %vm538, %v764, %v765
        %v769 = vsel %vm538, %v763, %v764
        %v770 = vsel %vm538, %v766, %v763
        %v771 = vlaneseq
        %v772 = vshrl.u32 %v771, 7
        %v773 = vsub.s32 2, %v772
        %v774 = vrot.slane %v734, %v773
        %v775 = vmul.f32 %v769, %v774
        %v776 = vmul.f32 %v768, %v774
        %v777 = vmul.f32 %v767, %v774
        %v778 = vmul.f32 %v770, %v774
        %v779 = vadd.f32 %v759, %v775
        %v780 = vadd.f32 %v760, %v776
        %v781 = vadd.f32 %v761, %v777
        %v782 = vadd.f32 %v762, %v778
        %v783 = vpack.c.bf16 %v780, %v779
        %v784 = vpack.c.bf16 %v782, %v781
        %s785 = scalar_lea.vmem [#allocation7], 64
        %v786 = vld [vmem:[%s785] sm:$0xf]
        %v787 = vld [vmem:[%s785 + $0x4] sm:$0xf]
        %v788 = vld [vmem:[%s785 + $0x8] sm:$0xf]
        %v789 = vld [vmem:[%s785 + $0xc] sm:$0xf]
        %v790 = vld [vmem:[%s785 + $0x10] sm:$0xf]
        %v791 = vld [vmem:[%s785 + $0x14] sm:$0xf]
        %v792 = vld [vmem:[%s785 + $0x18] sm:$0xf]
        %v793 = vld [vmem:[%s785 + $0x1c] sm:$0xf]
        %v794 = vld [vmem:[%s785 + $0x20] sm:$0xf]
        %v795 = vld [vmem:[%s785 + $0x24] sm:$0xf]
        %v796 = vld [vmem:[%s785 + $0x28] sm:$0xf]
        %v797 = vld [vmem:[%s785 + $0x2c] sm:$0xf]
        %v798 = vld [vmem:[%s785 + $0x30] sm:$0xf]
        %v799 = vld [vmem:[%s785 + $0x34] sm:$0xf]
        %v800 = vld [vmem:[%s785 + $0x38] sm:$0xf]
        %v801 = vld [vmem:[%s785 + $0x3c] sm:$0xf]
        %s802 = scalar_lea.vmem [#allocation9], 1
        %v803 = vld [vmem:[%s802] sm:$0x1]
        %v805 = vlaneseq
        %v806 = vshrl.u32 %v805, 7
        %v807 = vsub.s32 0, %v806
        %v808 = vrot.slane %v803, %v807
        %v826 = vunpack.c.l.b16 %v786
        %v827 = vunpack.c.l.b16 %v787
        %v828 = vunpack.c.l.b16 %v788
        %v829 = vunpack.c.l.b16 %v789
        %v830 = vunpack.c.l.b16 %v790
        %v831 = vunpack.c.l.b16 %v791
        %v832 = vunpack.c.l.b16 %v792
        %v833 = vunpack.c.l.b16 %v793
        %v834 = vunpack.c.l.b16 %v794
        %v835 = vunpack.c.l.b16 %v795
        %v836 = vunpack.c.l.b16 %v796
        %v837 = vunpack.c.l.b16 %v797
        %v838 = vunpack.c.l.b16 %v798
        %v839 = vunpack.c.l.b16 %v799
        %v840 = vunpack.c.l.b16 %v800
        %v841 = vunpack.c.l.b16 %v801
        %v842 = vpack.c.b16 %v827, %v826
        %v843 = vpack.c.b16 %v829, %v828
        %v844 = vpack.c.b16 %v831, %v830
        %v845 = vpack.c.b16 %v833, %v832
        %v846 = vpack.c.b16 %v835, %v834
        %v847 = vpack.c.b16 %v837, %v836
        %v848 = vpack.c.b16 %v839, %v838
        %v849 = vpack.c.b16 %v841, %v840
        %858 = vmatprep.subr.bf16.mxu0 0
        %859 = vmatpush1.bf16.msra.mxu0 %v849
        %860 = vmatprep.subr.bf16.mxu0 0
        %861 = vmatpush1.bf16.msra.mxu0 %v848
        %862 = vmatprep.subr.bf16.mxu0 0
        %863 = vmatpush1.bf16.msra.mxu0 %v847
        %864 = vmatprep.subr.bf16.mxu0 0
        %865 = vmatpush1.bf16.msra.mxu0 %v846
        %866 = vmatprep.subr.bf16.mxu0 0
        %867 = vmatpush1.bf16.msra.mxu0 %v845
        %868 = vmatprep.subr.bf16.mxu0 0
        %869 = vmatpush1.bf16.msra.mxu0 %v844
        %870 = vmatprep.subr.bf16.mxu0 0
        %871 = vmatpush1.bf16.msra.mxu0 %v843
        %872 = vmatprep.subr.bf16.mxu0 0
        %873 = vmatpush1.bf16.msra.mxu0 %v842
        %874 = vmatprep.subr.bf16.mxu0 0
        %875 = vmatpush2.bf16.msra.mxu0 0
        %876 = vmatprep.subr.bf16.mxu0 0
        %877 = vmatpush2.bf16.msra.mxu0 0
        %878 = vmatprep.subr.bf16.mxu0 0
        %879 = vmatpush2.bf16.msra.mxu0 0
        %880 = vmatprep.subr.bf16.mxu0 0
        %881 = vmatpush2.bf16.msra.mxu0 0
        %882 = vmatprep.subr.bf16.mxu0 0
        %883 = vmatpush2.bf16.msra.mxu0 0
        %884 = vmatprep.subr.bf16.mxu0 0
        %885 = vmatpush2.bf16.msra.mxu0 0
        %886 = vmatprep.subr.bf16.mxu0 0
        %887 = vmatpush2.bf16.msra.mxu0 0
        %888 = vmatprep.subr.bf16.mxu0 0
        %889 = vmatpush2.bf16.msra.mxu0 0
        %890 = vmatprep.mubr.bf16.mxu0 0
        %891 = vmatmul.mubr.bf16.gmra.mxu0 %v783
        %v892 = vpop.f32.mrf.mxu0
        %v893 = vadd.f32 %v808, %v892
        %v894 = vpop.f32.mrf.mxu0
        %v895 = vpop.f32.mrf.mxu0
        %v896 = vadd.f32 %v808, %v895
        %v897 = vpop.f32.mrf.mxu0
        %898 = vmatprep.mubr.bf16.mxu0 0
        %899 = vmatmul.mubr.bf16.gmra.mxu0 %v784
        %v900 = vpop.f32.mrf.mxu0
        %v901 = vadd.f32 %v808, %v900
        %v902 = vpop.f32.mrf.mxu0
        %v903 = vpop.f32.mrf.mxu0
        %v904 = vadd.f32 %v808, %v903
        %v905 = vpop.f32.mrf.mxu0
        %906 = vdwg.mxu0
        %v907 = vmin.f32 %v893, 20.0
        %v908 = vmin.f32 %v896, 20.0
        %v909 = vmin.f32 %v901, 20.0
        %v910 = vmin.f32 %v904, 20.0
        %v911 = vmul.f32 %v907, 1.442695
        %v912 = vpow.pop %v911
        %v913 = vmul.f32 %v908, 1.442695
        %v914 = vpow.pop %v913
        %v915 = vmul.f32 %v909, 1.442695
        %v916 = vpow.pop %v915
        %v917 = vmul.f32 %v910, 1.442695
        %v918 = vpow.pop %v917
        %v919 = vadd.f32 %v912, 2.0
        %v920 = vadd.f32 %v914, 2.0
        %v921 = vadd.f32 %v916, 2.0
        %v922 = vadd.f32 %v918, 2.0
        %v923 = vmul.f32 %v912, %v919
        %v924 = vmul.f32 %v914, %v920
        %v925 = vmul.f32 %v916, %v921
        %v926 = vmul.f32 %v918, %v922
        %v927 = vmul.f32 %v893, %v923
        %v928 = vmul.f32 %v896, %v924
        %v929 = vmul.f32 %v901, %v925
        %v930 = vmul.f32 %v904, %v926
        %v931 = vadd.f32 %v923, 2.0
        %v932 = vadd.f32 %v924, 2.0
        %v933 = vadd.f32 %v925, 2.0
        %v934 = vadd.f32 %v926, 2.0
        %v935 = vrcp.pop %v931
        %v936 = vrcp.pop %v932
        %v937 = vrcp.pop %v933
        %v938 = vrcp.pop %v934
        %v939 = vmul.f32 %v927, %v935
        %v940 = vmul.f32 %v928, %v936
        %v941 = vmul.f32 %v929, %v937
        %v942 = vmul.f32 %v930, %v938
        %vm943 = vcmp.gt.f32.partialorder %v893, 20.0
        %vm944 = vcmp.gt.f32.partialorder %v896, 20.0
        %vm945 = vcmp.gt.f32.partialorder %v901, 20.0
        %vm946 = vcmp.gt.f32.partialorder %v904, 20.0
        %v947 = vsel %vm943, %v893, %v939
        %v948 = vsel %vm944, %v896, %v940
        %v949 = vsel %vm945, %v901, %v941
        %v950 = vsel %vm946, %v904, %v942
        %v951 = vsel %vm725, %v947, 0.0
        %v952 = vsel %vm726, %v948, 0.0
        %v953 = vsel %vm727, %v949, 0.0
        %v954 = vsel %vm728, %v950, 0.0
        %s955 = scalar_lea.vmem [#allocation4], 8
        %v956 = vld [vmem:[%s955] sm:$0x7]
        %v957 = vlaneseq
        %v958 = vshrl.u32 %v957, 7
        %v959 = vsub.s32 1, %v958
        %v960 = vrot.slane %v956, %v959
        %v961 = vmul.f32 %v951, %v960
        %v962 = vmul.f32 %v952, %v960
        %v963 = vmul.f32 %v953, %v960
        %v964 = vmul.f32 %v954, %v960
        %v965 = vrot.slane %v951, 7
        %v966 = vrot.slane %v952, 7
        %v967 = vrot.slane %v953, 7
        %v968 = vrot.slane %v954, 7
        %v969 = vsel %vm517, %v967, %v968
        %v970 = vsel %vm517, %v966, %v967
        %v971 = vsel %vm517, %v965, %v966
        %v972 = vsel %vm517, %v968, %v965
        %v973 = vlaneseq
        %v974 = vshrl.u32 %v973, 7
        %v975 = vsub.s32 0, %v974
        %v976 = vrot.slane %v956, %v975
        %v977 = vmul.f32 %v972, %v976
        %v978 = vmul.f32 %v971, %v976
        %v979 = vmul.f32 %v970, %v976
        %v980 = vmul.f32 %v969, %v976
        %v981 = vadd.f32 %v961, %v977
        %v982 = vadd.f32 %v962, %v978
        %v983 = vadd.f32 %v963, %v979
        %v984 = vadd.f32 %v964, %v980
        %v985 = vrot.slane %v951, 1
        %v986 = vrot.slane %v952, 1
        %v987 = vrot.slane %v953, 1
        %v988 = vrot.slane %v954, 1
        %v989 = vsel %vm538, %v987, %v988
        %v990 = vsel %vm538, %v986, %v987
        %v991 = vsel %vm538, %v985, %v986
        %v992 = vsel %vm538, %v988, %v985
        %v993 = vlaneseq
        %v994 = vshrl.u32 %v993, 7
        %v995 = vsub.s32 2, %v994
        %v996 = vrot.slane %v956, %v995
        %v997 = vmul.f32 %v991, %v996
        %v998 = vmul.f32 %v990, %v996
        %v999 = vmul.f32 %v989, %v996
        %v1000 = vmul.f32 %v992, %v996
        %v1001 = vadd.f32 %v981, %v997
        %v1002 = vadd.f32 %v982, %v998
        %v1003 = vadd.f32 %v983, %v999
        %v1004 = vadd.f32 %v984, %v1000
        %v1005 = vpack.c.bf16 %v1002, %v1001
        %v1006 = vpack.c.bf16 %v1004, %v1003
        %s1007 = scalar_lea.vmem [#allocation7], 128
        %v1008 = vld [vmem:[%s1007] sm:$0xf]
        %v1009 = vld [vmem:[%s1007 + $0x4] sm:$0xf]
        %v1010 = vld [vmem:[%s1007 + $0x8] sm:$0xf]
        %v1011 = vld [vmem:[%s1007 + $0xc] sm:$0xf]
        %v1012 = vld [vmem:[%s1007 + $0x10] sm:$0xf]
        %v1013 = vld [vmem:[%s1007 + $0x14] sm:$0xf]
        %v1014 = vld [vmem:[%s1007 + $0x18] sm:$0xf]
        %v1015 = vld [vmem:[%s1007 + $0x1c] sm:$0xf]
        %v1016 = vld [vmem:[%s1007 + $0x20] sm:$0xf]
        %v1017 = vld [vmem:[%s1007 + $0x24] sm:$0xf]
        %v1018 = vld [vmem:[%s1007 + $0x28] sm:$0xf]
        %v1019 = vld [vmem:[%s1007 + $0x2c] sm:$0xf]
        %v1020 = vld [vmem:[%s1007 + $0x30] sm:$0xf]
        %v1021 = vld [vmem:[%s1007 + $0x34] sm:$0xf]
        %v1022 = vld [vmem:[%s1007 + $0x38] sm:$0xf]
        %v1023 = vld [vmem:[%s1007 + $0x3c] sm:$0xf]
        %s1024 = scalar_lea.vmem [#allocation9], 2
        %v1025 = vld [vmem:[%s1024] sm:$0x1]
        %v1027 = vlaneseq
        %v1028 = vshrl.u32 %v1027, 7
        %v1029 = vsub.s32 0, %v1028
        %v1030 = vrot.slane %v1025, %v1029
        %v1048 = vunpack.c.l.b16 %v1008
        %v1049 = vunpack.c.l.b16 %v1009
        %v1050 = vunpack.c.l.b16 %v1010
        %v1051 = vunpack.c.l.b16 %v1011
        %v1052 = vunpack.c.l.b16 %v1012
        %v1053 = vunpack.c.l.b16 %v1013
        %v1054 = vunpack.c.l.b16 %v1014
        %v1055 = vunpack.c.l.b16 %v1015
        %v1056 = vunpack.c.l.b16 %v1016
        %v1057 = vunpack.c.l.b16 %v1017
        %v1058 = vunpack.c.l.b16 %v1018
        %v1059 = vunpack.c.l.b16 %v1019
        %v1060 = vunpack.c.l.b16 %v1020
        %v1061 = vunpack.c.l.b16 %v1021
        %v1062 = vunpack.c.l.b16 %v1022
        %v1063 = vunpack.c.l.b16 %v1023
        %v1064 = vpack.c.b16 %v1049, %v1048
        %v1065 = vpack.c.b16 %v1051, %v1050
        %v1066 = vpack.c.b16 %v1053, %v1052
        %v1067 = vpack.c.b16 %v1055, %v1054
        %v1068 = vpack.c.b16 %v1057, %v1056
        %v1069 = vpack.c.b16 %v1059, %v1058
        %v1070 = vpack.c.b16 %v1061, %v1060
        %v1071 = vpack.c.b16 %v1063, %v1062
        %1080 = vmatprep.subr.bf16.mxu0 0
        %1081 = vmatpush1.bf16.msra.mxu0 %v1071
        %1082 = vmatprep.subr.bf16.mxu0 0
        %1083 = vmatpush1.bf16.msra.mxu0 %v1070
        %1084 = vmatprep.subr.bf16.mxu0 0
        %1085 = vmatpush1.bf16.msra.mxu0 %v1069
        %1086 = vmatprep.subr.bf16.mxu0 0
        %1087 = vmatpush1.bf16.msra.mxu0 %v1068
        %1088 = vmatprep.subr.bf16.mxu0 0
        %1089 = vmatpush1.bf16.msra.mxu0 %v1067
        %1090 = vmatprep.subr.bf16.mxu0 0
        %1091 = vmatpush1.bf16.msra.mxu0 %v1066
        %1092 = vmatprep.subr.bf16.mxu0 0
        %1093 = vmatpush1.bf16.msra.mxu0 %v1065
        %1094 = vmatprep.subr.bf16.mxu0 0
        %1095 = vmatpush1.bf16.msra.mxu0 %v1064
        %1096 = vmatprep.subr.bf16.mxu0 0
        %1097 = vmatpush2.bf16.msra.mxu0 0
        %1098 = vmatprep.subr.bf16.mxu0 0
        %1099 = vmatpush2.bf16.msra.mxu0 0
        %1100 = vmatprep.subr.bf16.mxu0 0
        %1101 = vmatpush2.bf16.msra.mxu0 0
        %1102 = vmatprep.subr.bf16.mxu0 0
        %1103 = vmatpush2.bf16.msra.mxu0 0
        %1104 = vmatprep.subr.bf16.mxu0 0
        %1105 = vmatpush2.bf16.msra.mxu0 0
        %1106 = vmatprep.subr.bf16.mxu0 0
        %1107 = vmatpush2.bf16.msra.mxu0 0
        %1108 = vmatprep.subr.bf16.mxu0 0
        %1109 = vmatpush2.bf16.msra.mxu0 0
        %1110 = vmatprep.subr.bf16.mxu0 0
        %1111 = vmatpush2.bf16.msra.mxu0 0
        %1112 = vmatprep.mubr.bf16.mxu0 0
        %1113 = vmatmul.mubr.bf16.gmra.mxu0 %v1005
        %v1114 = vpop.f32.mrf.mxu0
        %v1115 = vadd.f32 %v1030, %v1114
        %v1116 = vpop.f32.mrf.mxu0
        %v1117 = vpop.f32.mrf.mxu0
        %v1118 = vadd.f32 %v1030, %v1117
        %v1119 = vpop.f32.mrf.mxu0
        %1120 = vmatprep.mubr.bf16.mxu0 0
        %1121 = vmatmul.mubr.bf16.gmra.mxu0 %v1006
        %v1122 = vpop.f32.mrf.mxu0
        %v1123 = vadd.f32 %v1030, %v1122
        %v1124 = vpop.f32.mrf.mxu0
        %v1125 = vpop.f32.mrf.mxu0
        %v1126 = vadd.f32 %v1030, %v1125
        %v1127 = vpop.f32.mrf.mxu0
        %1128 = vdwg.mxu0
        %v1129 = vmin.f32 %v1115, 20.0
        %v1130 = vmin.f32 %v1118, 20.0
        %v1131 = vmin.f32 %v1123, 20.0
        %v1132 = vmin.f32 %v1126, 20.0
        %v1133 = vmul.f32 %v1129, 1.442695
        %v1134 = vpow.pop %v1133
        %v1135 = vmul.f32 %v1130, 1.442695
        %v1136 = vpow.pop %v1135
        %v1137 = vmul.f32 %v1131, 1.442695
        %v1138 = vpow.pop %v1137
        %v1139 = vmul.f32 %v1132, 1.442695
        %v1140 = vpow.pop %v1139
        %v1141 = vadd.f32 %v1134, 2.0
        %v1142 = vadd.f32 %v1136, 2.0
        %v1143 = vadd.f32 %v1138, 2.0
        %v1144 = vadd.f32 %v1140, 2.0
        %v1145 = vmul.f32 %v1134, %v1141
        %v1146 = vmul.f32 %v1136, %v1142
        %v1147 = vmul.f32 %v1138, %v1143
        %v1148 = vmul.f32 %v1140, %v1144
        %v1149 = vmul.f32 %v1115, %v1145
        %v1150 = vmul.f32 %v1118, %v1146
        %v1151 = vmul.f32 %v1123, %v1147
        %v1152 = vmul.f32 %v1126, %v1148
        %v1153 = vadd.f32 %v1145, 2.0
        %v1154 = vadd.f32 %v1146, 2.0
        %v1155 = vadd.f32 %v1147, 2.0
        %v1156 = vadd.f32 %v1148, 2.0
        %v1157 = vrcp.pop %v1153
        %v1158 = vrcp.pop %v1154
        %v1159 = vrcp.pop %v1155
        %v1160 = vrcp.pop %v1156
        %v1161 = vmul.f32 %v1149, %v1157
        %v1162 = vmul.f32 %v1150, %v1158
        %v1163 = vmul.f32 %v1151, %v1159
        %v1164 = vmul.f32 %v1152, %v1160
        %vm1165 = vcmp.gt.f32.partialorder %v1115, 20.0
        %vm1166 = vcmp.gt.f32.partialorder %v1118, 20.0
        %vm1167 = vcmp.gt.f32.partialorder %v1123, 20.0
        %vm1168 = vcmp.gt.f32.partialorder %v1126, 20.0
        %v1169 = vsel %vm1165, %v1115, %v1161
        %v1170 = vsel %vm1166, %v1118, %v1162
        %v1171 = vsel %vm1167, %v1123, %v1163
        %v1172 = vsel %vm1168, %v1126, %v1164
        %v1173 = vsel %vm725, %v1169, 0.0
        %v1174 = vsel %vm726, %v1170, 0.0
        %v1175 = vsel %vm727, %v1171, 0.0
        %v1176 = vsel %vm728, %v1172, 0.0
        %s1177 = scalar_lea.vmem [#allocation4], 12
        %v1178 = vld [vmem:[%s1177] sm:$0x7]
        %v1179 = vlaneseq
        %v1180 = vshrl.u32 %v1179, 7
        %v1181 = vsub.s32 1, %v1180
        %v1182 = vrot.slane %v1178, %v1181
        %v1183 = vmul.f32 %v1173, %v1182
        %v1184 = vmul.f32 %v1174, %v1182
        %v1185 = vmul.f32 %v1175, %v1182
        %v1186 = vmul.f32 %v1176, %v1182
        %v1187 = vrot.slane %v1173, 7
        %v1188 = vrot.slane %v1174, 7
        %v1189 = vrot.slane %v1175, 7
        %v1190 = vrot.slane %v1176, 7
        %v1191 = vsel %vm517, %v1189, %v1190
        %v1192 = vsel %vm517, %v1188, %v1189
        %v1193 = vsel %vm517, %v1187, %v1188
        %v1194 = vsel %vm517, %v1190, %v1187
        %v1195 = vlaneseq
        %v1196 = vshrl.u32 %v1195, 7
        %v1197 = vsub.s32 0, %v1196
        %v1198 = vrot.slane %v1178, %v1197
        %v1199 = vmul.f32 %v1194, %v1198
        %v1200 = vmul.f32 %v1193, %v1198
        %v1201 = vmul.f32 %v1192, %v1198
        %v1202 = vmul.f32 %v1191, %v1198
        %v1203 = vadd.f32 %v1183, %v1199
        %v1204 = vadd.f32 %v1184, %v1200
        %v1205 = vadd.f32 %v1185, %v1201
        %v1206 = vadd.f32 %v1186, %v1202
        %v1207 = vrot.slane %v1173, 1
        %v1208 = vrot.slane %v1174, 1
        %v1209 = vrot.slane %v1175, 1
        %v1210 = vrot.slane %v1176, 1
        %v1211 = vsel %vm538, %v1209, %v1210
        %v1212 = vsel %vm538, %v1208, %v1209
        %v1213 = vsel %vm538, %v1207, %v1208
        %v1214 = vsel %vm538, %v1210, %v1207
        %v1215 = vlaneseq
        %v1216 = vshrl.u32 %v1215, 7
        %v1217 = vsub.s32 2, %v1216
        %v1218 = vrot.slane %v1178, %v1217
        %v1219 = vmul.f32 %v1213, %v1218
        %v1220 = vmul.f32 %v1212, %v1218
        %v1221 = vmul.f32 %v1211, %v1218
        %v1222 = vmul.f32 %v1214, %v1218
        %v1223 = vadd.f32 %v1203, %v1219
        %v1224 = vadd.f32 %v1204, %v1220
        %v1225 = vadd.f32 %v1205, %v1221
        %v1226 = vadd.f32 %v1206, %v1222
        %v1227 = vpack.c.bf16 %v1224, %v1223
        %v1228 = vpack.c.bf16 %v1226, %v1225
        %s1229 = scalar_lea.vmem [#allocation7], 192
        %v1230 = vld [vmem:[%s1229] sm:$0xf]
        %v1231 = vld [vmem:[%s1229 + $0x4] sm:$0xf]
        %v1232 = vld [vmem:[%s1229 + $0x8] sm:$0xf]
        %v1233 = vld [vmem:[%s1229 + $0xc] sm:$0xf]
        %v1234 = vld [vmem:[%s1229 + $0x10] sm:$0xf]
        %v1235 = vld [vmem:[%s1229 + $0x14] sm:$0xf]
        %v1236 = vld [vmem:[%s1229 + $0x18] sm:$0xf]
        %v1237 = vld [vmem:[%s1229 + $0x1c] sm:$0xf]
        %v1238 = vld [vmem:[%s1229 + $0x20] sm:$0xf]
        %v1239 = vld [vmem:[%s1229 + $0x24] sm:$0xf]
        %v1240 = vld [vmem:[%s1229 + $0x28] sm:$0xf]
        %v1241 = vld [vmem:[%s1229 + $0x2c] sm:$0xf]
        %v1242 = vld [vmem:[%s1229 + $0x30] sm:$0xf]
        %v1243 = vld [vmem:[%s1229 + $0x34] sm:$0xf]
        %v1244 = vld [vmem:[%s1229 + $0x38] sm:$0xf]
        %v1245 = vld [vmem:[%s1229 + $0x3c] sm:$0xf]
        %s1246 = scalar_lea.vmem [#allocation9], 3
        %v1247 = vld [vmem:[%s1246] sm:$0x1]
        %v1249 = vlaneseq
        %v1250 = vshrl.u32 %v1249, 7
        %v1251 = vsub.s32 0, %v1250
        %v1252 = vrot.slane %v1247, %v1251
        %v1270 = vunpack.c.l.b16 %v1230
        %v1271 = vunpack.c.l.b16 %v1231
        %v1272 = vunpack.c.l.b16 %v1232
        %v1273 = vunpack.c.l.b16 %v1233
        %v1274 = vunpack.c.l.b16 %v1234
        %v1275 = vunpack.c.l.b16 %v1235
        %v1276 = vunpack.c.l.b16 %v1236
        %v1277 = vunpack.c.l.b16 %v1237
        %v1278 = vunpack.c.l.b16 %v1238
        %v1279 = vunpack.c.l.b16 %v1239
        %v1280 = vunpack.c.l.b16 %v1240
        %v1281 = vunpack.c.l.b16 %v1241
        %v1282 = vunpack.c.l.b16 %v1242
        %v1283 = vunpack.c.l.b16 %v1243
        %v1284 = vunpack.c.l.b16 %v1244
        %v1285 = vunpack.c.l.b16 %v1245
        %v1286 = vpack.c.b16 %v1271, %v1270
        %v1287 = vpack.c.b16 %v1273, %v1272
        %v1288 = vpack.c.b16 %v1275, %v1274
        %v1289 = vpack.c.b16 %v1277, %v1276
        %v1290 = vpack.c.b16 %v1279, %v1278
        %v1291 = vpack.c.b16 %v1281, %v1280
        %v1292 = vpack.c.b16 %v1283, %v1282
        %v1293 = vpack.c.b16 %v1285, %v1284
        %1302 = vmatprep.subr.bf16.mxu0 0
        %1303 = vmatpush1.bf16.msra.mxu0 %v1293
        %1304 = vmatprep.subr.bf16.mxu0 0
        %1305 = vmatpush1.bf16.msra.mxu0 %v1292
        %1306 = vmatprep.subr.bf16.mxu0 0
        %1307 = vmatpush1.bf16.msra.mxu0 %v1291
        %1308 = vmatprep.subr.bf16.mxu0 0
        %1309 = vmatpush1.bf16.msra.mxu0 %v1290
        %1310 = vmatprep.subr.bf16.mxu0 0
        %1311 = vmatpush1.bf16.msra.mxu0 %v1289
        %1312 = vmatprep.subr.bf16.mxu0 0
        %1313 = vmatpush1.bf16.msra.mxu0 %v1288
        %1314 = vmatprep.subr.bf16.mxu0 0
        %1315 = vmatpush1.bf16.msra.mxu0 %v1287
        %1316 = vmatprep.subr.bf16.mxu0 0
        %1317 = vmatpush1.bf16.msra.mxu0 %v1286
        %1318 = vmatprep.subr.bf16.mxu0 0
        %1319 = vmatpush2.bf16.msra.mxu0 0
        %1320 = vmatprep.subr.bf16.mxu0 0
        %1321 = vmatpush2.bf16.msra.mxu0 0
        %1322 = vmatprep.subr.bf16.mxu0 0
        %1323 = vmatpush2.bf16.msra.mxu0 0
        %1324 = vmatprep.subr.bf16.mxu0 0
        %1325 = vmatpush2.bf16.msra.mxu0 0
        %1326 = vmatprep.subr.bf16.mxu0 0
        %1327 = vmatpush2.bf16.msra.mxu0 0
        %1328 = vmatprep.subr.bf16.mxu0 0
        %1329 = vmatpush2.bf16.msra.mxu0 0
        %1330 = vmatprep.subr.bf16.mxu0 0
        %1331 = vmatpush2.bf16.msra.mxu0 0
        %1332 = vmatprep.subr.bf16.mxu0 0
        %1333 = vmatpush2.bf16.msra.mxu0 0
        %1334 = vmatprep.mubr.bf16.mxu0 0
        %1335 = vmatmul.mubr.bf16.gmra.mxu0 %v1227
        %v1336 = vpop.f32.mrf.mxu0
        %v1337 = vadd.f32 %v1252, %v1336
        %v1338 = vpop.f32.mrf.mxu0
        %v1339 = vpop.f32.mrf.mxu0
        %v1340 = vadd.f32 %v1252, %v1339
        %v1341 = vpop.f32.mrf.mxu0
        %1342 = vmatprep.mubr.bf16.mxu0 0
        %1343 = vmatmul.mubr.bf16.gmra.mxu0 %v1228
        %v1344 = vpop.f32.mrf.mxu0
        %v1345 = vadd.f32 %v1252, %v1344
        %v1346 = vpop.f32.mrf.mxu0
        %v1347 = vpop.f32.mrf.mxu0
        %v1348 = vadd.f32 %v1252, %v1347
        %v1349 = vpop.f32.mrf.mxu0
        %1350 = vdwg.mxu0
        %v1351 = vmin.f32 %v1337, 20.0
        %v1352 = vmin.f32 %v1340, 20.0
        %v1353 = vmin.f32 %v1345, 20.0
        %v1354 = vmin.f32 %v1348, 20.0
        %v1355 = vmul.f32 %v1351, 1.442695
        %v1356 = vpow.pop %v1355
        %v1357 = vmul.f32 %v1352, 1.442695
        %v1358 = vpow.pop %v1357
        %v1359 = vmul.f32 %v1353, 1.442695
        %v1360 = vpow.pop %v1359
        %v1361 = vmul.f32 %v1354, 1.442695
        %v1362 = vpow.pop %v1361
        %v1363 = vadd.f32 %v1356, 2.0
        %v1364 = vadd.f32 %v1358, 2.0
        %v1365 = vadd.f32 %v1360, 2.0
        %v1366 = vadd.f32 %v1362, 2.0
        %v1367 = vmul.f32 %v1356, %v1363
        %v1368 = vmul.f32 %v1358, %v1364
        %v1369 = vmul.f32 %v1360, %v1365
        %v1370 = vmul.f32 %v1362, %v1366
        %v1371 = vmul.f32 %v1337, %v1367
        %v1372 = vmul.f32 %v1340, %v1368
        %v1373 = vmul.f32 %v1345, %v1369
        %v1374 = vmul.f32 %v1348, %v1370
        %v1375 = vadd.f32 %v1367, 2.0
        %v1376 = vadd.f32 %v1368, 2.0
        %v1377 = vadd.f32 %v1369, 2.0
        %v1378 = vadd.f32 %v1370, 2.0
        %v1379 = vrcp.pop %v1375
        %v1380 = vrcp.pop %v1376
        %v1381 = vrcp.pop %v1377
        %v1382 = vrcp.pop %v1378
        %v1383 = vmul.f32 %v1371, %v1379
        %v1384 = vmul.f32 %v1372, %v1380
        %v1385 = vmul.f32 %v1373, %v1381
        %v1386 = vmul.f32 %v1374, %v1382
        %vm1387 = vcmp.gt.f32.partialorder %v1337, 20.0
        %vm1388 = vcmp.gt.f32.partialorder %v1340, 20.0
        %vm1389 = vcmp.gt.f32.partialorder %v1345, 20.0
        %vm1390 = vcmp.gt.f32.partialorder %v1348, 20.0
        %v1391 = vsel %vm1387, %v1337, %v1383
        %v1392 = vsel %vm1388, %v1340, %v1384
        %v1393 = vsel %vm1389, %v1345, %v1385
        %v1394 = vsel %vm1390, %v1348, %v1386
        %v1395 = vsel %vm725, %v1391, 0.0
        %v1396 = vsel %vm726, %v1392, 0.0
        %v1397 = vsel %vm727, %v1393, 0.0
        %v1398 = vsel %vm728, %v1394, 0.0
        %s1399 = scalar_lea.vmem [#allocation4], 16
        %v1400 = vld [vmem:[%s1399] sm:$0x7]
        %v1401 = vlaneseq
        %v1402 = vshrl.u32 %v1401, 7
        %v1403 = vsub.s32 1, %v1402
        %v1404 = vrot.slane %v1400, %v1403
        %v1405 = vmul.f32 %v1395, %v1404
        %v1406 = vmul.f32 %v1396, %v1404
        %v1407 = vmul.f32 %v1397, %v1404
        %v1408 = vmul.f32 %v1398, %v1404
        %v1409 = vrot.slane %v1395, 7
        %v1410 = vrot.slane %v1396, 7
        %v1411 = vrot.slane %v1397, 7
        %v1412 = vrot.slane %v1398, 7
        %v1413 = vsel %vm517, %v1411, %v1412
        %v1414 = vsel %vm517, %v1410, %v1411
        %v1415 = vsel %vm517, %v1409, %v1410
        %v1416 = vsel %vm517, %v1412, %v1409
        %v1417 = vlaneseq
        %v1418 = vshrl.u32 %v1417, 7
        %v1419 = vsub.s32 0, %v1418
        %v1420 = vrot.slane %v1400, %v1419
        %v1421 = vmul.f32 %v1416, %v1420
        %v1422 = vmul.f32 %v1415, %v1420
        %v1423 = vmul.f32 %v1414, %v1420
        %v1424 = vmul.f32 %v1413, %v1420
        %v1425 = vadd.f32 %v1405, %v1421
        %v1426 = vadd.f32 %v1406, %v1422
        %v1427 = vadd.f32 %v1407, %v1423
        %v1428 = vadd.f32 %v1408, %v1424
        %v1429 = vrot.slane %v1395, 1
        %v1430 = vrot.slane %v1396, 1
        %v1431 = vrot.slane %v1397, 1
        %v1432 = vrot.slane %v1398, 1
        %v1433 = vsel %vm538, %v1431, %v1432
        %v1434 = vsel %vm538, %v1430, %v1431
        %v1435 = vsel %vm538, %v1429, %v1430
        %v1436 = vsel %vm538, %v1432, %v1429
        %v1437 = vlaneseq
        %v1438 = vshrl.u32 %v1437, 7
        %v1439 = vsub.s32 2, %v1438
        %v1440 = vrot.slane %v1400, %v1439
        %v1441 = vmul.f32 %v1435, %v1440
        %v1442 = vmul.f32 %v1434, %v1440
        %v1443 = vmul.f32 %v1433, %v1440
        %v1444 = vmul.f32 %v1436, %v1440
        %v1445 = vadd.f32 %v1425, %v1441
        %v1446 = vadd.f32 %v1426, %v1442
        %v1447 = vadd.f32 %v1427, %v1443
        %v1448 = vadd.f32 %v1428, %v1444
        %v1449 = vpack.c.bf16 %v1446, %v1445
        %v1450 = vpack.c.bf16 %v1448, %v1447
        %s1451 = scalar_lea.vmem [#allocation7], 256
        %v1452 = vld [vmem:[%s1451] sm:$0xf]
        %v1453 = vld [vmem:[%s1451 + $0x4] sm:$0xf]
        %v1454 = vld [vmem:[%s1451 + $0x8] sm:$0xf]
        %v1455 = vld [vmem:[%s1451 + $0xc] sm:$0xf]
        %v1456 = vld [vmem:[%s1451 + $0x10] sm:$0xf]
        %v1457 = vld [vmem:[%s1451 + $0x14] sm:$0xf]
        %v1458 = vld [vmem:[%s1451 + $0x18] sm:$0xf]
        %v1459 = vld [vmem:[%s1451 + $0x1c] sm:$0xf]
        %v1460 = vld [vmem:[%s1451 + $0x20] sm:$0xf]
        %v1461 = vld [vmem:[%s1451 + $0x24] sm:$0xf]
        %v1462 = vld [vmem:[%s1451 + $0x28] sm:$0xf]
        %v1463 = vld [vmem:[%s1451 + $0x2c] sm:$0xf]
        %v1464 = vld [vmem:[%s1451 + $0x30] sm:$0xf]
        %v1465 = vld [vmem:[%s1451 + $0x34] sm:$0xf]
        %v1466 = vld [vmem:[%s1451 + $0x38] sm:$0xf]
        %v1467 = vld [vmem:[%s1451 + $0x3c] sm:$0xf]
        %s1468 = scalar_lea.vmem [#allocation9], 4
        %v1469 = vld [vmem:[%s1468] sm:$0x1]
        %v1471 = vlaneseq
        %v1472 = vshrl.u32 %v1471, 7
        %v1473 = vsub.s32 0, %v1472
        %v1474 = vrot.slane %v1469, %v1473
        %v1492 = vunpack.c.l.b16 %v1452
        %v1493 = vunpack.c.l.b16 %v1453
        %v1494 = vunpack.c.l.b16 %v1454
        %v1495 = vunpack.c.l.b16 %v1455
        %v1496 = vunpack.c.l.b16 %v1456
        %v1497 = vunpack.c.l.b16 %v1457
        %v1498 = vunpack.c.l.b16 %v1458
        %v1499 = vunpack.c.l.b16 %v1459
        %v1500 = vunpack.c.l.b16 %v1460
        %v1501 = vunpack.c.l.b16 %v1461
        %v1502 = vunpack.c.l.b16 %v1462
        %v1503 = vunpack.c.l.b16 %v1463
        %v1504 = vunpack.c.l.b16 %v1464
        %v1505 = vunpack.c.l.b16 %v1465
        %v1506 = vunpack.c.l.b16 %v1466
        %v1507 = vunpack.c.l.b16 %v1467
        %v1508 = vpack.c.b16 %v1493, %v1492
        %v1509 = vpack.c.b16 %v1495, %v1494
        %v1510 = vpack.c.b16 %v1497, %v1496
        %v1511 = vpack.c.b16 %v1499, %v1498
        %v1512 = vpack.c.b16 %v1501, %v1500
        %v1513 = vpack.c.b16 %v1503, %v1502
        %v1514 = vpack.c.b16 %v1505, %v1504
        %v1515 = vpack.c.b16 %v1507, %v1506
        %1524 = vmatprep.subr.bf16.mxu0 0
        %1525 = vmatpush1.bf16.msra.mxu0 %v1515
        %1526 = vmatprep.subr.bf16.mxu0 0
        %1527 = vmatpush1.bf16.msra.mxu0 %v1514
        %1528 = vmatprep.subr.bf16.mxu0 0
        %1529 = vmatpush1.bf16.msra.mxu0 %v1513
        %1530 = vmatprep.subr.bf16.mxu0 0
        %1531 = vmatpush1.bf16.msra.mxu0 %v1512
        %1532 = vmatprep.subr.bf16.mxu0 0
        %1533 = vmatpush1.bf16.msra.mxu0 %v1511
        %1534 = vmatprep.subr.bf16.mxu0 0
        %1535 = vmatpush1.bf16.msra.mxu0 %v1510
        %1536 = vmatprep.subr.bf16.mxu0 0
        %1537 = vmatpush1.bf16.msra.mxu0 %v1509
        %1538 = vmatprep.subr.bf16.mxu0 0
        %1539 = vmatpush1.bf16.msra.mxu0 %v1508
        %1540 = vmatprep.subr.bf16.mxu0 0
        %1541 = vmatpush2.bf16.msra.mxu0 0
        %1542 = vmatprep.subr.bf16.mxu0 0
        %1543 = vmatpush2.bf16.msra.mxu0 0
        %1544 = vmatprep.subr.bf16.mxu0 0
        %1545 = vmatpush2.bf16.msra.mxu0 0
        %1546 = vmatprep.subr.bf16.mxu0 0
        %1547 = vmatpush2.bf16.msra.mxu0 0
        %1548 = vmatprep.subr.bf16.mxu0 0
        %1549 = vmatpush2.bf16.msra.mxu0 0
        %1550 = vmatprep.subr.bf16.mxu0 0
        %1551 = vmatpush2.bf16.msra.mxu0 0
        %1552 = vmatprep.subr.bf16.mxu0 0
        %1553 = vmatpush2.bf16.msra.mxu0 0
        %1554 = vmatprep.subr.bf16.mxu0 0
        %1555 = vmatpush2.bf16.msra.mxu0 0
        %1556 = vmatprep.mubr.bf16.mxu0 0
        %1557 = vmatmul.mubr.bf16.gmra.mxu0 %v1449
        %v1558 = vpop.f32.mrf.mxu0
        %v1559 = vadd.f32 %v1474, %v1558
        %v1560 = vpop.f32.mrf.mxu0
        %v1561 = vpop.f32.mrf.mxu0
        %v1562 = vadd.f32 %v1474, %v1561
        %v1563 = vpop.f32.mrf.mxu0
        %1564 = vmatprep.mubr.bf16.mxu0 0
        %1565 = vmatmul.mubr.bf16.gmra.mxu0 %v1450
        %v1566 = vpop.f32.mrf.mxu0
        %v1567 = vadd.f32 %v1474, %v1566
        %v1568 = vpop.f32.mrf.mxu0
        %v1569 = vpop.f32.mrf.mxu0
        %v1570 = vadd.f32 %v1474, %v1569
        %v1571 = vpop.f32.mrf.mxu0
        %1572 = vdwg.mxu0
        %v1573 = vmin.f32 %v1559, 20.0
        %v1574 = vmin.f32 %v1562, 20.0
        %v1575 = vmin.f32 %v1567, 20.0
        %v1576 = vmin.f32 %v1570, 20.0
        %v1577 = vmul.f32 %v1573, 1.442695
        %v1578 = vpow.pop %v1577
        %v1579 = vmul.f32 %v1574, 1.442695
        %v1580 = vpow.pop %v1579
        %v1581 = vmul.f32 %v1575, 1.442695
        %v1582 = vpow.pop %v1581
        %v1583 = vmul.f32 %v1576, 1.442695
        %v1584 = vpow.pop %v1583
        %v1585 = vadd.f32 %v1578, 2.0
        %v1586 = vadd.f32 %v1580, 2.0
        %v1587 = vadd.f32 %v1582, 2.0
        %v1588 = vadd.f32 %v1584, 2.0
        %v1589 = vmul.f32 %v1578, %v1585
        %v1590 = vmul.f32 %v1580, %v1586
        %v1591 = vmul.f32 %v1582, %v1587
        %v1592 = vmul.f32 %v1584, %v1588
        %v1593 = vmul.f32 %v1559, %v1589
        %v1594 = vmul.f32 %v1562, %v1590
        %v1595 = vmul.f32 %v1567, %v1591
        %v1596 = vmul.f32 %v1570, %v1592
        %v1597 = vadd.f32 %v1589, 2.0
        %v1598 = vadd.f32 %v1590, 2.0
        %v1599 = vadd.f32 %v1591, 2.0
        %v1600 = vadd.f32 %v1592, 2.0
        %v1601 = vrcp.pop %v1597
        %v1602 = vrcp.pop %v1598
        %v1603 = vrcp.pop %v1599
        %v1604 = vrcp.pop %v1600
        %v1605 = vmul.f32 %v1593, %v1601
        %v1606 = vmul.f32 %v1594, %v1602
        %v1607 = vmul.f32 %v1595, %v1603
        %v1608 = vmul.f32 %v1596, %v1604
        %vm1609 = vcmp.gt.f32.partialorder %v1559, 20.0
        %vm1610 = vcmp.gt.f32.partialorder %v1562, 20.0
        %vm1611 = vcmp.gt.f32.partialorder %v1567, 20.0
        %vm1612 = vcmp.gt.f32.partialorder %v1570, 20.0
        %v1613 = vsel %vm1609, %v1559, %v1605
        %v1614 = vsel %vm1610, %v1562, %v1606
        %v1615 = vsel %vm1611, %v1567, %v1607
        %v1616 = vsel %vm1612, %v1570, %v1608
        %v1617 = vsel %vm725, %v1613, 0.0
        %v1618 = vsel %vm726, %v1614, 0.0
        %v1619 = vsel %vm727, %v1615, 0.0
        %v1620 = vsel %vm728, %v1616, 0.0
        %s1621 = scalar_lea.vmem [#allocation4], 20
        %v1622 = vld [vmem:[%s1621] sm:$0x7]
        %v1623 = vlaneseq
        %v1624 = vshrl.u32 %v1623, 7
        %v1625 = vsub.s32 1, %v1624
        %v1626 = vrot.slane %v1622, %v1625
        %v1627 = vmul.f32 %v1617, %v1626
        %v1628 = vmul.f32 %v1618, %v1626
        %v1629 = vmul.f32 %v1619, %v1626
        %v1630 = vmul.f32 %v1620, %v1626
        %v1631 = vrot.slane %v1617, 7
        %v1632 = vrot.slane %v1618, 7
        %v1633 = vrot.slane %v1619, 7
        %v1634 = vrot.slane %v1620, 7
        %v1635 = vsel %vm517, %v1633, %v1634
        %v1636 = vsel %vm517, %v1632, %v1633
        %v1637 = vsel %vm517, %v1631, %v1632
        %v1638 = vsel %vm517, %v1634, %v1631
        %v1639 = vlaneseq
        %v1640 = vshrl.u32 %v1639, 7
        %v1641 = vsub.s32 0, %v1640
        %v1642 = vrot.slane %v1622, %v1641
        %v1643 = vmul.f32 %v1638, %v1642
        %v1644 = vmul.f32 %v1637, %v1642
        %v1645 = vmul.f32 %v1636, %v1642
        %v1646 = vmul.f32 %v1635, %v1642
        %v1647 = vadd.f32 %v1627, %v1643
        %v1648 = vadd.f32 %v1628, %v1644
        %v1649 = vadd.f32 %v1629, %v1645
        %v1650 = vadd.f32 %v1630, %v1646
        %v1651 = vrot.slane %v1617, 1
        %v1652 = vrot.slane %v1618, 1
        %v1653 = vrot.slane %v1619, 1
        %v1654 = vrot.slane %v1620, 1
        %v1655 = vsel %vm538, %v1653, %v1654
        %v1656 = vsel %vm538, %v1652, %v1653
        %v1657 = vsel %vm538, %v1651, %v1652
        %v1658 = vsel %vm538, %v1654, %v1651
        %v1659 = vlaneseq
        %v1660 = vshrl.u32 %v1659, 7
        %v1661 = vsub.s32 2, %v1660
        %v1662 = vrot.slane %v1622, %v1661
        %v1663 = vmul.f32 %v1657, %v1662
        %v1664 = vmul.f32 %v1656, %v1662
        %v1665 = vmul.f32 %v1655, %v1662
        %v1666 = vmul.f32 %v1658, %v1662
        %v1667 = vadd.f32 %v1647, %v1663
        %v1668 = vadd.f32 %v1648, %v1664
        %v1669 = vadd.f32 %v1649, %v1665
        %v1670 = vadd.f32 %v1650, %v1666
        %v1671 = vpack.c.bf16 %v1668, %v1667
        %v1672 = vpack.c.bf16 %v1670, %v1669
        %s1673 = scalar_lea.vmem [#allocation7], 320
        %v1674 = vld [vmem:[%s1673] sm:$0xf]
        %v1675 = vld [vmem:[%s1673 + $0x4] sm:$0xf]
        %v1676 = vld [vmem:[%s1673 + $0x8] sm:$0xf]
        %v1677 = vld [vmem:[%s1673 + $0xc] sm:$0xf]
        %v1678 = vld [vmem:[%s1673 + $0x10] sm:$0xf]
        %v1679 = vld [vmem:[%s1673 + $0x14] sm:$0xf]
        %v1680 = vld [vmem:[%s1673 + $0x18] sm:$0xf]
        %v1681 = vld [vmem:[%s1673 + $0x1c] sm:$0xf]
        %v1682 = vld [vmem:[%s1673 + $0x20] sm:$0xf]
        %v1683 = vld [vmem:[%s1673 + $0x24] sm:$0xf]
        %v1684 = vld [vmem:[%s1673 + $0x28] sm:$0xf]
        %v1685 = vld [vmem:[%s1673 + $0x2c] sm:$0xf]
        %v1686 = vld [vmem:[%s1673 + $0x30] sm:$0xf]
        %v1687 = vld [vmem:[%s1673 + $0x34] sm:$0xf]
        %v1688 = vld [vmem:[%s1673 + $0x38] sm:$0xf]
        %v1689 = vld [vmem:[%s1673 + $0x3c] sm:$0xf]
        %s1690 = scalar_lea.vmem [#allocation9], 5
        %v1691 = vld [vmem:[%s1690] sm:$0x1]
        %v1693 = vlaneseq
        %v1694 = vshrl.u32 %v1693, 7
        %v1695 = vsub.s32 0, %v1694
        %v1696 = vrot.slane %v1691, %v1695
        %v1714 = vunpack.c.l.b16 %v1674
        %v1715 = vunpack.c.l.b16 %v1675
        %v1716 = vunpack.c.l.b16 %v1676
        %v1717 = vunpack.c.l.b16 %v1677
        %v1718 = vunpack.c.l.b16 %v1678
        %v1719 = vunpack.c.l.b16 %v1679
        %v1720 = vunpack.c.l.b16 %v1680
        %v1721 = vunpack.c.l.b16 %v1681
        %v1722 = vunpack.c.l.b16 %v1682
        %v1723 = vunpack.c.l.b16 %v1683
        %v1724 = vunpack.c.l.b16 %v1684
        %v1725 = vunpack.c.l.b16 %v1685
        %v1726 = vunpack.c.l.b16 %v1686
        %v1727 = vunpack.c.l.b16 %v1687
        %v1728 = vunpack.c.l.b16 %v1688
        %v1729 = vunpack.c.l.b16 %v1689
        %v1730 = vpack.c.b16 %v1715, %v1714
        %v1731 = vpack.c.b16 %v1717, %v1716
        %v1732 = vpack.c.b16 %v1719, %v1718
        %v1733 = vpack.c.b16 %v1721, %v1720
        %v1734 = vpack.c.b16 %v1723, %v1722
        %v1735 = vpack.c.b16 %v1725, %v1724
        %v1736 = vpack.c.b16 %v1727, %v1726
        %v1737 = vpack.c.b16 %v1729, %v1728
        %1746 = vmatprep.subr.bf16.mxu0 0
        %1747 = vmatpush1.bf16.msra.mxu0 %v1737
        %1748 = vmatprep.subr.bf16.mxu0 0
        %1749 = vmatpush1.bf16.msra.mxu0 %v1736
        %1750 = vmatprep.subr.bf16.mxu0 0
        %1751 = vmatpush1.bf16.msra.mxu0 %v1735
        %1752 = vmatprep.subr.bf16.mxu0 0
        %1753 = vmatpush1.bf16.msra.mxu0 %v1734
        %1754 = vmatprep.subr.bf16.mxu0 0
        %1755 = vmatpush1.bf16.msra.mxu0 %v1733
        %1756 = vmatprep.subr.bf16.mxu0 0
        %1757 = vmatpush1.bf16.msra.mxu0 %v1732
        %1758 = vmatprep.subr.bf16.mxu0 0
        %1759 = vmatpush1.bf16.msra.mxu0 %v1731
        %1760 = vmatprep.subr.bf16.mxu0 0
        %1761 = vmatpush1.bf16.msra.mxu0 %v1730
        %1762 = vmatprep.subr.bf16.mxu0 0
        %1763 = vmatpush2.bf16.msra.mxu0 0
        %1764 = vmatprep.subr.bf16.mxu0 0
        %1765 = vmatpush2.bf16.msra.mxu0 0
        %1766 = vmatprep.subr.bf16.mxu0 0
        %1767 = vmatpush2.bf16.msra.mxu0 0
        %1768 = vmatprep.subr.bf16.mxu0 0
        %1769 = vmatpush2.bf16.msra.mxu0 0
        %1770 = vmatprep.subr.bf16.mxu0 0
        %1771 = vmatpush2.bf16.msra.mxu0 0
        %1772 = vmatprep.subr.bf16.mxu0 0
        %1773 = vmatpush2.bf16.msra.mxu0 0
        %1774 = vmatprep.subr.bf16.mxu0 0
        %1775 = vmatpush2.bf16.msra.mxu0 0
        %1776 = vmatprep.subr.bf16.mxu0 0
        %1777 = vmatpush2.bf16.msra.mxu0 0
        %1778 = vmatprep.mubr.bf16.mxu0 0
        %1779 = vmatmul.mubr.bf16.gmra.mxu0 %v1671
        %v1780 = vpop.f32.mrf.mxu0
        %v1781 = vpop.f32.mrf.mxu0
        %v1782 = vpop.f32.mrf.mxu0
        %v1783 = vadd.f32 %v1696, %v1782
        %v1784 = vpop.f32.mrf.mxu0
        %1785 = vmatprep.mubr.bf16.mxu0 0
        %1786 = vmatmul.mubr.bf16.gmra.mxu0 %v1672
        %v1787 = vpop.f32.mrf.mxu0
        %v1788 = vadd.f32 %v1696, %v1787
        %v1789 = vpop.f32.mrf.mxu0
        %v1790 = vpop.f32.mrf.mxu0
        %v1791 = vpop.f32.mrf.mxu0
        %1792 = vdwg.mxu0
        %v1793 = vadd.f32 %v1783, %v494
        %v1794 = vadd.f32 %v1788, %v497
        %v1795 = vmin.f32 %v1793, 20.0
        %v1796 = vmin.f32 %v1794, 20.0
        %v1797 = vmul.f32 %v1795, 1.442695
        %v1798 = vpow.pop %v1797
        %v1799 = vmul.f32 %v1796, 1.442695
        %v1800 = vpow.pop %v1799
        %v1801 = vadd.f32 %v1798, 2.0
        %v1802 = vadd.f32 %v1800, 2.0
        %v1803 = vmul.f32 %v1798, %v1801
        %v1804 = vmul.f32 %v1800, %v1802
        %v1805 = vmul.f32 %v1793, %v1803
        %v1806 = vmul.f32 %v1794, %v1804
        %v1807 = vadd.f32 %v1803, 2.0
        %v1808 = vadd.f32 %v1804, 2.0
        %v1809 = vrcp.pop %v1807
        %v1810 = vrcp.pop %v1808
        %v1811 = vmul.f32 %v1805, %v1809
        %v1812 = vmul.f32 %v1806, %v1810
        %vm1813 = vcmp.gt.f32.partialorder %v1793, 20.0
        %vm1814 = vcmp.gt.f32.partialorder %v1794, 20.0
        %v1815 = vsel %vm1813, %v1793, %v1811
        %v1816 = vsel %vm1814, %v1794, %v1812
        %v1817 = vpack.c.bf16 %v1816, %v1815
        %v1819 = vunpack.c.l.b16 %v1817
        %v1820 = vunpack.c.h.b16 %v1817
        %v1821 = vpack.c.b16 %v1819, %v1819
        %v1822 = vpack.c.b16 %v1820, %v1820
        %1825 = vst [vmem:[%s276] sm:$0xf] %v1821
        %1826 = vst [vmem:[%s276 + $0x4] sm:$0xf] %v1822
        %s1827 = sand.u32 %s150, 1
        %s1828 = scalar_lea.sflag [#allocation6], %s1827
        %s1829 = sand.u32 %s150, 1
        %s1830 = smul.addr %s1829, 8
        %s1831 = scalar_lea.vmem [#allocation12], %s1830
        // Predicated region
        $region73: #{tpu_custom_call.1} parent=39 // pred_check
          %p1832 = pneg %p160
        $region74: #{tpu_custom_call.1} parent=39 // pred_check_branch
          %1834 = sbr.rel (%p1832) target = $region76
        $region75: #{tpu_custom_call.1} parent=39 // pred_region
          %s1835 = smul.u32 2, %s28
          %s1837 = ssub.s32 128, 128
          %1838 = vsyncadd %s1828, %s1837
          %s1839 = smul.addr %s27, 4
          %s1840 = sadd.s32 %s1835, %s1839
          %s1841 = smul.addr %s1840, 64
          %s1842 = scalar_lea.hbm %s6, %s1841
          %s1843 = sshll.u32 %s1831, 4
          %s1844 = int_to_ptr.vmem [resolvable:$true] %s1843
          %1849 = dma.vmem_to_hbm [thread:$0]  %s1844, 128, %s1842, %s1828, 64, 64, 4
        $region76: #{tpu_custom_call.1} parent=39 // pred_fallthru
          _
      $region40: #{tpu_custom_call.1} parent=5 // pred_fallthru
        _
      %p1850 = scmp.le.s32.totalorder 2, %s18
      // Predicated region
      $region77: #{tpu_custom_call.1} parent=5 // pred_check
        %p1851 = pneg %p1850
      $region78: #{tpu_custom_call.1} parent=5 // pred_check_branch
        %1853 = sbr.rel (%p1851) target = $region80
      $region79: #{tpu_custom_call.1} parent=5 // pred_region
        %s1854 = ssub.s32 %s18, 2
        // Predicated region
        $region81: #{tpu_custom_call.1} parent=79 // pred_check
          %p1855 = pneg %p166
        $region82: #{tpu_custom_call.1} parent=79 // pred_check_branch
          %1857 = sbr.rel (%p1855) target = $region84
        $region83: #{tpu_custom_call.1} parent=79 // pred_region
          %s1858 = sand.u32 %s151, 1
          %s1859 = scalar_lea.sflag [#allocation6], %s1858
          %s1860 = sand.u32 %s151, 1
          %s1861 = smul.addr %s1860, 8
          %s1862 = scalar_lea.vmem [#allocation12], %s1861
          %1863 = dma.done %s1859, 128
        $region84: #{tpu_custom_call.1} parent=79 // pred_fallthru
          _
      $region80: #{tpu_custom_call.1} parent=5 // pred_fallthru
        _
    $region6: #{tpu_custom_call.1} parent=1 // loop_footer
      %s22 = sadd.s32 1, %s18
    $region7: #{tpu_custom_call.1} parent=1 // loop_footer_branch
      %17 = sbr.rel target = $region3
    $region8: #{tpu_custom_call.1} parent=1 // loop_exit
      _
    %1864 = vsyncpa [#allocation5], 1
    %s1865 = scalar_lea.sflag [#allocation5], 1
    %1866 = vsyncpa %s1865, 1
    %1867 = vsyncpa [#allocation8], 1
    %1868 = vsyncpa [#allocation11], 1
    %1869 = vsyncpa [#allocation6], 1
    %s1870 = scalar_lea.sflag [#allocation6], 1
    %1871 = vsyncpa %s1870, 1
  %1872 = vsyncmov [#allocation3]
  %s1873 = vpop.sfrf %1872
  %p1874 = scmp.eq.s32.totalorder %s1873, 0
  %p1875 = pneg %p1874
  %1877 = shalt.err (%p1875)
  %s1878 = scalar_lea.sflag [#allocation3], 1
  %1879 = vsyncmov %s1878
  %s1880 = vpop.sfrf %1879
  %p1881 = scmp.eq.s32.totalorder %s1880, 0
  %p1882 = pneg %p1881
  %1884 = shalt.err (%p1882)

// kernel: tpu_custom_call.1
$region0: #{tpu_custom_call.1}
  #allocation0 [shape = 'u32[]', space=smem, size = 0x4, offset = 0x4, fixed_abs, tag = 'smem constant byte address 0x4 - core index']
  #allocation1 [shape = 'u32[144,128]{1,0:T(1,128)}', space=vmem, size = 0x12000, scoped, tag = 'internal scratch']
  #allocation2 [shape = 'bf16[2,32,128]{2,1,0:T(8,128)(2,1)}', space=vmem, size = 0x4000, scoped, tag = 'scratch operand']
  #allocation3 [shape = 's32[2]{0}', space=sflag, size = 0x8, scoped, tag = 'scratch operand']
  #allocation13 [shape = 's32[]', space=sflag, size = 0x4, offset = 0, fixed_abs, tag = 'sflag constant byte address 0x0 - dummy sync flag']
  #allocation14 [shape = 's32[]', space=sflag, size = 0x4, offset = 0, fixed_abs, tag = 'sflag constant byte address 0x0 - dummy sync flag']
  #allocation15 [shape = 'u32[]', space=smem, size = 0x4, offset = 0x44, fixed_abs, tag = 'smem constant byte address 0x44 - assertion arg 0']
  #allocation16 [shape = 'u32[]', space=smem, size = 0x4, offset = 0x48, fixed_abs, tag = 'smem constant byte address 0x48 - assertion arg 1']
  #allocation17 [shape = 's32[]', space=sflag, size = 0x4, offset = 0, fixed_abs, tag = 'sflag constant byte address 0x0 - dummy sync flag']
  #allocation18 [shape = 's32[]', space=sflag, size = 0x4, offset = 0, fixed_abs, tag = 'sflag constant byte address 0x0 - dummy sync flag']
  %s0 = inlined_call_operand.hbm [shape: bf16[2,48,128], index: 0, kind: input, shape index: {}]
  %s1 = inlined_call_operand.hbm [shape: f32[6,3,128], index: 1, kind: input, shape index: {}]
  %s2 = inlined_call_operand.hbm [shape: bf16[6,128,128], index: 2, kind: input, shape index: {}]
  %s3 = inlined_call_operand.hbm [shape: f32[6,1,128], index: 3, kind: input, shape index: {}]
  %s4 = inlined_call_operand.hbm [shape: bf16[128,128], index: 4, kind: input, shape index: {}]
  %s5 = inlined_call_operand.vmem [shape: f32[1,128], index: 5, kind: input, shape index: {}]
  %s6 = inlined_call_operand.hbm [shape: bf16[2,32,128], index: 6, kind: output, shape index: {}]
  %s7 = sld [smem:[#allocation0]]
  $region85: #{tpu_custom_call.1} parent=0
    _
  %s9 = ssub.s32 1, %s7
  %s10 = scalar_select 0, %s9, %s7
  $region1: #{tpu_custom_call.1} parent=0
    #allocation4 [shape = 'u8[12288]{0}', space=vmem, size = 0x3000, scoped, tag = 'input window, operand 1, single buffered']
    #allocation5 [shape = 's32[2]{0}', space=sflag, size = 0x8, scoped, tag = 'scoped memory for tpu_custom_call.1']
    #allocation6 [shape = 's32[2]{0}', space=sflag, size = 0x8, scoped, tag = 'scoped memory for tpu_custom_call.1']
    #allocation7 [shape = 'u8[196608]{0}', space=vmem, size = 0x30000, scoped, tag = 'input window, operand 2, single buffered']
    #allocation8 [shape = 's32[1]{0}', space=sflag, size = 0x4, scoped, tag = 'scoped memory for tpu_custom_call.1']
    #allocation9 [shape = 'u8[3072]{0}', space=vmem, size = 0xc00, scoped, tag = 'input window, operand 3, single buffered']
    #allocation10 [shape = 'u8[32768]{0}', space=vmem, size = 0x8000, scoped, tag = 'input window, operand 4, single buffered']
    #allocation11 [shape = 's32[1]{0}', space=sflag, size = 0x4, scoped, tag = 'scoped memory for tpu_custom_call.1']
    #allocation12 [shape = 'u8[8192]{0}', space=vmem, size = 0x2000, scoped, tag = 'output window, operand 0']
    %11 = vsyncpa [#allocation5], 0
    %12 = vsyncpa [#allocation8], 0
    %13 = vsyncpa [#allocation11], 0
    %14 = vsyncpa [#allocation6], 0
    %s15 = scalar_lea.sflag [#allocation6], 1
    %16 = vsyncpa %s15, 0
    loop: start=0, step=1, limit=6
    $region2: #{tpu_custom_call.1} parent=1 // loop_pre_header
      _
    $region3: #{tpu_custom_call.1} parent=1 // loop_header
      %s18 = sphi 0, %s22
      %p19 = scmp.ge.s32.totalorder %s18, 6
      %s25 = sphi 0, %s37
      %s26 = sphi 0, %s33
      %s27 = sphi 0, %s25
      %s28 = sphi 0, %s26
      %s29 = sphi 0, %s27
      %s30 = sphi 0, %s28
      %s38 = sphi 0, %s38
      %s40 = sphi 0, %s38
      %s41 = sphi 0, %s40
      %s55 = sphi 0, %s41
      %s59 = sphi 0, %s59
      %s61 = sphi 0, %s59
      %s62 = sphi 0, %s61
      %s76 = sphi 0, %s62
      %s80 = sphi 0, %s80
      %s82 = sphi 0, %s80
      %s83 = sphi 0, %s82
      %s97 = sphi 0, %s83
      %s101 = sphi 0, %s101
      %s103 = sphi 0, %s101
      %s104 = sphi 0, %s103
      %s118 = sphi 0, %s104
      %s122 = sphi 0, %s122
      %s124 = sphi 0, %s122
      %s125 = sphi 0, %s124
      %s139 = sphi 0, %s125
      %s147 = sphi 0, %s149
      %s150 = sphi 0, %s147
      %s151 = sphi 0, %s150
      %s167 = sphi 0, %s151
    $region4: #{tpu_custom_call.1} parent=1 // loop_header_branch
      %21 = sbr.rel (%p19) target = $region8
    $region5: #{tpu_custom_call.1} parent=1 // loop_body
      %s23 = ssub.s32 %s18, 1
      %s24 = ssub.s32 %s18, 2
      %s31 = sadd.s32 1, %s26
      %p32 = scmp.ge.s32.totalorder %s31, 2
      %s33 = scalar_select %p32, 0, %s31
      %s34 = sadd.s32 1, %s25
      %s35 = scalar_select %p32, %s34, %s25
      %p36 = scmp.ge.s32.totalorder %s35, 2
      %s37 = scalar_select %p36, 0, %s35
      %s39 = sadd.s32 %s38, 1
      %p42 = scmp.eq.s32.totalorder %s18, 3
      %p43 = scmp.ne.s32.totalorder %s38, %s40
      %p44 = scmp.eq.s32.totalorder %s18, 0
      %p45 = por %p43, %p44
      %p46 = scmp.ne.s32.totalorder %s38, %s40
      %p47 = scmp.eq.s32.totalorder %s23, 3
      %p48 = por %p46, %p47
      %p49 = scmp.ne.s32.totalorder %s40, %s41
      %p50 = scmp.eq.s32.totalorder %s23, 0
      %p51 = por %p49, %p50
      %p52 = scmp.ne.s32.totalorder %s40, %s41
      %p53 = scmp.eq.s32.totalorder %s24, 3
      %p54 = por %p52, %p53
      %p56 = scmp.ne.s32.totalorder %s41, %s55
      %p57 = scmp.eq.s32.totalorder %s24, 0
      %p58 = por %p56, %p57
      %s60 = sadd.s32 %s59, 1
      %p63 = scmp.eq.s32.totalorder %s18, 3
      %p64 = scmp.ne.s32.totalorder %s59, %s61
      %p65 = scmp.eq.s32.totalorder %s18, 0
      %p66 = por %p64, %p65
      %p67 = scmp.ne.s32.totalorder %s59, %s61
      %p68 = scmp.eq.s32.totalorder %s23, 3
      %p69 = por %p67, %p68
      %p70 = scmp.ne.s32.totalorder %s61, %s62
      %p71 = scmp.eq.s32.totalorder %s23, 0
      %p72 = por %p70, %p71
      %p73 = scmp.ne.s32.totalorder %s61, %s62
      %p74 = scmp.eq.s32.totalorder %s24, 3
      %p75 = por %p73, %p74
      %p77 = scmp.ne.s32.totalorder %s62, %s76
      %p78 = scmp.eq.s32.totalorder %s24, 0
      %p79 = por %p77, %p78
      %s81 = sadd.s32 %s80, 1
      %p84 = scmp.eq.s32.totalorder %s18, 3
      %p85 = scmp.ne.s32.totalorder %s80, %s82
      %p86 = scmp.eq.s32.totalorder %s18, 0
      %p87 = por %p85, %p86
      %p88 = scmp.ne.s32.totalorder %s80, %s82
      %p89 = scmp.eq.s32.totalorder %s23, 3
      %p90 = por %p88, %p89
      %p91 = scmp.ne.s32.totalorder %s82, %s83
      %p92 = scmp.eq.s32.totalorder %s23, 0
      %p93 = por %p91, %p92
      %p94 = scmp.ne.s32.totalorder %s82, %s83
      %p95 = scmp.eq.s32.totalorder %s24, 3
      %p96 = por %p94, %p95
      %p98 = scmp.ne.s32.totalorder %s83, %s97
      %p99 = scmp.eq.s32.totalorder %s24, 0
      %p100 = por %p98, %p99
      %s102 = sadd.s32 %s101, 1
      %p105 = scmp.eq.s32.totalorder %s18, 3
      %p106 = scmp.ne.s32.totalorder %s101, %s103
      %p107 = scmp.eq.s32.totalorder %s18, 0
      %p108 = por %p106, %p107
      %p109 = scmp.ne.s32.totalorder %s101, %s103
      %p110 = scmp.eq.s32.totalorder %s23, 3
      %p111 = por %p109, %p110
      %p112 = scmp.ne.s32.totalorder %s103, %s104
      %p113 = scmp.eq.s32.totalorder %s23, 0
      %p114 = por %p112, %p113
      %p115 = scmp.ne.s32.totalorder %s103, %s104
      %p116 = scmp.eq.s32.totalorder %s24, 3
      %p117 = por %p115, %p116
      %p119 = scmp.ne.s32.totalorder %s104, %s118
      %p120 = scmp.eq.s32.totalorder %s24, 0
      %p121 = por %p119, %p120
      %s123 = sadd.s32 %s122, 1
      %p126 = scmp.eq.s32.totalorder %s18, 3
      %p127 = scmp.ne.s32.totalorder %s122, %s124
      %p128 = scmp.eq.s32.totalorder %s18, 0
      %p129 = por %p127, %p128
      %p130 = scmp.ne.s32.totalorder %s122, %s124
      %p131 = scmp.eq.s32.totalorder %s23, 3
      %p132 = por %p130, %p131
      %p133 = scmp.ne.s32.totalorder %s124, %s125
      %p134 = scmp.eq.s32.totalorder %s23, 0
      %p135 = por %p133, %p134
      %p136 = scmp.ne.s32.totalorder %s124, %s125
      %p137 = scmp.eq.s32.totalorder %s24, 3
      %p138 = por %p136, %p137
      %p140 = scmp.ne.s32.totalorder %s125, %s139
      %p141 = scmp.eq.s32.totalorder %s24, 0
      %p142 = por %p140, %p141
      %s143 = ssub.s32 %s25, %s37
      %s144 = ssub.s32 %s26, %s33
      %s145 = sor.u32 %s143, %s144
      %p146 = scmp.eq.s32.totalorder %s145, 0
      %s148 = sadd.s32 %s147, 1
      %s149 = scalar_select %p146, %s147, %s148
      %p152 = pneg %p146
      %p153 = scmp.eq.s32.totalorder %s18, 3
      %p154 = por %p152, %p153
      %p155 = scmp.ne.s32.totalorder %s147, %s150
      %p156 = scmp.eq.s32.totalorder %s18, 0
      %p157 = por %p155, %p156
      %p158 = scmp.ne.s32.totalorder %s147, %s150
      %p159 = scmp.eq.s32.totalorder %s23, 3
      %p160 = por %p158, %p159
      %p161 = scmp.ne.s32.totalorder %s150, %s151
      %p162 = scmp.eq.s32.totalorder %s23, 0
      %p163 = por %p161, %p162
      %p164 = scmp.ne.s32.totalorder %s150, %s151
      %p165 = scmp.eq.s32.totalorder %s24, 3
      %p166 = por %p164, %p165
      %p168 = scmp.ne.s32.totalorder %s151, %s167
      %p169 = scmp.eq.s32.totalorder %s24, 0
      %p170 = por %p168, %p169
      %p171 = scmp.le.s32.totalorder 1, %s18
      %p172 = scmp.lt.s32.totalorder %s18, 5
      %p173 = pnand %p171, %p172
      %p174 = pneg %p173
      // Predicated region
      $region9: #{tpu_custom_call.1} parent=5 // pred_check
        _
      $region10: #{tpu_custom_call.1} parent=5 // pred_check_branch
        %176 = sbr.rel (%p173) target = $region12
      $region11: #{tpu_custom_call.1} parent=5 // pred_region
        %s177 = ssub.s32 %s18, 1
        // Predicated region
        $region13: #{tpu_custom_call.1} parent=11 // pred_check
          %p178 = pneg %p51
        $region14: #{tpu_custom_call.1} parent=11 // pred_check_branch
          %180 = sbr.rel (%p178) target = $region16
        $region15: #{tpu_custom_call.1} parent=11 // pred_region
          %s182 = ssub.s32 384, 384
          %183 = vsyncadd [#allocation5], %s182
          %s184 = sshll.u32 [#allocation4], 4
          %s185 = int_to_ptr.vmem [resolvable:$true] %s184
          %190 = dma.hbm_to_vmem [thread:$0]  %s1, 384, %s185, [#allocation5], 64, 64, 4
        $region16: #{tpu_custom_call.1} parent=11 // pred_fallthru
          _
        // Predicated region
        $region17: #{tpu_custom_call.1} parent=11 // pred_check
          %p191 = pneg %p72
        $region18: #{tpu_custom_call.1} parent=11 // pred_check_branch
          %193 = sbr.rel (%p191) target = $region20
        $region19: #{tpu_custom_call.1} parent=11 // pred_region
          %s195 = ssub.s32 6144, 6144
          %196 = vsyncadd [#allocation8], %s195
          %s197 = sshll.u32 [#allocation7], 4
          %s198 = int_to_ptr.vmem [resolvable:$true] %s197
          %203 = dma.hbm_to_vmem [thread:$0]  %s2, 6144, %s198, [#allocation8], 64, 64, 4
        $region20: #{tpu_custom_call.1} parent=11 // pred_fallthru
          _
        // Predicated region
        $region21: #{tpu_custom_call.1} parent=11 // pred_check
          %p204 = pneg %p93
        $region22: #{tpu_custom_call.1} parent=11 // pred_check_branch
          %206 = sbr.rel (%p204) target = $region24
        $region23: #{tpu_custom_call.1} parent=11 // pred_region
          %s208 = ssub.s32 96, 96
          %209 = vsyncadd [#allocation8], %s208
          %s210 = sshll.u32 [#allocation9], 4
          %s211 = int_to_ptr.vmem [resolvable:$true] %s210
          %216 = dma.hbm_to_vmem [thread:$0]  %s3, 96, %s211, [#allocation8], 16, 16, 1
        $region24: #{tpu_custom_call.1} parent=11 // pred_fallthru
          _
        // Predicated region
        $region25: #{tpu_custom_call.1} parent=11 // pred_check
          %p217 = pneg %p114
        $region26: #{tpu_custom_call.1} parent=11 // pred_check_branch
          %219 = sbr.rel (%p217) target = $region28
        $region27: #{tpu_custom_call.1} parent=11 // pred_region
          %s221 = ssub.s32 1024, 1024
          %222 = vsyncadd [#allocation11], %s221
          %s223 = sshll.u32 [#allocation10], 4
          %s224 = int_to_ptr.vmem [resolvable:$true] %s223
          %229 = dma.hbm_to_vmem [thread:$0]  %s4, 1024, %s224, [#allocation11], 64, 64, 4
        $region28: #{tpu_custom_call.1} parent=11 // pred_fallthru
          _
        // Predicated region
        $region29: #{tpu_custom_call.1} parent=11 // pred_check
          %p230 = pneg %p135
        $region30: #{tpu_custom_call.1} parent=11 // pred_check_branch
          %232 = sbr.rel (%p230) target = $region32
        $region31: #{tpu_custom_call.1} parent=11 // pred_region
          _
        $region32: #{tpu_custom_call.1} parent=11 // pred_fallthru
          _
      $region12: #{tpu_custom_call.1} parent=5 // pred_fallthru
        _
      %p233 = scmp.lt.s32.totalorder %s18, 4
      // Predicated region
      $region33: #{tpu_custom_call.1} parent=5 // pred_check
        %p234 = pneg %p233
      $region34: #{tpu_custom_call.1} parent=5 // pred_check_branch
        %236 = sbr.rel (%p234) target = $region36
      $region35: #{tpu_custom_call.1} parent=5 // pred_region
        _
      $region36: #{tpu_custom_call.1} parent=5 // pred_fallthru
        _
      %p237 = scmp.le.s32.totalorder 1, %s18
      %p238 = scmp.lt.s32.totalorder %s18, 5
      %p239 = pnand %p237, %p238
      %p240 = pneg %p239
      // Predicated region
      $region37: #{tpu_custom_call.1} parent=5 // pred_check
        _
      $region38: #{tpu_custom_call.1} parent=5 // pred_check_branch
        %242 = sbr.rel (%p239) target = $region40
      $region39: #{tpu_custom_call.1} parent=5 // pred_region
        %s243 = ssub.s32 %s18, 1
        // Predicated region
        $region41: #{tpu_custom_call.1} parent=39 // pred_check
          %p244 = pneg %p51
        $region42: #{tpu_custom_call.1} parent=39 // pred_check_branch
          %246 = sbr.rel (%p244) target = $region44
        $region43: #{tpu_custom_call.1} parent=39 // pred_region
          %247 = dma.done [#allocation5], 384
        $region44: #{tpu_custom_call.1} parent=39 // pred_fallthru
          _
        // Predicated region
        $region45: #{tpu_custom_call.1} parent=39 // pred_check
          %p248 = pneg %p72
        $region46: #{tpu_custom_call.1} parent=39 // pred_check_branch
          %250 = sbr.rel (%p248) target = $region48
        $region47: #{tpu_custom_call.1} parent=39 // pred_region
          %251 = dma.done [#allocation8], 6144
        $region48: #{tpu_custom_call.1} parent=39 // pred_fallthru
          _
        // Predicated region
        $region49: #{tpu_custom_call.1} parent=39 // pred_check
          %p252 = pneg %p93
        $region50: #{tpu_custom_call.1} parent=39 // pred_check_branch
          %254 = sbr.rel (%p252) target = $region52
        $region51: #{tpu_custom_call.1} parent=39 // pred_region
          %255 = dma.done [#allocation8], 96
        $region52: #{tpu_custom_call.1} parent=39 // pred_fallthru
          _
        // Predicated region
        $region53: #{tpu_custom_call.1} parent=39 // pred_check
          %p256 = pneg %p114
        $region54: #{tpu_custom_call.1} parent=39 // pred_check_branch
          %258 = sbr.rel (%p256) target = $region56
        $region55: #{tpu_custom_call.1} parent=39 // pred_region
          %259 = dma.done [#allocation11], 1024
        $region56: #{tpu_custom_call.1} parent=39 // pred_fallthru
          _
        %p260 = pneg %p51
        %p261 = pneg %p48
        %p262 = pneg %p72
        %p263 = pneg %p69
        %p264 = pneg %p93
        %p265 = pneg %p90
        %p266 = pneg %p114
        %p267 = pneg %p111
        %p268 = pneg %p135
        %p269 = pneg %p132
        %p270 = pneg %p163
        %p271 = pneg %p160
        %s272 = sand.u32 %s150, 1
        %s273 = scalar_lea.sflag [#allocation6], %s272
        %s274 = sand.u32 %s150, 1
        %s275 = smul.addr %s274, 8
        %s276 = scalar_lea.vmem [#allocation12], %s275
        %s277 = smul.u32 2, %s28
        %p279 = scmp.lt.s32.totalorder %s28, 0
        %s280 = ssub.s32 0, %s28
        %s281 = scalar_select %p279, %s280, %s28
        %s282 = sand.u32 %s281, 1
        %s283 = ssub.s32 0, %s282
        %s284 = scalar_select %p279, %s283, %s282
        %p285 = scmp.ne.s32.totalorder %s284, 0
        %p286 = scmp.lt.s32.totalorder %s284, 0
        %p287 = pnand %p286, %p285
        %p288 = pneg %p287
        %s289 = sadd.s32 %s284, 2
        %s290 = scalar_select %p288, %s289, %s284
        %p291 = scmp.eq.s32.totalorder %s28, 0
        // Predicated region
        $region57: #{tpu_custom_call.1} parent=39 // pred_check
          %p292 = pneg %p291
        $region58: #{tpu_custom_call.1} parent=39 // pred_check_branch
          %294 = sbr.rel (%p292) target = $region60
        $region59: #{tpu_custom_call.1} parent=39 // pred_region
          %s295 = smul.u32 %s28, 16
          %s296 = sshra.s32 %s295, 3
          %s297 = sand.u32 %s295, 7
          %s298 = smul.u32 %s27, 6
          %s299 = sadd.s32 %s296, %s298
          %s300 = smul.addr %s299, 64
          %s301 = scalar_lea.hbm %s0, %s300
          %s302 = smul.u32 %s290, 4
          %s303 = smul.addr %s302, 4
          %s304 = scalar_lea.vmem [#allocation2], %s303
          %s305 = scalar_lea.sflag [#allocation3], %s290
          // Predicated region
          $region61: #{tpu_custom_call.1} parent=59 // pred_check
            _
          $region62: #{tpu_custom_call.1} parent=59 // pred_check_branch
            %307 = sbr.rel target = $region64
          $region63: #{tpu_custom_call.1} parent=59 // pred_region
            %308 = sst [smem:[#allocation15]] [#allocation14]
            %309 = sst [smem:[#allocation16]] [#allocation13]
          $region64: #{tpu_custom_call.1} parent=59 // pred_fallthru
            _
          %311 = shalt.err (0)
          %s313 = sshll.u32 %s304, 4
          %s314 = int_to_ptr.vmem [resolvable:$true] %s313
          %316 = dma.hbm_to_vmem [thread:$0]  %s301, 256, %s314, %s305
        $region60: #{tpu_custom_call.1} parent=39 // pred_fallthru
          _
        %v317 = vlaneseq
        %v318 = vshrl.u32 %v317, 7
        %v319 = vadd.s32 %v318, 8
        %v320 = vadd.s32 %v318, 16
        %v321 = vadd.s32 %v318, 24
        %s322 = smul.u32 %s28, 16
        %s323 = ssub.s32 %s322, 8
        %v324 = vstv %s323
        %v325 = vadd.s32 %v318, %v324
        %v326 = vadd.s32 %v319, %v324
        %v327 = vadd.s32 %v320, %v324
        %v328 = vadd.s32 %v321, %v324
        %vm329 = vcmp.ge.s32.totalorder %v325, 0
        %vm330 = vcmp.ge.s32.totalorder %v326, 0
        %vm331 = vcmp.ge.s32.totalorder %v327, 0
        %vm332 = vcmp.ge.s32.totalorder %v328, 0
        %vm333 = vcmp.lt.s32.totalorder %v325, 32
        %vm334 = vcmp.lt.s32.totalorder %v326, 32
        %vm335 = vcmp.lt.s32.totalorder %v327, 32
        %vm336 = vcmp.lt.s32.totalorder %v328, 32
        %vm337 = vmand %vm329, %vm333
        %vm338 = vmand %vm330, %vm334
        %vm339 = vmand %vm331, %vm335
        %vm340 = vmand %vm332, %vm336
        %s341 = smul.u32 %s290, 4
        %s342 = smul.addr %s341, 4
        %s343 = scalar_lea.vmem [#allocation2], %s342
        %s344 = scalar_lea.sflag [#allocation3], %s290
        %s345 = smul.u32 4, 1
        %s346 = smul.u32 %s345, 4
        %s347 = smul.u32 %s346, 1
        %s348 = sshll.u32 %s347, 4
        %349 = dma.done %s344, %s348
        %s350 = sadd.s32 %s28, 1
        %p351 = scmp.lt.s32.totalorder %s350, 2
        // Predicated region
        $region65: #{tpu_custom_call.1} parent=39 // pred_check
          %p352 = pneg %p351
        $region66: #{tpu_custom_call.1} parent=39 // pred_check_branch
          %354 = sbr.rel (%p352) target = $region68
        $region67: #{tpu_custom_call.1} parent=39 // pred_region
          %s355 = ssub.s32 1, %s290
          %s356 = smul.u32 %s350, 16
          %s357 = sshra.s32 %s356, 3
          %s358 = sand.u32 %s356, 7
          %s359 = smul.u32 %s27, 6
          %s360 = sadd.s32 %s357, %s359
          %s361 = smul.addr %s360, 64
          %s362 = scalar_lea.hbm %s0, %s361
          %s363 = smul.u32 %s355, 4
          %s364 = smul.addr %s363, 4
          %s365 = scalar_lea.vmem [#allocation2], %s364
          %s366 = scalar_lea.sflag [#allocation3], %s355
          // Predicated region
          $region69: #{tpu_custom_call.1} parent=67 // pred_check
            _
          $region70: #{tpu_custom_call.1} parent=67 // pred_check_branch
            %368 = sbr.rel target = $region72
          $region71: #{tpu_custom_call.1} parent=67 // pred_region
            %369 = sst [smem:[#allocation15]] [#allocation18]
            %370 = sst [smem:[#allocation16]] [#allocation17]
          $region72: #{tpu_custom_call.1} parent=67 // pred_fallthru
            _
          %372 = shalt.err (0)
          %s374 = sshll.u32 %s365, 4
          %s375 = int_to_ptr.vmem [resolvable:$true] %s374
          %377 = dma.hbm_to_vmem [thread:$0]  %s362, 256, %s375, %s366
        $region68: #{tpu_custom_call.1} parent=39 // pred_fallthru
          _
        %v378 = vld [vmem:[%s343] sm:$0xf]
        %v379 = vld [vmem:[%s343 + $0x4] sm:$0xf]
        %v380 = vld [vmem:[%s343 + $0x8] sm:$0xf]
        %v381 = vld [vmem:[%s343 + $0xc] sm:$0xf]
        %v382 = vld [vmem:[#allocation10] sm:$0xf]
        %v383 = vld [vmem:[#allocation10 + $0x4] sm:$0xf]
        %v384 = vld [vmem:[#allocation10 + $0x8] sm:$0xf]
        %v385 = vld [vmem:[#allocation10 + $0xc] sm:$0xf]
        %v386 = vld [vmem:[#allocation10 + $0x10] sm:$0xf]
        %v387 = vld [vmem:[#allocation10 + $0x14] sm:$0xf]
        %v388 = vld [vmem:[#allocation10 + $0x18] sm:$0xf]
        %v389 = vld [vmem:[#allocation10 + $0x1c] sm:$0xf]
        %v390 = vld [vmem:[#allocation10 + $0x20] sm:$0xf]
        %v391 = vld [vmem:[#allocation10 + $0x24] sm:$0xf]
        %v392 = vld [vmem:[#allocation10 + $0x28] sm:$0xf]
        %v393 = vld [vmem:[#allocation10 + $0x2c] sm:$0xf]
        %v394 = vld [vmem:[#allocation10 + $0x30] sm:$0xf]
        %v395 = vld [vmem:[#allocation10 + $0x34] sm:$0xf]
        %v396 = vld [vmem:[#allocation10 + $0x38] sm:$0xf]
        %v397 = vld [vmem:[#allocation10 + $0x3c] sm:$0xf]
        %v398 = vld [vmem:[%s5] sm:$0x1]
        %v400 = vlaneseq
        %v401 = vshrl.u32 %v400, 7
        %v402 = vsub.s32 0, %v401
        %v403 = vrot.slane %v398, %v402
        %v407 = vunpack.c.l.b16 %v379
        %v408 = vunpack.c.l.b16 %v380
        %v409 = vpack.c.b16 %v408, %v407
        %v427 = vunpack.c.l.b16 %v382
        %v428 = vunpack.c.l.b16 %v383
        %v429 = vunpack.c.l.b16 %v384
        %v430 = vunpack.c.l.b16 %v385
        %v431 = vunpack.c.l.b16 %v386
        %v432 = vunpack.c.l.b16 %v387
        %v433 = vunpack.c.l.b16 %v388
        %v434 = vunpack.c.l.b16 %v389
        %v435 = vunpack.c.l.b16 %v390
        %v436 = vunpack.c.l.b16 %v391
        %v437 = vunpack.c.l.b16 %v392
        %v438 = vunpack.c.l.b16 %v393
        %v439 = vunpack.c.l.b16 %v394
        %v440 = vunpack.c.l.b16 %v395
        %v441 = vunpack.c.l.b16 %v396
        %v442 = vunpack.c.l.b16 %v397
        %v443 = vpack.c.b16 %v428, %v427
        %v444 = vpack.c.b16 %v430, %v429
        %v445 = vpack.c.b16 %v432, %v431
        %v446 = vpack.c.b16 %v434, %v433
        %v447 = vpack.c.b16 %v436, %v435
        %v448 = vpack.c.b16 %v438, %v437
        %v449 = vpack.c.b16 %v440, %v439
        %v450 = vpack.c.b16 %v442, %v441
        %459 = vmatprep.subr.bf16.mxu0 0
        %460 = vmatpush1.bf16.msra.mxu0 %v450
        %461 = vmatprep.subr.bf16.mxu0 0
        %462 = vmatpush1.bf16.msra.mxu0 %v449
        %463 = vmatprep.subr.bf16.mxu0 0
        %464 = vmatpush1.bf16.msra.mxu0 %v448
        %465 = vmatprep.subr.bf16.mxu0 0
        %466 = vmatpush1.bf16.msra.mxu0 %v447
        %467 = vmatprep.subr.bf16.mxu0 0
        %468 = vmatpush1.bf16.msra.mxu0 %v446
        %469 = vmatprep.subr.bf16.mxu0 0
        %470 = vmatpush1.bf16.msra.mxu0 %v445
        %471 = vmatprep.subr.bf16.mxu0 0
        %472 = vmatpush1.bf16.msra.mxu0 %v444
        %473 = vmatprep.subr.bf16.mxu0 0
        %474 = vmatpush1.bf16.msra.mxu0 %v443
        %475 = vmatprep.subr.bf16.mxu0 0
        %476 = vmatpush2.bf16.msra.mxu0 0
        %477 = vmatprep.subr.bf16.mxu0 0
        %478 = vmatpush2.bf16.msra.mxu0 0
        %479 = vmatprep.subr.bf16.mxu0 0
        %480 = vmatpush2.bf16.msra.mxu0 0
        %481 = vmatprep.subr.bf16.mxu0 0
        %482 = vmatpush2.bf16.msra.mxu0 0
        %483 = vmatprep.subr.bf16.mxu0 0
        %484 = vmatpush2.bf16.msra.mxu0 0
        %485 = vmatprep.subr.bf16.mxu0 0
        %486 = vmatpush2.bf16.msra.mxu0 0
        %487 = vmatprep.subr.bf16.mxu0 0
        %488 = vmatpush2.bf16.msra.mxu0 0
        %489 = vmatprep.subr.bf16.mxu0 0
        %490 = vmatpush2.bf16.msra.mxu0 0
        %491 = vmatprep.mubr.bf16.mxu0 0
        %492 = vmatmul.mubr.bf16.gmra.mxu0 %v409
        %v493 = vpop.f32.mrf.mxu0
        %v494 = vadd.f32 %v403, %v493
        %v495 = vpop.f32.mrf.mxu0
        %v496 = vpop.f32.mrf.mxu0
        %v497 = vadd.f32 %v403, %v496
        %v498 = vpop.f32.mrf.mxu0
        %499 = vdwg.mxu0
        %v500 = vunpack.c.l.bf16 %v378
        %v501 = vunpack.c.l.bf16 %v379
        %v502 = vunpack.c.l.bf16 %v380
        %v503 = vunpack.c.l.bf16 %v381
        %v504 = vld [vmem:[#allocation4] sm:$0x7]
        %v505 = vlaneseq
        %v506 = vshrl.u32 %v505, 7
        %v507 = vsub.s32 1, %v506
        %v508 = vrot.slane %v504, %v507
        %v509 = vmul.f32 %v500, %v508
        %v510 = vmul.f32 %v501, %v508
        %v511 = vmul.f32 %v502, %v508
        %v512 = vmul.f32 %v503, %v508
        %v513 = vrot.slane %v500, 7
        %v514 = vrot.slane %v501, 7
        %v515 = vrot.slane %v502, 7
        %v516 = vrot.slane %v503, 7
        %vm517 = vcmp.lt.s32.totalorder %v318, 1
        %v518 = vsel %vm517, %v515, %v516
        %v519 = vsel %vm517, %v514, %v515
        %v520 = vsel %vm517, %v513, %v514
        %v521 = vsel %vm517, %v516, %v513
        %v522 = vlaneseq
        %v523 = vshrl.u32 %v522, 7
        %v524 = vsub.s32 0, %v523
        %v525 = vrot.slane %v504, %v524
        %v526 = vmul.f32 %v521, %v525
        %v527 = vmul.f32 %v520, %v525
        %v528 = vmul.f32 %v519, %v525
        %v529 = vmul.f32 %v518, %v525
        %v530 = vadd.f32 %v509, %v526
        %v531 = vadd.f32 %v510, %v527
        %v532 = vadd.f32 %v511, %v528
        %v533 = vadd.f32 %v512, %v529
        %v534 = vrot.slane %v500, 1
        %v535 = vrot.slane %v501, 1
        %v536 = vrot.slane %v502, 1
        %v537 = vrot.slane %v503, 1
        %vm538 = vcmp.lt.s32.totalorder %v318, 7
        %v539 = vsel %vm538, %v536, %v537
        %v540 = vsel %vm538, %v535, %v536
        %v541 = vsel %vm538, %v534, %v535
        %v542 = vsel %vm538, %v537, %v534
        %v543 = vlaneseq
        %v544 = vshrl.u32 %v543, 7
        %v545 = vsub.s32 2, %v544
        %v546 = vrot.slane %v504, %v545
        %v547 = vmul.f32 %v541, %v546
        %v548 = vmul.f32 %v540, %v546
        %v549 = vmul.f32 %v539, %v546
        %v550 = vmul.f32 %v542, %v546
        %v551 = vadd.f32 %v530, %v547
        %v552 = vadd.f32 %v531, %v548
        %v553 = vadd.f32 %v532, %v549
        %v554 = vadd.f32 %v533, %v550
        %v555 = vpack.c.bf16 %v552, %v551
        %v556 = vpack.c.bf16 %v554, %v553
        %v557 = vld [vmem:[#allocation7] sm:$0xf]
        %v558 = vld [vmem:[#allocation7 + $0x4] sm:$0xf]
        %v559 = vld [vmem:[#allocation7 + $0x8] sm:$0xf]
        %v560 = vld [vmem:[#allocation7 + $0xc] sm:$0xf]
        %v561 = vld [vmem:[#allocation7 + $0x10] sm:$0xf]
        %v562 = vld [vmem:[#allocation7 + $0x14] sm:$0xf]
        %v563 = vld [vmem:[#allocation7 + $0x18] sm:$0xf]
        %v564 = vld [vmem:[#allocation7 + $0x1c] sm:$0xf]
        %v565 = vld [vmem:[#allocation7 + $0x20] sm:$0xf]
        %v566 = vld [vmem:[#allocation7 + $0x24] sm:$0xf]
        %v567 = vld [vmem:[#allocation7 + $0x28] sm:$0xf]
        %v568 = vld [vmem:[#allocation7 + $0x2c] sm:$0xf]
        %v569 = vld [vmem:[#allocation7 + $0x30] sm:$0xf]
        %v570 = vld [vmem:[#allocation7 + $0x34] sm:$0xf]
        %v571 = vld [vmem:[#allocation7 + $0x38] sm:$0xf]
        %v572 = vld [vmem:[#allocation7 + $0x3c] sm:$0xf]
        %v573 = vld [vmem:[#allocation9] sm:$0x1]
        %v575 = vlaneseq
        %v576 = vshrl.u32 %v575, 7
        %v577 = vsub.s32 0, %v576
        %v578 = vrot.slane %v573, %v577
        %v596 = vunpack.c.l.b16 %v557
        %v597 = vunpack.c.l.b16 %v558
        %v598 = vunpack.c.l.b16 %v559
        %v599 = vunpack.c.l.b16 %v560
        %v600 = vunpack.c.l.b16 %v561
        %v601 = vunpack.c.l.b16 %v562
        %v602 = vunpack.c.l.b16 %v563
        %v603 = vunpack.c.l.b16 %v564
        %v604 = vunpack.c.l.b16 %v565
        %v605 = vunpack.c.l.b16 %v566
        %v606 = vunpack.c.l.b16 %v567
        %v607 = vunpack.c.l.b16 %v568
        %v608 = vunpack.c.l.b16 %v569
        %v609 = vunpack.c.l.b16 %v570
        %v610 = vunpack.c.l.b16 %v571
        %v611 = vunpack.c.l.b16 %v572
        %v612 = vpack.c.b16 %v597, %v596
        %v613 = vpack.c.b16 %v599, %v598
        %v614 = vpack.c.b16 %v601, %v600
        %v615 = vpack.c.b16 %v603, %v602
        %v616 = vpack.c.b16 %v605, %v604
        %v617 = vpack.c.b16 %v607, %v606
        %v618 = vpack.c.b16 %v609, %v608
        %v619 = vpack.c.b16 %v611, %v610
        %628 = vmatprep.subr.bf16.mxu0 0
        %629 = vmatpush1.bf16.msra.mxu0 %v619
        %630 = vmatprep.subr.bf16.mxu0 0
        %631 = vmatpush1.bf16.msra.mxu0 %v618
        %632 = vmatprep.subr.bf16.mxu0 0
        %633 = vmatpush1.bf16.msra.mxu0 %v617
        %634 = vmatprep.subr.bf16.mxu0 0
        %635 = vmatpush1.bf16.msra.mxu0 %v616
        %636 = vmatprep.subr.bf16.mxu0 0
        %637 = vmatpush1.bf16.msra.mxu0 %v615
        %638 = vmatprep.subr.bf16.mxu0 0
        %639 = vmatpush1.bf16.msra.mxu0 %v614
        %640 = vmatprep.subr.bf16.mxu0 0
        %641 = vmatpush1.bf16.msra.mxu0 %v613
        %642 = vmatprep.subr.bf16.mxu0 0
        %643 = vmatpush1.bf16.msra.mxu0 %v612
        %644 = vmatprep.subr.bf16.mxu0 0
        %645 = vmatpush2.bf16.msra.mxu0 0
        %646 = vmatprep.subr.bf16.mxu0 0
        %647 = vmatpush2.bf16.msra.mxu0 0
        %648 = vmatprep.subr.bf16.mxu0 0
        %649 = vmatpush2.bf16.msra.mxu0 0
        %650 = vmatprep.subr.bf16.mxu0 0
        %651 = vmatpush2.bf16.msra.mxu0 0
        %652 = vmatprep.subr.bf16.mxu0 0
        %653 = vmatpush2.bf16.msra.mxu0 0
        %654 = vmatprep.subr.bf16.mxu0 0
        %655 = vmatpush2.bf16.msra.mxu0 0
        %656 = vmatprep.subr.bf16.mxu0 0
        %657 = vmatpush2.bf16.msra.mxu0 0
        %658 = vmatprep.subr.bf16.mxu0 0
        %659 = vmatpush2.bf16.msra.mxu0 0
        %660 = vmatprep.mubr.bf16.mxu0 0
        %661 = vmatmul.mubr.bf16.gmra.mxu0 %v555
        %v662 = vpop.f32.mrf.mxu0
        %v663 = vadd.f32 %v578, %v662
        %v664 = vpop.f32.mrf.mxu0
        %v665 = vpop.f32.mrf.mxu0
        %v666 = vadd.f32 %v578, %v665
        %v667 = vpop.f32.mrf.mxu0
        %668 = vmatprep.mubr.bf16.mxu0 0
        %669 = vmatmul.mubr.bf16.gmra.mxu0 %v556
        %v670 = vpop.f32.mrf.mxu0
        %v671 = vadd.f32 %v578, %v670
        %v672 = vpop.f32.mrf.mxu0
        %v673 = vpop.f32.mrf.mxu0
        %v674 = vadd.f32 %v578, %v673
        %v675 = vpop.f32.mrf.mxu0
        %676 = vdwg.mxu0
        %v677 = vmin.f32 %v663, 20.0
        %v678 = vmin.f32 %v666, 20.0
        %v679 = vmin.f32 %v671, 20.0
        %v680 = vmin.f32 %v674, 20.0
        %v681 = vmul.f32 %v677, 1.442695
        %v682 = vpow.pop %v681
        %v683 = vmul.f32 %v678, 1.442695
        %v684 = vpow.pop %v683
        %v685 = vmul.f32 %v679, 1.442695
        %v686 = vpow.pop %v685
        %v687 = vmul.f32 %v680, 1.442695
        %v688 = vpow.pop %v687
        %v689 = vadd.f32 %v682, 2.0
        %v690 = vadd.f32 %v684, 2.0
        %v691 = vadd.f32 %v686, 2.0
        %v692 = vadd.f32 %v688, 2.0
        %v693 = vmul.f32 %v682, %v689
        %v694 = vmul.f32 %v684, %v690
        %v695 = vmul.f32 %v686, %v691
        %v696 = vmul.f32 %v688, %v692
        %v697 = vmul.f32 %v663, %v693
        %v698 = vmul.f32 %v666, %v694
        %v699 = vmul.f32 %v671, %v695
        %v700 = vmul.f32 %v674, %v696
        %v701 = vadd.f32 %v693, 2.0
        %v702 = vadd.f32 %v694, 2.0
        %v703 = vadd.f32 %v695, 2.0
        %v704 = vadd.f32 %v696, 2.0
        %v705 = vrcp.pop %v701
        %v706 = vrcp.pop %v702
        %v707 = vrcp.pop %v703
        %v708 = vrcp.pop %v704
        %v709 = vmul.f32 %v697, %v705
        %v710 = vmul.f32 %v698, %v706
        %v711 = vmul.f32 %v699, %v707
        %v712 = vmul.f32 %v700, %v708
        %vm713 = vcmp.gt.f32.partialorder %v663, 20.0
        %vm714 = vcmp.gt.f32.partialorder %v666, 20.0
        %vm715 = vcmp.gt.f32.partialorder %v671, 20.0
        %vm716 = vcmp.gt.f32.partialorder %v674, 20.0
        %v717 = vsel %vm713, %v663, %v709
        %v718 = vsel %vm714, %v666, %v710
        %v719 = vsel %vm715, %v671, %v711
        %v720 = vsel %vm716, %v674, %v712
        %v721 = vsel %vm337, 1, 0
        %v722 = vsel %vm338, 1, 0
        %v723 = vsel %vm339, 1, 0
        %v724 = vsel %vm340, 1, 0
        %vm725 = vcmp.eq.s32.totalorder %v721, 1
        %vm726 = vcmp.eq.s32.totalorder %v722, 1
        %vm727 = vcmp.eq.s32.totalorder %v723, 1
        %vm728 = vcmp.eq.s32.totalorder %v724, 1
        %v729 = vsel %vm725, %v717, 0.0
        %v730 = vsel %vm726, %v718, 0.0
        %v731 = vsel %vm727, %v719, 0.0
        %v732 = vsel %vm728, %v720, 0.0
        %s733 = scalar_lea.vmem [#allocation4], 4
        %v734 = vld [vmem:[%s733] sm:$0x7]
        %v735 = vlaneseq
        %v736 = vshrl.u32 %v735, 7
        %v737 = vsub.s32 1, %v736
        %v738 = vrot.slane %v734, %v737
        %v739 = vmul.f32 %v729, %v738
        %v740 = vmul.f32 %v730, %v738
        %v741 = vmul.f32 %v731, %v738
        %v742 = vmul.f32 %v732, %v738
        %v743 = vrot.slane %v729, 7
        %v744 = vrot.slane %v730, 7
        %v745 = vrot.slane %v731, 7
        %v746 = vrot.slane %v732, 7
        %v747 = vsel %vm517, %v745, %v746
        %v748 = vsel %vm517, %v744, %v745
        %v749 = vsel %vm517, %v743, %v744
        %v750 = vsel %vm517, %v746, %v743
        %v751 = vlaneseq
        %v752 = vshrl.u32 %v751, 7
        %v753 = vsub.s32 0, %v752
        %v754 = vrot.slane %v734, %v753
        %v755 = vmul.f32 %v750, %v754
        %v756 = vmul.f32 %v749, %v754
        %v757 = vmul.f32 %v748, %v754
        %v758 = vmul.f32 %v747, %v754
        %v759 = vadd.f32 %v739, %v755
        %v760 = vadd.f32 %v740, %v756
        %v761 = vadd.f32 %v741, %v757
        %v762 = vadd.f32 %v742, %v758
        %v763 = vrot.slane %v729, 1
        %v764 = vrot.slane %v730, 1
        %v765 = vrot.slane %v731, 1
        %v766 = vrot.slane %v732, 1
        %v767 = vsel %vm538, %v765, %v766
        %v768 = vsel %vm538, %v764, %v765
        %v769 = vsel %vm538, %v763, %v764
        %v770 = vsel %vm538, %v766, %v763
        %v771 = vlaneseq
        %v772 = vshrl.u32 %v771, 7
        %v773 = vsub.s32 2, %v772
        %v774 = vrot.slane %v734, %v773
        %v775 = vmul.f32 %v769, %v774
        %v776 = vmul.f32 %v768, %v774
        %v777 = vmul.f32 %v767, %v774
        %v778 = vmul.f32 %v770, %v774
        %v779 = vadd.f32 %v759, %v775
        %v780 = vadd.f32 %v760, %v776
        %v781 = vadd.f32 %v761, %v777
        %v782 = vadd.f32 %v762, %v778
        %v783 = vpack.c.bf16 %v780, %v779
        %v784 = vpack.c.bf16 %v782, %v781
        %s785 = scalar_lea.vmem [#allocation7], 64
        %v786 = vld [vmem:[%s785] sm:$0xf]
        %v787 = vld [vmem:[%s785 + $0x4] sm:$0xf]
        %v788 = vld [vmem:[%s785 + $0x8] sm:$0xf]
        %v789 = vld [vmem:[%s785 + $0xc] sm:$0xf]
        %v790 = vld [vmem:[%s785 + $0x10] sm:$0xf]
        %v791 = vld [vmem:[%s785 + $0x14] sm:$0xf]
        %v792 = vld [vmem:[%s785 + $0x18] sm:$0xf]
        %v793 = vld [vmem:[%s785 + $0x1c] sm:$0xf]
        %v794 = vld [vmem:[%s785 + $0x20] sm:$0xf]
        %v795 = vld [vmem:[%s785 + $0x24] sm:$0xf]
        %v796 = vld [vmem:[%s785 + $0x28] sm:$0xf]
        %v797 = vld [vmem:[%s785 + $0x2c] sm:$0xf]
        %v798 = vld [vmem:[%s785 + $0x30] sm:$0xf]
        %v799 = vld [vmem:[%s785 + $0x34] sm:$0xf]
        %v800 = vld [vmem:[%s785 + $0x38] sm:$0xf]
        %v801 = vld [vmem:[%s785 + $0x3c] sm:$0xf]
        %s802 = scalar_lea.vmem [#allocation9], 1
        %v803 = vld [vmem:[%s802] sm:$0x1]
        %v805 = vlaneseq
        %v806 = vshrl.u32 %v805, 7
        %v807 = vsub.s32 0, %v806
        %v808 = vrot.slane %v803, %v807
        %v826 = vunpack.c.l.b16 %v786
        %v827 = vunpack.c.l.b16 %v787
        %v828 = vunpack.c.l.b16 %v788
        %v829 = vunpack.c.l.b16 %v789
        %v830 = vunpack.c.l.b16 %v790
        %v831 = vunpack.c.l.b16 %v791
        %v832 = vunpack.c.l.b16 %v792
        %v833 = vunpack.c.l.b16 %v793
        %v834 = vunpack.c.l.b16 %v794
        %v835 = vunpack.c.l.b16 %v795
        %v836 = vunpack.c.l.b16 %v796
        %v837 = vunpack.c.l.b16 %v797
        %v838 = vunpack.c.l.b16 %v798
        %v839 = vunpack.c.l.b16 %v799
        %v840 = vunpack.c.l.b16 %v800
        %v841 = vunpack.c.l.b16 %v801
        %v842 = vpack.c.b16 %v827, %v826
        %v843 = vpack.c.b16 %v829, %v828
        %v844 = vpack.c.b16 %v831, %v830
        %v845 = vpack.c.b16 %v833, %v832
        %v846 = vpack.c.b16 %v835, %v834
        %v847 = vpack.c.b16 %v837, %v836
        %v848 = vpack.c.b16 %v839, %v838
        %v849 = vpack.c.b16 %v841, %v840
        %858 = vmatprep.subr.bf16.mxu0 0
        %859 = vmatpush1.bf16.msra.mxu0 %v849
        %860 = vmatprep.subr.bf16.mxu0 0
        %861 = vmatpush1.bf16.msra.mxu0 %v848
        %862 = vmatprep.subr.bf16.mxu0 0
        %863 = vmatpush1.bf16.msra.mxu0 %v847
        %864 = vmatprep.subr.bf16.mxu0 0
        %865 = vmatpush1.bf16.msra.mxu0 %v846
        %866 = vmatprep.subr.bf16.mxu0 0
        %867 = vmatpush1.bf16.msra.mxu0 %v845
        %868 = vmatprep.subr.bf16.mxu0 0
        %869 = vmatpush1.bf16.msra.mxu0 %v844
        %870 = vmatprep.subr.bf16.mxu0 0
        %871 = vmatpush1.bf16.msra.mxu0 %v843
        %872 = vmatprep.subr.bf16.mxu0 0
        %873 = vmatpush1.bf16.msra.mxu0 %v842
        %874 = vmatprep.subr.bf16.mxu0 0
        %875 = vmatpush2.bf16.msra.mxu0 0
        %876 = vmatprep.subr.bf16.mxu0 0
        %877 = vmatpush2.bf16.msra.mxu0 0
        %878 = vmatprep.subr.bf16.mxu0 0
        %879 = vmatpush2.bf16.msra.mxu0 0
        %880 = vmatprep.subr.bf16.mxu0 0
        %881 = vmatpush2.bf16.msra.mxu0 0
        %882 = vmatprep.subr.bf16.mxu0 0
        %883 = vmatpush2.bf16.msra.mxu0 0
        %884 = vmatprep.subr.bf16.mxu0 0
        %885 = vmatpush2.bf16.msra.mxu0 0
        %886 = vmatprep.subr.bf16.mxu0 0
        %887 = vmatpush2.bf16.msra.mxu0 0
        %888 = vmatprep.subr.bf16.mxu0 0
        %889 = vmatpush2.bf16.msra.mxu0 0
        %890 = vmatprep.mubr.bf16.mxu0 0
        %891 = vmatmul.mubr.bf16.gmra.mxu0 %v783
        %v892 = vpop.f32.mrf.mxu0
        %v893 = vadd.f32 %v808, %v892
        %v894 = vpop.f32.mrf.mxu0
        %v895 = vpop.f32.mrf.mxu0
        %v896 = vadd.f32 %v808, %v895
        %v897 = vpop.f32.mrf.mxu0
        %898 = vmatprep.mubr.bf16.mxu0 0
        %899 = vmatmul.mubr.bf16.gmra.mxu0 %v784
        %v900 = vpop.f32.mrf.mxu0
        %v901 = vadd.f32 %v808, %v900
        %v902 = vpop.f32.mrf.mxu0
        %v903 = vpop.f32.mrf.mxu0
        %v904 = vadd.f32 %v808, %v903
        %v905 = vpop.f32.mrf.mxu0
        %906 = vdwg.mxu0
        %v907 = vmin.f32 %v893, 20.0
        %v908 = vmin.f32 %v896, 20.0
        %v909 = vmin.f32 %v901, 20.0
        %v910 = vmin.f32 %v904, 20.0
        %v911 = vmul.f32 %v907, 1.442695
        %v912 = vpow.pop %v911
        %v913 = vmul.f32 %v908, 1.442695
        %v914 = vpow.pop %v913
        %v915 = vmul.f32 %v909, 1.442695
        %v916 = vpow.pop %v915
        %v917 = vmul.f32 %v910, 1.442695
        %v918 = vpow.pop %v917
        %v919 = vadd.f32 %v912, 2.0
        %v920 = vadd.f32 %v914, 2.0
        %v921 = vadd.f32 %v916, 2.0
        %v922 = vadd.f32 %v918, 2.0
        %v923 = vmul.f32 %v912, %v919
        %v924 = vmul.f32 %v914, %v920
        %v925 = vmul.f32 %v916, %v921
        %v926 = vmul.f32 %v918, %v922
        %v927 = vmul.f32 %v893, %v923
        %v928 = vmul.f32 %v896, %v924
        %v929 = vmul.f32 %v901, %v925
        %v930 = vmul.f32 %v904, %v926
        %v931 = vadd.f32 %v923, 2.0
        %v932 = vadd.f32 %v924, 2.0
        %v933 = vadd.f32 %v925, 2.0
        %v934 = vadd.f32 %v926, 2.0
        %v935 = vrcp.pop %v931
        %v936 = vrcp.pop %v932
        %v937 = vrcp.pop %v933
        %v938 = vrcp.pop %v934
        %v939 = vmul.f32 %v927, %v935
        %v940 = vmul.f32 %v928, %v936
        %v941 = vmul.f32 %v929, %v937
        %v942 = vmul.f32 %v930, %v938
        %vm943 = vcmp.gt.f32.partialorder %v893, 20.0
        %vm944 = vcmp.gt.f32.partialorder %v896, 20.0
        %vm945 = vcmp.gt.f32.partialorder %v901, 20.0
        %vm946 = vcmp.gt.f32.partialorder %v904, 20.0
        %v947 = vsel %vm943, %v893, %v939
        %v948 = vsel %vm944, %v896, %v940
        %v949 = vsel %vm945, %v901, %v941
        %v950 = vsel %vm946, %v904, %v942
        %v951 = vsel %vm725, %v947, 0.0
        %v952 = vsel %vm726, %v948, 0.0
        %v953 = vsel %vm727, %v949, 0.0
        %v954 = vsel %vm728, %v950, 0.0
        %s955 = scalar_lea.vmem [#allocation4], 8
        %v956 = vld [vmem:[%s955] sm:$0x7]
        %v957 = vlaneseq
        %v958 = vshrl.u32 %v957, 7
        %v959 = vsub.s32 1, %v958
        %v960 = vrot.slane %v956, %v959
        %v961 = vmul.f32 %v951, %v960
        %v962 = vmul.f32 %v952, %v960
        %v963 = vmul.f32 %v953, %v960
        %v964 = vmul.f32 %v954, %v960
        %v965 = vrot.slane %v951, 7
        %v966 = vrot.slane %v952, 7
        %v967 = vrot.slane %v953, 7
        %v968 = vrot.slane %v954, 7
        %v969 = vsel %vm517, %v967, %v968
        %v970 = vsel %vm517, %v966, %v967
        %v971 = vsel %vm517, %v965, %v966
        %v972 = vsel %vm517, %v968, %v965
        %v973 = vlaneseq
        %v974 = vshrl.u32 %v973, 7
        %v975 = vsub.s32 0, %v974
        %v976 = vrot.slane %v956, %v975
        %v977 = vmul.f32 %v972, %v976
        %v978 = vmul.f32 %v971, %v976
        %v979 = vmul.f32 %v970, %v976
        %v980 = vmul.f32 %v969, %v976
        %v981 = vadd.f32 %v961, %v977
        %v982 = vadd.f32 %v962, %v978
        %v983 = vadd.f32 %v963, %v979
        %v984 = vadd.f32 %v964, %v980
        %v985 = vrot.slane %v951, 1
        %v986 = vrot.slane %v952, 1
        %v987 = vrot.slane %v953, 1
        %v988 = vrot.slane %v954, 1
        %v989 = vsel %vm538, %v987, %v988
        %v990 = vsel %vm538, %v986, %v987
        %v991 = vsel %vm538, %v985, %v986
        %v992 = vsel %vm538, %v988, %v985
        %v993 = vlaneseq
        %v994 = vshrl.u32 %v993, 7
        %v995 = vsub.s32 2, %v994
        %v996 = vrot.slane %v956, %v995
        %v997 = vmul.f32 %v991, %v996
        %v998 = vmul.f32 %v990, %v996
        %v999 = vmul.f32 %v989, %v996
        %v1000 = vmul.f32 %v992, %v996
        %v1001 = vadd.f32 %v981, %v997
        %v1002 = vadd.f32 %v982, %v998
        %v1003 = vadd.f32 %v983, %v999
        %v1004 = vadd.f32 %v984, %v1000
        %v1005 = vpack.c.bf16 %v1002, %v1001
        %v1006 = vpack.c.bf16 %v1004, %v1003
        %s1007 = scalar_lea.vmem [#allocation7], 128
        %v1008 = vld [vmem:[%s1007] sm:$0xf]
        %v1009 = vld [vmem:[%s1007 + $0x4] sm:$0xf]
        %v1010 = vld [vmem:[%s1007 + $0x8] sm:$0xf]
        %v1011 = vld [vmem:[%s1007 + $0xc] sm:$0xf]
        %v1012 = vld [vmem:[%s1007 + $0x10] sm:$0xf]
        %v1013 = vld [vmem:[%s1007 + $0x14] sm:$0xf]
        %v1014 = vld [vmem:[%s1007 + $0x18] sm:$0xf]
        %v1015 = vld [vmem:[%s1007 + $0x1c] sm:$0xf]
        %v1016 = vld [vmem:[%s1007 + $0x20] sm:$0xf]
        %v1017 = vld [vmem:[%s1007 + $0x24] sm:$0xf]
        %v1018 = vld [vmem:[%s1007 + $0x28] sm:$0xf]
        %v1019 = vld [vmem:[%s1007 + $0x2c] sm:$0xf]
        %v1020 = vld [vmem:[%s1007 + $0x30] sm:$0xf]
        %v1021 = vld [vmem:[%s1007 + $0x34] sm:$0xf]
        %v1022 = vld [vmem:[%s1007 + $0x38] sm:$0xf]
        %v1023 = vld [vmem:[%s1007 + $0x3c] sm:$0xf]
        %s1024 = scalar_lea.vmem [#allocation9], 2
        %v1025 = vld [vmem:[%s1024] sm:$0x1]
        %v1027 = vlaneseq
        %v1028 = vshrl.u32 %v1027, 7
        %v1029 = vsub.s32 0, %v1028
        %v1030 = vrot.slane %v1025, %v1029
        %v1048 = vunpack.c.l.b16 %v1008
        %v1049 = vunpack.c.l.b16 %v1009
        %v1050 = vunpack.c.l.b16 %v1010
        %v1051 = vunpack.c.l.b16 %v1011
        %v1052 = vunpack.c.l.b16 %v1012
        %v1053 = vunpack.c.l.b16 %v1013
        %v1054 = vunpack.c.l.b16 %v1014
        %v1055 = vunpack.c.l.b16 %v1015
        %v1056 = vunpack.c.l.b16 %v1016
        %v1057 = vunpack.c.l.b16 %v1017
        %v1058 = vunpack.c.l.b16 %v1018
        %v1059 = vunpack.c.l.b16 %v1019
        %v1060 = vunpack.c.l.b16 %v1020
        %v1061 = vunpack.c.l.b16 %v1021
        %v1062 = vunpack.c.l.b16 %v1022
        %v1063 = vunpack.c.l.b16 %v1023
        %v1064 = vpack.c.b16 %v1049, %v1048
        %v1065 = vpack.c.b16 %v1051, %v1050
        %v1066 = vpack.c.b16 %v1053, %v1052
        %v1067 = vpack.c.b16 %v1055, %v1054
        %v1068 = vpack.c.b16 %v1057, %v1056
        %v1069 = vpack.c.b16 %v1059, %v1058
        %v1070 = vpack.c.b16 %v1061, %v1060
        %v1071 = vpack.c.b16 %v1063, %v1062
        %1080 = vmatprep.subr.bf16.mxu0 0
        %1081 = vmatpush1.bf16.msra.mxu0 %v1071
        %1082 = vmatprep.subr.bf16.mxu0 0
        %1083 = vmatpush1.bf16.msra.mxu0 %v1070
        %1084 = vmatprep.subr.bf16.mxu0 0
        %1085 = vmatpush1.bf16.msra.mxu0 %v1069
        %1086 = vmatprep.subr.bf16.mxu0 0
        %1087 = vmatpush1.bf16.msra.mxu0 %v1068
        %1088 = vmatprep.subr.bf16.mxu0 0
        %1089 = vmatpush1.bf16.msra.mxu0 %v1067
        %1090 = vmatprep.subr.bf16.mxu0 0
        %1091 = vmatpush1.bf16.msra.mxu0 %v1066
        %1092 = vmatprep.subr.bf16.mxu0 0
        %1093 = vmatpush1.bf16.msra.mxu0 %v1065
        %1094 = vmatprep.subr.bf16.mxu0 0
        %1095 = vmatpush1.bf16.msra.mxu0 %v1064
        %1096 = vmatprep.subr.bf16.mxu0 0
        %1097 = vmatpush2.bf16.msra.mxu0 0
        %1098 = vmatprep.subr.bf16.mxu0 0
        %1099 = vmatpush2.bf16.msra.mxu0 0
        %1100 = vmatprep.subr.bf16.mxu0 0
        %1101 = vmatpush2.bf16.msra.mxu0 0
        %1102 = vmatprep.subr.bf16.mxu0 0
        %1103 = vmatpush2.bf16.msra.mxu0 0
        %1104 = vmatprep.subr.bf16.mxu0 0
        %1105 = vmatpush2.bf16.msra.mxu0 0
        %1106 = vmatprep.subr.bf16.mxu0 0
        %1107 = vmatpush2.bf16.msra.mxu0 0
        %1108 = vmatprep.subr.bf16.mxu0 0
        %1109 = vmatpush2.bf16.msra.mxu0 0
        %1110 = vmatprep.subr.bf16.mxu0 0
        %1111 = vmatpush2.bf16.msra.mxu0 0
        %1112 = vmatprep.mubr.bf16.mxu0 0
        %1113 = vmatmul.mubr.bf16.gmra.mxu0 %v1005
        %v1114 = vpop.f32.mrf.mxu0
        %v1115 = vadd.f32 %v1030, %v1114
        %v1116 = vpop.f32.mrf.mxu0
        %v1117 = vpop.f32.mrf.mxu0
        %v1118 = vadd.f32 %v1030, %v1117
        %v1119 = vpop.f32.mrf.mxu0
        %1120 = vmatprep.mubr.bf16.mxu0 0
        %1121 = vmatmul.mubr.bf16.gmra.mxu0 %v1006
        %v1122 = vpop.f32.mrf.mxu0
        %v1123 = vadd.f32 %v1030, %v1122
        %v1124 = vpop.f32.mrf.mxu0
        %v1125 = vpop.f32.mrf.mxu0
        %v1126 = vadd.f32 %v1030, %v1125
        %v1127 = vpop.f32.mrf.mxu0
        %1128 = vdwg.mxu0
        %v1129 = vmin.f32 %v1115, 20.0
        %v1130 = vmin.f32 %v1118, 20.0
        %v1131 = vmin.f32 %v1123, 20.0
        %v1132 = vmin.f32 %v1126, 20.0
        %v1133 = vmul.f32 %v1129, 1.442695
        %v1134 = vpow.pop %v1133
        %v1135 = vmul.f32 %v1130, 1.442695
        %v1136 = vpow.pop %v1135
        %v1137 = vmul.f32 %v1131, 1.442695
        %v1138 = vpow.pop %v1137
        %v1139 = vmul.f32 %v1132, 1.442695
        %v1140 = vpow.pop %v1139
        %v1141 = vadd.f32 %v1134, 2.0
        %v1142 = vadd.f32 %v1136, 2.0
        %v1143 = vadd.f32 %v1138, 2.0
        %v1144 = vadd.f32 %v1140, 2.0
        %v1145 = vmul.f32 %v1134, %v1141
        %v1146 = vmul.f32 %v1136, %v1142
        %v1147 = vmul.f32 %v1138, %v1143
        %v1148 = vmul.f32 %v1140, %v1144
        %v1149 = vmul.f32 %v1115, %v1145
        %v1150 = vmul.f32 %v1118, %v1146
        %v1151 = vmul.f32 %v1123, %v1147
        %v1152 = vmul.f32 %v1126, %v1148
        %v1153 = vadd.f32 %v1145, 2.0
        %v1154 = vadd.f32 %v1146, 2.0
        %v1155 = vadd.f32 %v1147, 2.0
        %v1156 = vadd.f32 %v1148, 2.0
        %v1157 = vrcp.pop %v1153
        %v1158 = vrcp.pop %v1154
        %v1159 = vrcp.pop %v1155
        %v1160 = vrcp.pop %v1156
        %v1161 = vmul.f32 %v1149, %v1157
        %v1162 = vmul.f32 %v1150, %v1158
        %v1163 = vmul.f32 %v1151, %v1159
        %v1164 = vmul.f32 %v1152, %v1160
        %vm1165 = vcmp.gt.f32.partialorder %v1115, 20.0
        %vm1166 = vcmp.gt.f32.partialorder %v1118, 20.0
        %vm1167 = vcmp.gt.f32.partialorder %v1123, 20.0
        %vm1168 = vcmp.gt.f32.partialorder %v1126, 20.0
        %v1169 = vsel %vm1165, %v1115, %v1161
        %v1170 = vsel %vm1166, %v1118, %v1162
        %v1171 = vsel %vm1167, %v1123, %v1163
        %v1172 = vsel %vm1168, %v1126, %v1164
        %v1173 = vsel %vm725, %v1169, 0.0
        %v1174 = vsel %vm726, %v1170, 0.0
        %v1175 = vsel %vm727, %v1171, 0.0
        %v1176 = vsel %vm728, %v1172, 0.0
        %s1177 = scalar_lea.vmem [#allocation4], 12
        %v1178 = vld [vmem:[%s1177] sm:$0x7]
        %v1179 = vlaneseq
        %v1180 = vshrl.u32 %v1179, 7
        %v1181 = vsub.s32 1, %v1180
        %v1182 = vrot.slane %v1178, %v1181
        %v1183 = vmul.f32 %v1173, %v1182
        %v1184 = vmul.f32 %v1174, %v1182
        %v1185 = vmul.f32 %v1175, %v1182
        %v1186 = vmul.f32 %v1176, %v1182
        %v1187 = vrot.slane %v1173, 7
        %v1188 = vrot.slane %v1174, 7
        %v1189 = vrot.slane %v1175, 7
        %v1190 = vrot.slane %v1176, 7
        %v1191 = vsel %vm517, %v1189, %v1190
        %v1192 = vsel %vm517, %v1188, %v1189
        %v1193 = vsel %vm517, %v1187, %v1188
        %v1194 = vsel %vm517, %v1190, %v1187
        %v1195 = vlaneseq
        %v1196 = vshrl.u32 %v1195, 7
        %v1197 = vsub.s32 0, %v1196
        %v1198 = vrot.slane %v1178, %v1197
        %v1199 = vmul.f32 %v1194, %v1198
        %v1200 = vmul.f32 %v1193, %v1198
        %v1201 = vmul.f32 %v1192, %v1198
        %v1202 = vmul.f32 %v1191, %v1198
        %v1203 = vadd.f32 %v1183, %v1199
        %v1204 = vadd.f32 %v1184, %v1200
        %v1205 = vadd.f32 %v1185, %v1201
        %v1206 = vadd.f32 %v1186, %v1202
        %v1207 = vrot.slane %v1173, 1
        %v1208 = vrot.slane %v1174, 1
        %v1209 = vrot.slane %v1175, 1
        %v1210 = vrot.slane %v1176, 1
        %v1211 = vsel %vm538, %v1209, %v1210
        %v1212 = vsel %vm538, %v1208, %v1209
        %v1213 = vsel %vm538, %v1207, %v1208
        %v1214 = vsel %vm538, %v1210, %v1207
        %v1215 = vlaneseq
        %v1216 = vshrl.u32 %v1215, 7
        %v1217 = vsub.s32 2, %v1216
        %v1218 = vrot.slane %v1178, %v1217
        %v1219 = vmul.f32 %v1213, %v1218
        %v1220 = vmul.f32 %v1212, %v1218
        %v1221 = vmul.f32 %v1211, %v1218
        %v1222 = vmul.f32 %v1214, %v1218
        %v1223 = vadd.f32 %v1203, %v1219
        %v1224 = vadd.f32 %v1204, %v1220
        %v1225 = vadd.f32 %v1205, %v1221
        %v1226 = vadd.f32 %v1206, %v1222
        %v1227 = vpack.c.bf16 %v1224, %v1223
        %v1228 = vpack.c.bf16 %v1226, %v1225
        %s1229 = scalar_lea.vmem [#allocation7], 192
        %v1230 = vld [vmem:[%s1229] sm:$0xf]
        %v1231 = vld [vmem:[%s1229 + $0x4] sm:$0xf]
        %v1232 = vld [vmem:[%s1229 + $0x8] sm:$0xf]
        %v1233 = vld [vmem:[%s1229 + $0xc] sm:$0xf]
        %v1234 = vld [vmem:[%s1229 + $0x10] sm:$0xf]
        %v1235 = vld [vmem:[%s1229 + $0x14] sm:$0xf]
        %v1236 = vld [vmem:[%s1229 + $0x18] sm:$0xf]
        %v1237 = vld [vmem:[%s1229 + $0x1c] sm:$0xf]
        %v1238 = vld [vmem:[%s1229 + $0x20] sm:$0xf]
        %v1239 = vld [vmem:[%s1229 + $0x24] sm:$0xf]
        %v1240 = vld [vmem:[%s1229 + $0x28] sm:$0xf]
        %v1241 = vld [vmem:[%s1229 + $0x2c] sm:$0xf]
        %v1242 = vld [vmem:[%s1229 + $0x30] sm:$0xf]
        %v1243 = vld [vmem:[%s1229 + $0x34] sm:$0xf]
        %v1244 = vld [vmem:[%s1229 + $0x38] sm:$0xf]
        %v1245 = vld [vmem:[%s1229 + $0x3c] sm:$0xf]
        %s1246 = scalar_lea.vmem [#allocation9], 3
        %v1247 = vld [vmem:[%s1246] sm:$0x1]
        %v1249 = vlaneseq
        %v1250 = vshrl.u32 %v1249, 7
        %v1251 = vsub.s32 0, %v1250
        %v1252 = vrot.slane %v1247, %v1251
        %v1270 = vunpack.c.l.b16 %v1230
        %v1271 = vunpack.c.l.b16 %v1231
        %v1272 = vunpack.c.l.b16 %v1232
        %v1273 = vunpack.c.l.b16 %v1233
        %v1274 = vunpack.c.l.b16 %v1234
        %v1275 = vunpack.c.l.b16 %v1235
        %v1276 = vunpack.c.l.b16 %v1236
        %v1277 = vunpack.c.l.b16 %v1237
        %v1278 = vunpack.c.l.b16 %v1238
        %v1279 = vunpack.c.l.b16 %v1239
        %v1280 = vunpack.c.l.b16 %v1240
        %v1281 = vunpack.c.l.b16 %v1241
        %v1282 = vunpack.c.l.b16 %v1242
        %v1283 = vunpack.c.l.b16 %v1243
        %v1284 = vunpack.c.l.b16 %v1244
        %v1285 = vunpack.c.l.b16 %v1245
        %v1286 = vpack.c.b16 %v1271, %v1270
        %v1287 = vpack.c.b16 %v1273, %v1272
        %v1288 = vpack.c.b16 %v1275, %v1274
        %v1289 = vpack.c.b16 %v1277, %v1276
        %v1290 = vpack.c.b16 %v1279, %v1278
        %v1291 = vpack.c.b16 %v1281, %v1280
        %v1292 = vpack.c.b16 %v1283, %v1282
        %v1293 = vpack.c.b16 %v1285, %v1284
        %1302 = vmatprep.subr.bf16.mxu0 0
        %1303 = vmatpush1.bf16.msra.mxu0 %v1293
        %1304 = vmatprep.subr.bf16.mxu0 0
        %1305 = vmatpush1.bf16.msra.mxu0 %v1292
        %1306 = vmatprep.subr.bf16.mxu0 0
        %1307 = vmatpush1.bf16.msra.mxu0 %v1291
        %1308 = vmatprep.subr.bf16.mxu0 0
        %1309 = vmatpush1.bf16.msra.mxu0 %v1290
        %1310 = vmatprep.subr.bf16.mxu0 0
        %1311 = vmatpush1.bf16.msra.mxu0 %v1289
        %1312 = vmatprep.subr.bf16.mxu0 0
        %1313 = vmatpush1.bf16.msra.mxu0 %v1288
        %1314 = vmatprep.subr.bf16.mxu0 0
        %1315 = vmatpush1.bf16.msra.mxu0 %v1287
        %1316 = vmatprep.subr.bf16.mxu0 0
        %1317 = vmatpush1.bf16.msra.mxu0 %v1286
        %1318 = vmatprep.subr.bf16.mxu0 0
        %1319 = vmatpush2.bf16.msra.mxu0 0
        %1320 = vmatprep.subr.bf16.mxu0 0
        %1321 = vmatpush2.bf16.msra.mxu0 0
        %1322 = vmatprep.subr.bf16.mxu0 0
        %1323 = vmatpush2.bf16.msra.mxu0 0
        %1324 = vmatprep.subr.bf16.mxu0 0
        %1325 = vmatpush2.bf16.msra.mxu0 0
        %1326 = vmatprep.subr.bf16.mxu0 0
        %1327 = vmatpush2.bf16.msra.mxu0 0
        %1328 = vmatprep.subr.bf16.mxu0 0
        %1329 = vmatpush2.bf16.msra.mxu0 0
        %1330 = vmatprep.subr.bf16.mxu0 0
        %1331 = vmatpush2.bf16.msra.mxu0 0
        %1332 = vmatprep.subr.bf16.mxu0 0
        %1333 = vmatpush2.bf16.msra.mxu0 0
        %1334 = vmatprep.mubr.bf16.mxu0 0
        %1335 = vmatmul.mubr.bf16.gmra.mxu0 %v1227
        %v1336 = vpop.f32.mrf.mxu0
        %v1337 = vadd.f32 %v1252, %v1336
        %v1338 = vpop.f32.mrf.mxu0
        %v1339 = vpop.f32.mrf.mxu0
        %v1340 = vadd.f32 %v1252, %v1339
        %v1341 = vpop.f32.mrf.mxu0
        %1342 = vmatprep.mubr.bf16.mxu0 0
        %1343 = vmatmul.mubr.bf16.gmra.mxu0 %v1228
        %v1344 = vpop.f32.mrf.mxu0
        %v1345 = vadd.f32 %v1252, %v1344
        %v1346 = vpop.f32.mrf.mxu0
        %v1347 = vpop.f32.mrf.mxu0
        %v1348 = vadd.f32 %v1252, %v1347
        %v1349 = vpop.f32.mrf.mxu0
        %1350 = vdwg.mxu0
        %v1351 = vmin.f32 %v1337, 20.0
        %v1352 = vmin.f32 %v1340, 20.0
        %v1353 = vmin.f32 %v1345, 20.0
        %v1354 = vmin.f32 %v1348, 20.0
        %v1355 = vmul.f32 %v1351, 1.442695
        %v1356 = vpow.pop %v1355
        %v1357 = vmul.f32 %v1352, 1.442695
        %v1358 = vpow.pop %v1357
        %v1359 = vmul.f32 %v1353, 1.442695
        %v1360 = vpow.pop %v1359
        %v1361 = vmul.f32 %v1354, 1.442695
        %v1362 = vpow.pop %v1361
        %v1363 = vadd.f32 %v1356, 2.0
        %v1364 = vadd.f32 %v1358, 2.0
        %v1365 = vadd.f32 %v1360, 2.0
        %v1366 = vadd.f32 %v1362, 2.0
        %v1367 = vmul.f32 %v1356, %v1363
        %v1368 = vmul.f32 %v1358, %v1364
        %v1369 = vmul.f32 %v1360, %v1365
        %v1370 = vmul.f32 %v1362, %v1366
        %v1371 = vmul.f32 %v1337, %v1367
        %v1372 = vmul.f32 %v1340, %v1368
        %v1373 = vmul.f32 %v1345, %v1369
        %v1374 = vmul.f32 %v1348, %v1370
        %v1375 = vadd.f32 %v1367, 2.0
        %v1376 = vadd.f32 %v1368, 2.0
        %v1377 = vadd.f32 %v1369, 2.0
        %v1378 = vadd.f32 %v1370, 2.0
        %v1379 = vrcp.pop %v1375
        %v1380 = vrcp.pop %v1376
        %v1381 = vrcp.pop %v1377
        %v1382 = vrcp.pop %v1378
        %v1383 = vmul.f32 %v1371, %v1379
        %v1384 = vmul.f32 %v1372, %v1380
        %v1385 = vmul.f32 %v1373, %v1381
        %v1386 = vmul.f32 %v1374, %v1382
        %vm1387 = vcmp.gt.f32.partialorder %v1337, 20.0
        %vm1388 = vcmp.gt.f32.partialorder %v1340, 20.0
        %vm1389 = vcmp.gt.f32.partialorder %v1345, 20.0
        %vm1390 = vcmp.gt.f32.partialorder %v1348, 20.0
        %v1391 = vsel %vm1387, %v1337, %v1383
        %v1392 = vsel %vm1388, %v1340, %v1384
        %v1393 = vsel %vm1389, %v1345, %v1385
        %v1394 = vsel %vm1390, %v1348, %v1386
        %v1395 = vsel %vm725, %v1391, 0.0
        %v1396 = vsel %vm726, %v1392, 0.0
        %v1397 = vsel %vm727, %v1393, 0.0
        %v1398 = vsel %vm728, %v1394, 0.0
        %s1399 = scalar_lea.vmem [#allocation4], 16
        %v1400 = vld [vmem:[%s1399] sm:$0x7]
        %v1401 = vlaneseq
        %v1402 = vshrl.u32 %v1401, 7
        %v1403 = vsub.s32 1, %v1402
        %v1404 = vrot.slane %v1400, %v1403
        %v1405 = vmul.f32 %v1395, %v1404
        %v1406 = vmul.f32 %v1396, %v1404
        %v1407 = vmul.f32 %v1397, %v1404
        %v1408 = vmul.f32 %v1398, %v1404
        %v1409 = vrot.slane %v1395, 7
        %v1410 = vrot.slane %v1396, 7
        %v1411 = vrot.slane %v1397, 7
        %v1412 = vrot.slane %v1398, 7
        %v1413 = vsel %vm517, %v1411, %v1412
        %v1414 = vsel %vm517, %v1410, %v1411
        %v1415 = vsel %vm517, %v1409, %v1410
        %v1416 = vsel %vm517, %v1412, %v1409
        %v1417 = vlaneseq
        %v1418 = vshrl.u32 %v1417, 7
        %v1419 = vsub.s32 0, %v1418
        %v1420 = vrot.slane %v1400, %v1419
        %v1421 = vmul.f32 %v1416, %v1420
        %v1422 = vmul.f32 %v1415, %v1420
        %v1423 = vmul.f32 %v1414, %v1420
        %v1424 = vmul.f32 %v1413, %v1420
        %v1425 = vadd.f32 %v1405, %v1421
        %v1426 = vadd.f32 %v1406, %v1422
        %v1427 = vadd.f32 %v1407, %v1423
        %v1428 = vadd.f32 %v1408, %v1424
        %v1429 = vrot.slane %v1395, 1
        %v1430 = vrot.slane %v1396, 1
        %v1431 = vrot.slane %v1397, 1
        %v1432 = vrot.slane %v1398, 1
        %v1433 = vsel %vm538, %v1431, %v1432
        %v1434 = vsel %vm538, %v1430, %v1431
        %v1435 = vsel %vm538, %v1429, %v1430
        %v1436 = vsel %vm538, %v1432, %v1429
        %v1437 = vlaneseq
        %v1438 = vshrl.u32 %v1437, 7
        %v1439 = vsub.s32 2, %v1438
        %v1440 = vrot.slane %v1400, %v1439
        %v1441 = vmul.f32 %v1435, %v1440
        %v1442 = vmul.f32 %v1434, %v1440
        %v1443 = vmul.f32 %v1433, %v1440
        %v1444 = vmul.f32 %v1436, %v1440
        %v1445 = vadd.f32 %v1425, %v1441
        %v1446 = vadd.f32 %v1426, %v1442
        %v1447 = vadd.f32 %v1427, %v1443
        %v1448 = vadd.f32 %v1428, %v1444
        %v1449 = vpack.c.bf16 %v1446, %v1445
        %v1450 = vpack.c.bf16 %v1448, %v1447
        %s1451 = scalar_lea.vmem [#allocation7], 256
        %v1452 = vld [vmem:[%s1451] sm:$0xf]
        %v1453 = vld [vmem:[%s1451 + $0x4] sm:$0xf]
        %v1454 = vld [vmem:[%s1451 + $0x8] sm:$0xf]
        %v1455 = vld [vmem:[%s1451 + $0xc] sm:$0xf]
        %v1456 = vld [vmem:[%s1451 + $0x10] sm:$0xf]
        %v1457 = vld [vmem:[%s1451 + $0x14] sm:$0xf]
        %v1458 = vld [vmem:[%s1451 + $0x18] sm:$0xf]
        %v1459 = vld [vmem:[%s1451 + $0x1c] sm:$0xf]
        %v1460 = vld [vmem:[%s1451 + $0x20] sm:$0xf]
        %v1461 = vld [vmem:[%s1451 + $0x24] sm:$0xf]
        %v1462 = vld [vmem:[%s1451 + $0x28] sm:$0xf]
        %v1463 = vld [vmem:[%s1451 + $0x2c] sm:$0xf]
        %v1464 = vld [vmem:[%s1451 + $0x30] sm:$0xf]
        %v1465 = vld [vmem:[%s1451 + $0x34] sm:$0xf]
        %v1466 = vld [vmem:[%s1451 + $0x38] sm:$0xf]
        %v1467 = vld [vmem:[%s1451 + $0x3c] sm:$0xf]
        %s1468 = scalar_lea.vmem [#allocation9], 4
        %v1469 = vld [vmem:[%s1468] sm:$0x1]
        %v1471 = vlaneseq
        %v1472 = vshrl.u32 %v1471, 7
        %v1473 = vsub.s32 0, %v1472
        %v1474 = vrot.slane %v1469, %v1473
        %v1492 = vunpack.c.l.b16 %v1452
        %v1493 = vunpack.c.l.b16 %v1453
        %v1494 = vunpack.c.l.b16 %v1454
        %v1495 = vunpack.c.l.b16 %v1455
        %v1496 = vunpack.c.l.b16 %v1456
        %v1497 = vunpack.c.l.b16 %v1457
        %v1498 = vunpack.c.l.b16 %v1458
        %v1499 = vunpack.c.l.b16 %v1459
        %v1500 = vunpack.c.l.b16 %v1460
        %v1501 = vunpack.c.l.b16 %v1461
        %v1502 = vunpack.c.l.b16 %v1462
        %v1503 = vunpack.c.l.b16 %v1463
        %v1504 = vunpack.c.l.b16 %v1464
        %v1505 = vunpack.c.l.b16 %v1465
        %v1506 = vunpack.c.l.b16 %v1466
        %v1507 = vunpack.c.l.b16 %v1467
        %v1508 = vpack.c.b16 %v1493, %v1492
        %v1509 = vpack.c.b16 %v1495, %v1494
        %v1510 = vpack.c.b16 %v1497, %v1496
        %v1511 = vpack.c.b16 %v1499, %v1498
        %v1512 = vpack.c.b16 %v1501, %v1500
        %v1513 = vpack.c.b16 %v1503, %v1502
        %v1514 = vpack.c.b16 %v1505, %v1504
        %v1515 = vpack.c.b16 %v1507, %v1506
        %1524 = vmatprep.subr.bf16.mxu0 0
        %1525 = vmatpush1.bf16.msra.mxu0 %v1515
        %1526 = vmatprep.subr.bf16.mxu0 0
        %1527 = vmatpush1.bf16.msra.mxu0 %v1514
        %1528 = vmatprep.subr.bf16.mxu0 0
        %1529 = vmatpush1.bf16.msra.mxu0 %v1513
        %1530 = vmatprep.subr.bf16.mxu0 0
        %1531 = vmatpush1.bf16.msra.mxu0 %v1512
        %1532 = vmatprep.subr.bf16.mxu0 0
        %1533 = vmatpush1.bf16.msra.mxu0 %v1511
        %1534 = vmatprep.subr.bf16.mxu0 0
        %1535 = vmatpush1.bf16.msra.mxu0 %v1510
        %1536 = vmatprep.subr.bf16.mxu0 0
        %1537 = vmatpush1.bf16.msra.mxu0 %v1509
        %1538 = vmatprep.subr.bf16.mxu0 0
        %1539 = vmatpush1.bf16.msra.mxu0 %v1508
        %1540 = vmatprep.subr.bf16.mxu0 0
        %1541 = vmatpush2.bf16.msra.mxu0 0
        %1542 = vmatprep.subr.bf16.mxu0 0
        %1543 = vmatpush2.bf16.msra.mxu0 0
        %1544 = vmatprep.subr.bf16.mxu0 0
        %1545 = vmatpush2.bf16.msra.mxu0 0
        %1546 = vmatprep.subr.bf16.mxu0 0
        %1547 = vmatpush2.bf16.msra.mxu0 0
        %1548 = vmatprep.subr.bf16.mxu0 0
        %1549 = vmatpush2.bf16.msra.mxu0 0
        %1550 = vmatprep.subr.bf16.mxu0 0
        %1551 = vmatpush2.bf16.msra.mxu0 0
        %1552 = vmatprep.subr.bf16.mxu0 0
        %1553 = vmatpush2.bf16.msra.mxu0 0
        %1554 = vmatprep.subr.bf16.mxu0 0
        %1555 = vmatpush2.bf16.msra.mxu0 0
        %1556 = vmatprep.mubr.bf16.mxu0 0
        %1557 = vmatmul.mubr.bf16.gmra.mxu0 %v1449
        %v1558 = vpop.f32.mrf.mxu0
        %v1559 = vadd.f32 %v1474, %v1558
        %v1560 = vpop.f32.mrf.mxu0
        %v1561 = vpop.f32.mrf.mxu0
        %v1562 = vadd.f32 %v1474, %v1561
        %v1563 = vpop.f32.mrf.mxu0
        %1564 = vmatprep.mubr.bf16.mxu0 0
        %1565 = vmatmul.mubr.bf16.gmra.mxu0 %v1450
        %v1566 = vpop.f32.mrf.mxu0
        %v1567 = vadd.f32 %v1474, %v1566
        %v1568 = vpop.f32.mrf.mxu0
        %v1569 = vpop.f32.mrf.mxu0
        %v1570 = vadd.f32 %v1474, %v1569
        %v1571 = vpop.f32.mrf.mxu0
        %1572 = vdwg.mxu0
        %v1573 = vmin.f32 %v1559, 20.0
        %v1574 = vmin.f32 %v1562, 20.0
        %v1575 = vmin.f32 %v1567, 20.0
        %v1576 = vmin.f32 %v1570, 20.0
        %v1577 = vmul.f32 %v1573, 1.442695
        %v1578 = vpow.pop %v1577
        %v1579 = vmul.f32 %v1574, 1.442695
        %v1580 = vpow.pop %v1579
        %v1581 = vmul.f32 %v1575, 1.442695
        %v1582 = vpow.pop %v1581
        %v1583 = vmul.f32 %v1576, 1.442695
        %v1584 = vpow.pop %v1583
        %v1585 = vadd.f32 %v1578, 2.0
        %v1586 = vadd.f32 %v1580, 2.0
        %v1587 = vadd.f32 %v1582, 2.0
        %v1588 = vadd.f32 %v1584, 2.0
        %v1589 = vmul.f32 %v1578, %v1585
        %v1590 = vmul.f32 %v1580, %v1586
        %v1591 = vmul.f32 %v1582, %v1587
        %v1592 = vmul.f32 %v1584, %v1588
        %v1593 = vmul.f32 %v1559, %v1589
        %v1594 = vmul.f32 %v1562, %v1590
        %v1595 = vmul.f32 %v1567, %v1591
        %v1596 = vmul.f32 %v1570, %v1592
        %v1597 = vadd.f32 %v1589, 2.0
        %v1598 = vadd.f32 %v1590, 2.0
        %v1599 = vadd.f32 %v1591, 2.0
        %v1600 = vadd.f32 %v1592, 2.0
        %v1601 = vrcp.pop %v1597
        %v1602 = vrcp.pop %v1598
        %v1603 = vrcp.pop %v1599
        %v1604 = vrcp.pop %v1600
        %v1605 = vmul.f32 %v1593, %v1601
        %v1606 = vmul.f32 %v1594, %v1602
        %v1607 = vmul.f32 %v1595, %v1603
        %v1608 = vmul.f32 %v1596, %v1604
        %vm1609 = vcmp.gt.f32.partialorder %v1559, 20.0
        %vm1610 = vcmp.gt.f32.partialorder %v1562, 20.0
        %vm1611 = vcmp.gt.f32.partialorder %v1567, 20.0
        %vm1612 = vcmp.gt.f32.partialorder %v1570, 20.0
        %v1613 = vsel %vm1609, %v1559, %v1605
        %v1614 = vsel %vm1610, %v1562, %v1606
        %v1615 = vsel %vm1611, %v1567, %v1607
        %v1616 = vsel %vm1612, %v1570, %v1608
        %v1617 = vsel %vm725, %v1613, 0.0
        %v1618 = vsel %vm726, %v1614, 0.0
        %v1619 = vsel %vm727, %v1615, 0.0
        %v1620 = vsel %vm728, %v1616, 0.0
        %s1621 = scalar_lea.vmem [#allocation4], 20
        %v1622 = vld [vmem:[%s1621] sm:$0x7]
        %v1623 = vlaneseq
        %v1624 = vshrl.u32 %v1623, 7
        %v1625 = vsub.s32 1, %v1624
        %v1626 = vrot.slane %v1622, %v1625
        %v1627 = vmul.f32 %v1617, %v1626
        %v1628 = vmul.f32 %v1618, %v1626
        %v1629 = vmul.f32 %v1619, %v1626
        %v1630 = vmul.f32 %v1620, %v1626
        %v1631 = vrot.slane %v1617, 7
        %v1632 = vrot.slane %v1618, 7
        %v1633 = vrot.slane %v1619, 7
        %v1634 = vrot.slane %v1620, 7
        %v1635 = vsel %vm517, %v1633, %v1634
        %v1636 = vsel %vm517, %v1632, %v1633
        %v1637 = vsel %vm517, %v1631, %v1632
        %v1638 = vsel %vm517, %v1634, %v1631
        %v1639 = vlaneseq
        %v1640 = vshrl.u32 %v1639, 7
        %v1641 = vsub.s32 0, %v1640
        %v1642 = vrot.slane %v1622, %v1641
        %v1643 = vmul.f32 %v1638, %v1642
        %v1644 = vmul.f32 %v1637, %v1642
        %v1645 = vmul.f32 %v1636, %v1642
        %v1646 = vmul.f32 %v1635, %v1642
        %v1647 = vadd.f32 %v1627, %v1643
        %v1648 = vadd.f32 %v1628, %v1644
        %v1649 = vadd.f32 %v1629, %v1645
        %v1650 = vadd.f32 %v1630, %v1646
        %v1651 = vrot.slane %v1617, 1
        %v1652 = vrot.slane %v1618, 1
        %v1653 = vrot.slane %v1619, 1
        %v1654 = vrot.slane %v1620, 1
        %v1655 = vsel %vm538, %v1653, %v1654
        %v1656 = vsel %vm538, %v1652, %v1653
        %v1657 = vsel %vm538, %v1651, %v1652
        %v1658 = vsel %vm538, %v1654, %v1651
        %v1659 = vlaneseq
        %v1660 = vshrl.u32 %v1659, 7
        %v1661 = vsub.s32 2, %v1660
        %v1662 = vrot.slane %v1622, %v1661
        %v1663 = vmul.f32 %v1657, %v1662
        %v1664 = vmul.f32 %v1656, %v1662
        %v1665 = vmul.f32 %v1655, %v1662
        %v1666 = vmul.f32 %v1658, %v1662
        %v1667 = vadd.f32 %v1647, %v1663
        %v1668 = vadd.f32 %v1648, %v1664
        %v1669 = vadd.f32 %v1649, %v1665
        %v1670 = vadd.f32 %v1650, %v1666
        %v1671 = vpack.c.bf16 %v1668, %v1667
        %v1672 = vpack.c.bf16 %v1670, %v1669
        %s1673 = scalar_lea.vmem [#allocation7], 320
        %v1674 = vld [vmem:[%s1673] sm:$0xf]
        %v1675 = vld [vmem:[%s1673 + $0x4] sm:$0xf]
        %v1676 = vld [vmem:[%s1673 + $0x8] sm:$0xf]
        %v1677 = vld [vmem:[%s1673 + $0xc] sm:$0xf]
        %v1678 = vld [vmem:[%s1673 + $0x10] sm:$0xf]
        %v1679 = vld [vmem:[%s1673 + $0x14] sm:$0xf]
        %v1680 = vld [vmem:[%s1673 + $0x18] sm:$0xf]
        %v1681 = vld [vmem:[%s1673 + $0x1c] sm:$0xf]
        %v1682 = vld [vmem:[%s1673 + $0x20] sm:$0xf]
        %v1683 = vld [vmem:[%s1673 + $0x24] sm:$0xf]
        %v1684 = vld [vmem:[%s1673 + $0x28] sm:$0xf]
        %v1685 = vld [vmem:[%s1673 + $0x2c] sm:$0xf]
        %v1686 = vld [vmem:[%s1673 + $0x30] sm:$0xf]
        %v1687 = vld [vmem:[%s1673 + $0x34] sm:$0xf]
        %v1688 = vld [vmem:[%s1673 + $0x38] sm:$0xf]
        %v1689 = vld [vmem:[%s1673 + $0x3c] sm:$0xf]
        %s1690 = scalar_lea.vmem [#allocation9], 5
        %v1691 = vld [vmem:[%s1690] sm:$0x1]
        %v1693 = vlaneseq
        %v1694 = vshrl.u32 %v1693, 7
        %v1695 = vsub.s32 0, %v1694
        %v1696 = vrot.slane %v1691, %v1695
        %v1714 = vunpack.c.l.b16 %v1674
        %v1715 = vunpack.c.l.b16 %v1675
        %v1716 = vunpack.c.l.b16 %v1676
        %v1717 = vunpack.c.l.b16 %v1677
        %v1718 = vunpack.c.l.b16 %v1678
        %v1719 = vunpack.c.l.b16 %v1679
        %v1720 = vunpack.c.l.b16 %v1680
        %v1721 = vunpack.c.l.b16 %v1681
        %v1722 = vunpack.c.l.b16 %v1682
        %v1723 = vunpack.c.l.b16 %v1683
        %v1724 = vunpack.c.l.b16 %v1684
        %v1725 = vunpack.c.l.b16 %v1685
        %v1726 = vunpack.c.l.b16 %v1686
        %v1727 = vunpack.c.l.b16 %v1687
        %v1728 = vunpack.c.l.b16 %v1688
        %v1729 = vunpack.c.l.b16 %v1689
        %v1730 = vpack.c.b16 %v1715, %v1714
        %v1731 = vpack.c.b16 %v1717, %v1716
        %v1732 = vpack.c.b16 %v1719, %v1718
        %v1733 = vpack.c.b16 %v1721, %v1720
        %v1734 = vpack.c.b16 %v1723, %v1722
        %v1735 = vpack.c.b16 %v1725, %v1724
        %v1736 = vpack.c.b16 %v1727, %v1726
        %v1737 = vpack.c.b16 %v1729, %v1728
        %1746 = vmatprep.subr.bf16.mxu0 0
        %1747 = vmatpush1.bf16.msra.mxu0 %v1737
        %1748 = vmatprep.subr.bf16.mxu0 0
        %1749 = vmatpush1.bf16.msra.mxu0 %v1736
        %1750 = vmatprep.subr.bf16.mxu0 0
        %1751 = vmatpush1.bf16.msra.mxu0 %v1735
        %1752 = vmatprep.subr.bf16.mxu0 0
        %1753 = vmatpush1.bf16.msra.mxu0 %v1734
        %1754 = vmatprep.subr.bf16.mxu0 0
        %1755 = vmatpush1.bf16.msra.mxu0 %v1733
        %1756 = vmatprep.subr.bf16.mxu0 0
        %1757 = vmatpush1.bf16.msra.mxu0 %v1732
        %1758 = vmatprep.subr.bf16.mxu0 0
        %1759 = vmatpush1.bf16.msra.mxu0 %v1731
        %1760 = vmatprep.subr.bf16.mxu0 0
        %1761 = vmatpush1.bf16.msra.mxu0 %v1730
        %1762 = vmatprep.subr.bf16.mxu0 0
        %1763 = vmatpush2.bf16.msra.mxu0 0
        %1764 = vmatprep.subr.bf16.mxu0 0
        %1765 = vmatpush2.bf16.msra.mxu0 0
        %1766 = vmatprep.subr.bf16.mxu0 0
        %1767 = vmatpush2.bf16.msra.mxu0 0
        %1768 = vmatprep.subr.bf16.mxu0 0
        %1769 = vmatpush2.bf16.msra.mxu0 0
        %1770 = vmatprep.subr.bf16.mxu0 0
        %1771 = vmatpush2.bf16.msra.mxu0 0
        %1772 = vmatprep.subr.bf16.mxu0 0
        %1773 = vmatpush2.bf16.msra.mxu0 0
        %1774 = vmatprep.subr.bf16.mxu0 0
        %1775 = vmatpush2.bf16.msra.mxu0 0
        %1776 = vmatprep.subr.bf16.mxu0 0
        %1777 = vmatpush2.bf16.msra.mxu0 0
        %1778 = vmatprep.mubr.bf16.mxu0 0
        %1779 = vmatmul.mubr.bf16.gmra.mxu0 %v1671
        %v1780 = vpop.f32.mrf.mxu0
        %v1781 = vpop.f32.mrf.mxu0
        %v1782 = vpop.f32.mrf.mxu0
        %v1783 = vadd.f32 %v1696, %v1782
        %v1784 = vpop.f32.mrf.mxu0
        %1785 = vmatprep.mubr.bf16.mxu0 0
        %1786 = vmatmul.mubr.bf16.gmra.mxu0 %v1672
        %v1787 = vpop.f32.mrf.mxu0
        %v1788 = vadd.f32 %v1696, %v1787
        %v1789 = vpop.f32.mrf.mxu0
        %v1790 = vpop.f32.mrf.mxu0
        %v1791 = vpop.f32.mrf.mxu0
        %1792 = vdwg.mxu0
        %v1793 = vadd.f32 %v1783, %v494
        %v1794 = vadd.f32 %v1788, %v497
        %v1795 = vmin.f32 %v1793, 20.0
        %v1796 = vmin.f32 %v1794, 20.0
        %v1797 = vmul.f32 %v1795, 1.442695
        %v1798 = vpow.pop %v1797
        %v1799 = vmul.f32 %v1796, 1.442695
        %v1800 = vpow.pop %v1799
        %v1801 = vadd.f32 %v1798, 2.0
        %v1802 = vadd.f32 %v1800, 2.0
        %v1803 = vmul.f32 %v1798, %v1801
        %v1804 = vmul.f32 %v1800, %v1802
        %v1805 = vmul.f32 %v1793, %v1803
        %v1806 = vmul.f32 %v1794, %v1804
        %v1807 = vadd.f32 %v1803, 2.0
        %v1808 = vadd.f32 %v1804, 2.0
        %v1809 = vrcp.pop %v1807
        %v1810 = vrcp.pop %v1808
        %v1811 = vmul.f32 %v1805, %v1809
        %v1812 = vmul.f32 %v1806, %v1810
        %vm1813 = vcmp.gt.f32.partialorder %v1793, 20.0
        %vm1814 = vcmp.gt.f32.partialorder %v1794, 20.0
        %v1815 = vsel %vm1813, %v1793, %v1811
        %v1816 = vsel %vm1814, %v1794, %v1812
        %v1817 = vpack.c.bf16 %v1816, %v1815
        %v1819 = vunpack.c.l.b16 %v1817
        %v1820 = vunpack.c.h.b16 %v1817
        %v1821 = vpack.c.b16 %v1819, %v1819
        %v1822 = vpack.c.b16 %v1820, %v1820
        %1825 = vst [vmem:[%s276] sm:$0xf] %v1821
        %1826 = vst [vmem:[%s276 + $0x4] sm:$0xf] %v1822
        %s1827 = sand.u32 %s150, 1
        %s1828 = scalar_lea.sflag [#allocation6], %s1827
        %s1829 = sand.u32 %s150, 1
        %s1830 = smul.addr %s1829, 8
        %s1831 = scalar_lea.vmem [#allocation12], %s1830
        // Predicated region
        $region73: #{tpu_custom_call.1} parent=39 // pred_check
          %p1832 = pneg %p160
        $region74: #{tpu_custom_call.1} parent=39 // pred_check_branch
          %1834 = sbr.rel (%p1832) target = $region76
        $region75: #{tpu_custom_call.1} parent=39 // pred_region
          %s1835 = smul.u32 2, %s28
          %s1837 = ssub.s32 128, 128
          %1838 = vsyncadd %s1828, %s1837
          %s1839 = smul.addr %s27, 4
          %s1840 = sadd.s32 %s1835, %s1839
          %s1841 = smul.addr %s1840, 64
          %s1842 = scalar_lea.hbm %s6, %s1841
          %s1843 = sshll.u32 %s1831, 4
          %s1844 = int_to_ptr.vmem [resolvable:$true] %s1843
          %1849 = dma.vmem_to_hbm [thread:$0]  %s1844, 128, %s1842, %s1828, 64, 64, 4
        $region76: #{tpu_custom_call.1} parent=39 // pred_fallthru
          _
      $region40: #{tpu_custom_call.1} parent=5 // pred_fallthru
        _
      %p1850 = scmp.le.s32.totalorder 2, %s18
      // Predicated region
      $region77: #{tpu_custom_call.1} parent=5 // pred_check
        %p1851 = pneg %p1850
      $region78: #{tpu_custom_call.1} parent=5 // pred_check_branch
        %1853 = sbr.rel (%p1851) target = $region80
      $region79: #{tpu_custom_call.1} parent=5 // pred_region
        %s1854 = ssub.s32 %s18, 2
        // Predicated region
        $region81: #{tpu_custom_call.1} parent=79 // pred_check
          %p1855 = pneg %p166
        $region82: #{tpu_custom_call.1} parent=79 // pred_check_branch
          %1857 = sbr.rel (%p1855) target = $region84
        $region83: #{tpu_custom_call.1} parent=79 // pred_region
          %s1858 = sand.u32 %s151, 1
          %s1859 = scalar_lea.sflag [#allocation6], %s1858
          %s1860 = sand.u32 %s151, 1
          %s1861 = smul.addr %s1860, 8
          %s1862 = scalar_lea.vmem [#allocation12], %s1861
          %1863 = dma.done %s1859, 128
        $region84: #{tpu_custom_call.1} parent=79 // pred_fallthru
          _
      $region80: #{tpu_custom_call.1} parent=5 // pred_fallthru
        _
    $region6: #{tpu_custom_call.1} parent=1 // loop_footer
      %s22 = sadd.s32 1, %s18
    $region7: #{tpu_custom_call.1} parent=1 // loop_footer_branch
      %17 = sbr.rel target = $region3
    $region8: #{tpu_custom_call.1} parent=1 // loop_exit
      _
    %1864 = vsyncpa [#allocation5], 1
    %s1865 = scalar_lea.sflag [#allocation5], 1
    %1866 = vsyncpa %s1865, 1
    %1867 = vsyncpa [#allocation8], 1
    %1868 = vsyncpa [#allocation11], 1
    %1869 = vsyncpa [#allocation6], 1
    %s1870 = scalar_lea.sflag [#allocation6], 1
    %1871 = vsyncpa %s1870, 1
  %1872 = vsyncmov [#allocation3]
  %s1873 = vpop.sfrf %1872
  %p1874 = scmp.eq.s32.totalorder %s1873, 0
  %p1875 = pneg %p1874
  %1877 = shalt.err (%p1875)
  %s1878 = scalar_lea.sflag [#allocation3], 1
  %1879 = vsyncmov %s1878
  %s1880 = vpop.sfrf %1879
  %p1881 = scmp.eq.s32.totalorder %s1880, 0
  %p1882 = pneg %p1881
  %1884 = shalt.err (%p1882)

</llo_original>
